<compile_context>
chip_gen: v6e
topology: v6e:2x2x1
jax: 0.10.0
libtpu: 0.0.40
codegen_flags: <defaults>
</compile_context>

<pallas_src>
import jax
import jax.numpy as jnp
from jax.experimental import pallas as pl
from jax.experimental.pallas import tpu as pltpu


def _sigmoid_via_tanh(x):
    # sigmoid(x) == 0.5 * tanh(0.5 * x) + 0.5 : one EUP transcendental per gate.
    return 0.5 * jnp.tanh(0.5 * x) + 0.5


def _pick_time_block(T, max_tb=8):
    tb = 1
    for cand in range(1, min(T, max_tb) + 1):
        if T % cand == 0:
            tb = cand
    return tb


def lstm_recurrent_kernel(gx_ref, h0_ref, c0_ref, wh_ref,
                          h_seq_ref, c_out_ref, h_scr, c_scr):
    """One grid step = Tb LSTM steps. Carry (h, c) lives in VMEM scratch.

    gx_ref : (Tb, B, 4H) bf16   precomputed x@Wx + b for this time block (pipelined)
    h0_ref : (B, H)  bf16       initial hidden state (VMEM-resident, read at block 0)
    c0_ref : (B, H)  f32        initial cell state   (VMEM-resident, read at block 0)
    wh_ref : (H, 4H) bf16       fused recurrent weights (VMEM-resident, single copy)
    h_seq_ref : (Tb, B, H) f32  hidden-state trajectory for this time block
    c_out_ref : (B, H) f32      final cell state (written on the last block only)
    """
    blk = pl.program_id(0)
    n_blk = pl.num_programs(0)
    H = h_scr.shape[1]
    Tb = gx_ref.shape[0]

    @pl.when(blk == 0)
    def _():
        h_scr[...] = h0_ref[...]          # bf16 matmul-operand copy of h
        c_scr[...] = c0_ref[...]          # f32 cell state

    def step(s, carry):
        del carry
        # Recurrent half of the fused-gate matmul: (B,H)x(H,4H), bf16 on the MXU,
        # f32 accumulation; the input half (x@Wx + b) was hoisted out of the loop.
        gates = (jnp.dot(h_scr[...], wh_ref[...],
                         preferred_element_type=jnp.float32)
                 + gx_ref[s].astype(jnp.float32))            # (B, 4H) f32

        forget_probs = _sigmoid_via_tanh(gates[:, 0 * H:1 * H])
        input_probs = _sigmoid_via_tanh(gates[:, 1 * H:2 * H])
        cell_update = jnp.tanh(gates[:, 2 * H:3 * H])
        output_gate = _sigmoid_via_tanh(gates[:, 3 * H:4 * H])

        c_new = c_scr[...] * forget_probs + input_probs * cell_update
        h_new = output_gate * jnp.tanh(c_new)

        c_scr[...] = c_new
        h_scr[...] = h_new.astype(h_scr.dtype)
        h_seq_ref[s] = h_new
        return 0

    jax.lax.fori_loop(0, Tb, step, 0, unroll=True)

    @pl.when(blk == n_blk - 1)
    def _():
        c_out_ref[...] = c_scr[...]


def lstm_sequence(x_seq, h0, c0, wx, wh, b, *, max_time_block=8):
    """Run T LSTM-cell steps; recurrence runs in one weight-resident pallas_call.

    x_seq: (T, B, I) f32; h0, c0: (B, H) f32
    wx: (I, 4H) bf16; wh: (H, 4H) bf16; b: (1, 4H) f32
    Returns (h_seq (T, B, H) f32, c_final (B, H) f32).
    """
    T, B, I = x_seq.shape
    H = h0.shape[1]
    assert wx.shape == (I, 4 * H) and wh.shape == (H, 4 * H)

    # --- Stage 1 (hoisted out of the recurrence): input projection as ONE large matmul
    # in plain XLA (no sequential dependence), streamed to the kernel as bf16.
    gx = (jnp.dot(x_seq.reshape(T * B, I).astype(wx.dtype), wx,
                  preferred_element_type=jnp.float32) + b)
    gx = gx.reshape(T, B, 4 * H).astype(jnp.bfloat16)

    # --- Stage 2: recurrent kernel, time axis blocked.
    Tb = _pick_time_block(T, max_time_block)
    n_blk = T // Tb

    bf16, f32 = 2, 4
    block_in = Tb * B * 4 * H * bf16           # one gates_x block
    block_out = Tb * B * H * f32               # one h-trajectory block
    needed = (H * 4 * H * bf16                 # Wh, resident (single copy)
              + 2 * block_in                   # gates_x, double-buffered pipeline
              + 2 * block_out                  # h_seq blocks, double-buffered
              + 2 * B * H * f32                # c_final output block (+slack)
              + B * H * (bf16 + f32)           # h0 / c0 resident copies
              + B * H * (bf16 + f32)           # h / c carry scratch
              + (2 << 20))                     # compiler headroom

    # Per-generation VMEM ceiling: 3/4 of physical (48 MiB on v7x, 96 MiB on v5e/v6e).
    try:
        vmem_cap = int(getattr(pltpu.get_tpu_info(), "vmem_capacity_bytes",
                               64 * 1024 * 1024))
    except Exception:
        vmem_cap = 64 * 1024 * 1024
    vmem_ceiling = (vmem_cap * 3) // 4
    vmem_limit = int(min(max(needed, 32 * 1024 * 1024), vmem_ceiling))
    # NOTE: if Wh alone (H x 4H bf16) no longer fits the ceiling (very large H on v7x),
    # add a grid axis over the 4H output dim with an f32 accumulator instead of the
    # whole-array resident spec.

    cost = pl.CostEstimate(
        flops=2 * T * B * H * 4 * H,                       # recurrent matmul only
        transcendentals=5 * T * B * H,                     # 3 sigmoids + 2 tanh (as tanh)
        bytes_accessed=int(gx.size * bf16 + wh.size * bf16
                           + T * B * H * f32               # h trajectory out
                           + 2 * B * H * f32 + B * H * bf16),
    )

    h_seq, c_final = pl.pallas_call(
        lstm_recurrent_kernel,
        out_shape=(jax.ShapeDtypeStruct((T, B, H), jnp.float32),
                   jax.ShapeDtypeStruct((B, H), jnp.float32)),
        grid=(n_blk,),
        in_specs=[
            # Pipelined per time block (double-buffered by Pallas).
            pl.BlockSpec((Tb, B, 4 * H), lambda i: (i, 0, 0)),
            # Whole-array VMEM residents: single copy, no double buffer, no re-DMA.
            pl.BlockSpec(memory_space=pltpu.MemorySpace.VMEM),   # h0 (bf16)
            pl.BlockSpec(memory_space=pltpu.MemorySpace.VMEM),   # c0 (f32)
            pl.BlockSpec(memory_space=pltpu.MemorySpace.VMEM),   # Wh (bf16)
        ],
        out_specs=(
            pl.BlockSpec((Tb, B, H), lambda i: (i, 0, 0)),       # h trajectory
            pl.BlockSpec((B, H), lambda i: (0, 0)),              # final cell state
        ),
        scratch_shapes=[
            pltpu.VMEM((B, H), jnp.bfloat16),   # carried h (matmul-operand dtype)
            pltpu.VMEM((B, H), jnp.float32),    # carried c (f32 for accuracy)
        ],
        compiler_params=pltpu.CompilerParams(
            # Recurrence over time -> sequential grid. On v7x a leading 'parallel'
            # batch-tile axis (B >= 16) would engage the 2nd TensorCore.
            dimension_semantics=("arbitrary",),
            vmem_limit_bytes=vmem_limit,
        ),
        cost_estimate=cost,
    )(gx, h0.astype(jnp.bfloat16), c0, wh)
    return h_seq, c_final


def lstm_cell(x, state, wx, wh, b):
    """Single-step forward matching PyTorch LSTMCell.forward: returns (output, cell_state)."""
    h_prev, c_prev = state
    h_seq, c_final = lstm_sequence(x[None], h_prev, c_prev, wx, wh, b)
    return h_seq[0], c_final


def init_params(key, input_size, hidden_size, weight_dtype=jnp.bfloat16):
    """Synthetic init mirroring the PyTorch module (per-gate uniform(-0.2, 0.2) weights,
    zero biases), pre-transposed for batch-major matmul and fused along the gate axis.
    Gate order along 4H: forget, input, cell-update, output."""
    keys = jax.random.split(key, 8)

    def u(k, shape):
        return jax.random.uniform(k, shape, jnp.float32, -0.2, 0.2)

    wh = jnp.concatenate([u(keys[i], (hidden_size, hidden_size)).T
                          for i in range(4)], axis=1)                  # (H, 4H)
    wx = jnp.concatenate([u(keys[4 + i], (hidden_size, input_size)).T
                          for i in range(4)], axis=1)                  # (I, 4H)
    b = jnp.zeros((1, 4 * hidden_size), jnp.float32)                   # (1, 4H)
    return wx.astype(weight_dtype), wh.astype(weight_dtype), b


def lstm_sequence_ref(x_seq, h0, c0, wx, wh, b):
    """Pure-JAX reference with identical numerics (hoisted bf16 gates_x, bf16 matmul
    operands, f32 accumulation, tanh-based sigmoid)."""
    T, B, I = x_seq.shape
    H = h0.shape[1]
    gx = (jnp.dot(x_seq.reshape(T * B, I).astype(wx.dtype), wx,
                  preferred_element_type=jnp.float32) + b)
    gx = gx.reshape(T, B, 4 * H).astype(jnp.bfloat16)

    def step(carry, g_t):
        h, c = carry
        gates = (jnp.dot(h.astype(wh.dtype), wh, preferred_element_type=jnp.float32)
                 + g_t.astype(jnp.float32))
        f = _sigmoid_via_tanh(gates[:, 0 * H:1 * H])
        i = _sigmoid_via_tanh(gates[:, 1 * H:2 * H])
        g = jnp.tanh(gates[:, 2 * H:3 * H])
        o = _sigmoid_via_tanh(gates[:, 3 * H:4 * H])
        c_new = c * f + i * g
        h_new = o * jnp.tanh(c_new)
        return (h_new, c_new), h_new

    (_, c_T), h_seq = jax.lax.scan(step, (h0, c0), gx)
    return h_seq, c_T


if __name__ == "__main__":
    # Tile-friendly small shapes: B multiple of 8 sublanes, I/H multiples of 128 lanes.
    T, B, I, H = 8, 8, 128, 128

    key = jax.random.PRNGKey(0)
    k_x, k_h, k_c, k_p = jax.random.split(key, 4)

    x_seq = jax.random.normal(k_x, (T, B, I), jnp.float32)
    h0 = jax.random.normal(k_h, (B, H), jnp.float32)
    c0 = jax.random.normal(k_c, (B, H), jnp.float32)
    wx, wh, b = init_params(k_p, I, H)

    # Full-sequence kernel (Wh resident in VMEM across all T steps, time axis blocked).
    h_seq, c_final = lstm_sequence(x_seq, h0, c0, wx, wh, b)
    jax.block_until_ready((h_seq, c_final))

    h_ref, c_ref = lstm_sequence_ref(x_seq, h0, c0, wx, wh, b)
    assert jnp.allclose(h_seq, h_ref, atol=2e-3, rtol=2e-3), "hidden sequence mismatch"
    assert jnp.allclose(c_final, c_ref, atol=2e-3, rtol=2e-3), "final cell state mismatch"

    # Single-step path (the original nn.Module forward) via the same kernel, T=1.
    h1, c1 = lstm_cell(x_seq[0], (h0, c0), wx, wh, b)
    jax.block_until_ready((h1, c1))
    h_ref1, c_ref1 = lstm_sequence_ref(x_seq[:1], h0, c0, wx, wh, b)
    assert jnp.allclose(h1, h_ref1[0], atol=2e-3, rtol=2e-3), "single-step hidden mismatch"
    assert jnp.allclose(c1, c_ref1, atol=2e-3, rtol=2e-3), "single-step cell mismatch"

    print("KERNEL_OK")
</pallas_src>

<mosaic_0001>
module attributes {stable_mosaic.version = 11 : i64} {
  func.func @lstm_recurrent_kernel(%arg0: i32, %arg1: memref<8x8x512xbf16, #tpu.memory_space<vmem>>, %arg2: memref<8x128xbf16, #tpu.memory_space<vmem>>, %arg3: memref<8x128xf32, #tpu.memory_space<vmem>>, %arg4: memref<128x512xbf16, #tpu.memory_space<vmem>>, %arg5: memref<8x8x128xf32, #tpu.memory_space<vmem>>, %arg6: memref<8x128xf32, #tpu.memory_space<vmem>>, %arg7: memref<8x128xbf16, #tpu.memory_space<vmem>>, %arg8: memref<8x128xf32, #tpu.memory_space<vmem>>) attributes {dimension_semantics = [#tpu.dimension_semantics<arbitrary>], iteration_bounds = array<i64: 1>, scalar_prefetch = 0 : i64, scratch_operands = 2 : i64, tpu.core_type = #tpu.core_type<tc>, window_params = [{transform_indices = @transform_0, window_bounds = array<i64: 8, 8, 512>}, {pipeline_mode = #tpu.pipeline_mode<synchronous>, transform_indices = @transform_1, window_bounds = array<i64: 8, 128>}, {pipeline_mode = #tpu.pipeline_mode<synchronous>, transform_indices = @transform_2, window_bounds = array<i64: 8, 128>}, {pipeline_mode = #tpu.pipeline_mode<synchronous>, transform_indices = @transform_3, window_bounds = array<i64: 128, 512>}, {transform_indices = @transform_4, window_bounds = array<i64: 8, 8, 128>}, {pipeline_mode = #tpu.pipeline_mode<synchronous>, transform_indices = @transform_5, window_bounds = array<i64: 8, 128>}]} {
    %c0_i32 = arith.constant 0 : i32
    %0 = arith.cmpi eq, %arg0, %c0_i32 : i32
    %1 = arith.extui %0 : i1 to i32
    %c0_i32_0 = arith.constant 0 : i32
    %2 = arith.cmpi ne, %1, %c0_i32_0 : i32
    scf.if %2 {
      %c0_194 = arith.constant 0 : index
      %c0_195 = arith.constant 0 : index
      %382 = vector.load %arg2[%c0_194, %c0_195] : memref<8x128xbf16, #tpu.memory_space<vmem>>, vector<8x128xbf16>
      %c0_196 = arith.constant 0 : index
      %c0_197 = arith.constant 0 : index
      %383 = vector.load %arg7[%c0_196, %c0_197] : memref<8x128xbf16, #tpu.memory_space<vmem>>, vector<8x128xbf16>
      tpu.vector_store %arg7[%c0_196, %c0_197], %382 {strides = array<i32>} : memref<8x128xbf16, #tpu.memory_space<vmem>>, vector<8x128xbf16>,
      %c0_198 = arith.constant 0 : index
      %c0_199 = arith.constant 0 : index
      %384 = vector.load %arg3[%c0_198, %c0_199] : memref<8x128xf32, #tpu.memory_space<vmem>>, vector<8x128xf32>
      %c0_200 = arith.constant 0 : index
      %c0_201 = arith.constant 0 : index
      %385 = vector.load %arg8[%c0_200, %c0_201] : memref<8x128xf32, #tpu.memory_space<vmem>>, vector<8x128xf32>
      tpu.vector_store %arg8[%c0_200, %c0_201], %384 {strides = array<i32>} : memref<8x128xf32, #tpu.memory_space<vmem>>, vector<8x128xf32>,
    } else {
    }
    %c0_i32_1 = arith.constant 0 : i32
    %c0 = arith.constant 0 : index
    %c0_2 = arith.constant 0 : index
    %3 = vector.load %arg7[%c0, %c0_2] : memref<8x128xbf16, #tpu.memory_space<vmem>>, vector<8x128xbf16>
    %c0_3 = arith.constant 0 : index
    %c0_4 = arith.constant 0 : index
    %4 = vector.load %arg4[%c0_3, %c0_4] : memref<128x512xbf16, #tpu.memory_space<vmem>>, vector<128x512xbf16>
    %cst = arith.constant dense<0.000000e+00> : vector<8x512xf32>
    %5 = tpu.matmul %3, %4, %cst {dimension_numbers = #tpu.dot_dimension_numbers<[1], [0], [0], [1], [0, 0, 1, 1], [], []>} : vector<8x128xbf16>, vector<128x512xbf16>, vector<8x512xf32> -> vector<8x512xf32>
    %6 = arith.index_cast %c0_i32_1 : i32 to index
    %c0_5 = arith.constant 0 : index
    %c0_6 = arith.constant 0 : index
    %7 = vector.load %arg1[%6, %c0_5, %c0_6] : memref<8x8x512xbf16, #tpu.memory_space<vmem>>, vector<1x8x512xbf16>
    %8 = vector.shape_cast %7 : vector<1x8x512xbf16> to vector<8x512xbf16>
    %9 = arith.extf %8 : vector<8x512xbf16> to vector<8x512xf32>
    %10 = arith.addf %5, %9 : vector<8x512xf32>
    %11 = vector.extract_strided_slice %10 {offsets = [0, 0], sizes = [8, 128], strides = [1, 1]} : vector<8x512xf32> to vector<8x128xf32>
    %cst_7 = arith.constant 5.000000e-01 : f32
    %12 = vector.broadcast %cst_7 : f32 to vector<8x128xf32>
    %13 = arith.mulf %12, %11 : vector<8x128xf32>
    %14 = math.tanh %13 : vector<8x128xf32>
    %cst_8 = arith.constant 5.000000e-01 : f32
    %15 = vector.broadcast %cst_8 : f32 to vector<8x128xf32>
    %16 = arith.mulf %15, %14 : vector<8x128xf32>
    %cst_9 = arith.constant 5.000000e-01 : f32
    %17 = vector.broadcast %cst_9 : f32 to vector<8x128xf32>
    %18 = arith.addf %16, %17 : vector<8x128xf32>
    %19 = vector.extract_strided_slice %10 {offsets = [0, 128], sizes = [8, 128], strides = [1, 1]} : vector<8x512xf32> to vector<8x128xf32>
    %cst_10 = arith.constant 5.000000e-01 : f32
    %20 = vector.broadcast %cst_10 : f32 to vector<8x128xf32>
    %21 = arith.mulf %20, %19 : vector<8x128xf32>
    %22 = math.tanh %21 : vector<8x128xf32>
    %cst_11 = arith.constant 5.000000e-01 : f32
    %23 = vector.broadcast %cst_11 : f32 to vector<8x128xf32>
    %24 = arith.mulf %23, %22 : vector<8x128xf32>
    %cst_12 = arith.constant 5.000000e-01 : f32
    %25 = vector.broadcast %cst_12 : f32 to vector<8x128xf32>
    %26 = arith.addf %24, %25 : vector<8x128xf32>
    %27 = vector.extract_strided_slice %10 {offsets = [0, 256], sizes = [8, 128], strides = [1, 1]} : vector<8x512xf32> to vector<8x128xf32>
    %28 = math.tanh %27 : vector<8x128xf32>
    %29 = vector.extract_strided_slice %10 {offsets = [0, 384], sizes = [8, 128], strides = [1, 1]} : vector<8x512xf32> to vector<8x128xf32>
    %cst_13 = arith.constant 5.000000e-01 : f32
    %30 = vector.broadcast %cst_13 : f32 to vector<8x128xf32>
    %31 = arith.mulf %30, %29 : vector<8x128xf32>
    %32 = math.tanh %31 : vector<8x128xf32>
    %cst_14 = arith.constant 5.000000e-01 : f32
    %33 = vector.broadcast %cst_14 : f32 to vector<8x128xf32>
    %34 = arith.mulf %33, %32 : vector<8x128xf32>
    %cst_15 = arith.constant 5.000000e-01 : f32
    %35 = vector.broadcast %cst_15 : f32 to vector<8x128xf32>
    %36 = arith.addf %34, %35 : vector<8x128xf32>
    %c0_16 = arith.constant 0 : index
    %c0_17 = arith.constant 0 : index
    %37 = vector.load %arg8[%c0_16, %c0_17] : memref<8x128xf32, #tpu.memory_space<vmem>>, vector<8x128xf32>
    %38 = arith.mulf %37, %18 : vector<8x128xf32>
    %39 = arith.mulf %26, %28 : vector<8x128xf32>
    %40 = arith.addf %38, %39 : vector<8x128xf32>
    %41 = math.tanh %40 : vector<8x128xf32>
    %42 = arith.mulf %36, %41 : vector<8x128xf32>
    %c0_18 = arith.constant 0 : index
    %c0_19 = arith.constant 0 : index
    %43 = vector.load %arg8[%c0_18, %c0_19] : memref<8x128xf32, #tpu.memory_space<vmem>>, vector<8x128xf32>
    tpu.vector_store %arg8[%c0_18, %c0_19], %40 {strides = array<i32>} : memref<8x128xf32, #tpu.memory_space<vmem>>, vector<8x128xf32>,
    %44 = arith.truncf %42 : vector<8x128xf32> to vector<8x128xbf16>
    %c0_20 = arith.constant 0 : index
    %c0_21 = arith.constant 0 : index
    %45 = vector.load %arg7[%c0_20, %c0_21] : memref<8x128xbf16, #tpu.memory_space<vmem>>, vector<8x128xbf16>
    tpu.vector_store %arg7[%c0_20, %c0_21], %44 {strides = array<i32>} : memref<8x128xbf16, #tpu.memory_space<vmem>>, vector<8x128xbf16>,
    %46 = arith.index_cast %c0_i32_1 : i32 to index
    %c0_22 = arith.constant 0 : index
    %c0_23 = arith.constant 0 : index
    %47 = vector.load %arg5[%46, %c0_22, %c0_23] : memref<8x8x128xf32, #tpu.memory_space<vmem>>, vector<1x8x128xf32>
    %48 = vector.shape_cast %47 : vector<1x8x128xf32> to vector<8x128xf32>
    %49 = vector.shape_cast %42 : vector<8x128xf32> to vector<1x8x128xf32>
    tpu.vector_store %arg5[%46, %c0_22, %c0_23], %49 {strides = array<i32>} : memref<8x8x128xf32, #tpu.memory_space<vmem>>, vector<1x8x128xf32>,
    %c1_i32 = arith.constant 1 : i32
    %c0_24 = arith.constant 0 : index
    %c0_25 = arith.constant 0 : index
    %50 = vector.load %arg7[%c0_24, %c0_25] : memref<8x128xbf16, #tpu.memory_space<vmem>>, vector<8x128xbf16>
    %c0_26 = arith.constant 0 : index
    %c0_27 = arith.constant 0 : index
    %51 = vector.load %arg4[%c0_26, %c0_27] : memref<128x512xbf16, #tpu.memory_space<vmem>>, vector<128x512xbf16>
    %cst_28 = arith.constant dense<0.000000e+00> : vector<8x512xf32>
    %52 = tpu.matmul %50, %51, %cst_28 {dimension_numbers = #tpu.dot_dimension_numbers<[1], [0], [0], [1], [0, 0, 1, 1], [], []>} : vector<8x128xbf16>, vector<128x512xbf16>, vector<8x512xf32> -> vector<8x512xf32>
    %53 = arith.index_cast %c1_i32 : i32 to index
    %c0_29 = arith.constant 0 : index
    %c0_30 = arith.constant 0 : index
    %54 = vector.load %arg1[%53, %c0_29, %c0_30] : memref<8x8x512xbf16, #tpu.memory_space<vmem>>, vector<1x8x512xbf16>
    %55 = vector.shape_cast %54 : vector<1x8x512xbf16> to vector<8x512xbf16>
    %56 = arith.extf %55 : vector<8x512xbf16> to vector<8x512xf32>
    %57 = arith.addf %52, %56 : vector<8x512xf32>
    %58 = vector.extract_strided_slice %57 {offsets = [0, 0], sizes = [8, 128], strides = [1, 1]} : vector<8x512xf32> to vector<8x128xf32>
    %cst_31 = arith.constant 5.000000e-01 : f32
    %59 = vector.broadcast %cst_31 : f32 to vector<8x128xf32>
    %60 = arith.mulf %59, %58 : vector<8x128xf32>
    %61 = math.tanh %60 : vector<8x128xf32>
    %cst_32 = arith.constant 5.000000e-01 : f32
    %62 = vector.broadcast %cst_32 : f32 to vector<8x128xf32>
    %63 = arith.mulf %62, %61 : vector<8x128xf32>
    %cst_33 = arith.constant 5.000000e-01 : f32
    %64 = vector.broadcast %cst_33 : f32 to vector<8x128xf32>
    %65 = arith.addf %63, %64 : vector<8x128xf32>
    %66 = vector.extract_strided_slice %57 {offsets = [0, 128], sizes = [8, 128], strides = [1, 1]} : vector<8x512xf32> to vector<8x128xf32>
    %cst_34 = arith.constant 5.000000e-01 : f32
    %67 = vector.broadcast %cst_34 : f32 to vector<8x128xf32>
    %68 = arith.mulf %67, %66 : vector<8x128xf32>
    %69 = math.tanh %68 : vector<8x128xf32>
    %cst_35 = arith.constant 5.000000e-01 : f32
    %70 = vector.broadcast %cst_35 : f32 to vector<8x128xf32>
    %71 = arith.mulf %70, %69 : vector<8x128xf32>
    %cst_36 = arith.constant 5.000000e-01 : f32
    %72 = vector.broadcast %cst_36 : f32 to vector<8x128xf32>
    %73 = arith.addf %71, %72 : vector<8x128xf32>
    %74 = vector.extract_strided_slice %57 {offsets = [0, 256], sizes = [8, 128], strides = [1, 1]} : vector<8x512xf32> to vector<8x128xf32>
    %75 = math.tanh %74 : vector<8x128xf32>
    %76 = vector.extract_strided_slice %57 {offsets = [0, 384], sizes = [8, 128], strides = [1, 1]} : vector<8x512xf32> to vector<8x128xf32>
    %cst_37 = arith.constant 5.000000e-01 : f32
    %77 = vector.broadcast %cst_37 : f32 to vector<8x128xf32>
    %78 = arith.mulf %77, %76 : vector<8x128xf32>
    %79 = math.tanh %78 : vector<8x128xf32>
    %cst_38 = arith.constant 5.000000e-01 : f32
    %80 = vector.broadcast %cst_38 : f32 to vector<8x128xf32>
    %81 = arith.mulf %80, %79 : vector<8x128xf32>
    %cst_39 = arith.constant 5.000000e-01 : f32
    %82 = vector.broadcast %cst_39 : f32 to vector<8x128xf32>
    %83 = arith.addf %81, %82 : vector<8x128xf32>
    %c0_40 = arith.constant 0 : index
    %c0_41 = arith.constant 0 : index
    %84 = vector.load %arg8[%c0_40, %c0_41] : memref<8x128xf32, #tpu.memory_space<vmem>>, vector<8x128xf32>
    %85 = arith.mulf %84, %65 : vector<8x128xf32>
    %86 = arith.mulf %73, %75 : vector<8x128xf32>
    %87 = arith.addf %85, %86 : vector<8x128xf32>
    %88 = math.tanh %87 : vector<8x128xf32>
    %89 = arith.mulf %83, %88 : vector<8x128xf32>
    %c0_42 = arith.constant 0 : index
    %c0_43 = arith.constant 0 : index
    %90 = vector.load %arg8[%c0_42, %c0_43] : memref<8x128xf32, #tpu.memory_space<vmem>>, vector<8x128xf32>
    tpu.vector_store %arg8[%c0_42, %c0_43], %87 {strides = array<i32>} : memref<8x128xf32, #tpu.memory_space<vmem>>, vector<8x128xf32>,
    %91 = arith.truncf %89 : vector<8x128xf32> to vector<8x128xbf16>
    %c0_44 = arith.constant 0 : index
    %c0_45 = arith.constant 0 : index
    %92 = vector.load %arg7[%c0_44, %c0_45] : memref<8x128xbf16, #tpu.memory_space<vmem>>, vector<8x128xbf16>
    tpu.vector_store %arg7[%c0_44, %c0_45], %91 {strides = array<i32>} : memref<8x128xbf16, #tpu.memory_space<vmem>>, vector<8x128xbf16>,
    %93 = arith.index_cast %c1_i32 : i32 to index
    %c0_46 = arith.constant 0 : index
    %c0_47 = arith.constant 0 : index
    %94 = vector.load %arg5[%93, %c0_46, %c0_47] : memref<8x8x128xf32, #tpu.memory_space<vmem>>, vector<1x8x128xf32>
    %95 = vector.shape_cast %94 : vector<1x8x128xf32> to vector<8x128xf32>
    %96 = vector.shape_cast %89 : vector<8x128xf32> to vector<1x8x128xf32>
    tpu.vector_store %arg5[%93, %c0_46, %c0_47], %96 {strides = array<i32>} : memref<8x8x128xf32, #tpu.memory_space<vmem>>, vector<1x8x128xf32>,
    %c2_i32 = arith.constant 2 : i32
    %c0_48 = arith.constant 0 : index
    %c0_49 = arith.constant 0 : index
    %97 = vector.load %arg7[%c0_48, %c0_49] : memref<8x128xbf16, #tpu.memory_space<vmem>>, vector<8x128xbf16>
    %c0_50 = arith.constant 0 : index
    %c0_51 = arith.constant 0 : index
    %98 = vector.load %arg4[%c0_50, %c0_51] : memref<128x512xbf16, #tpu.memory_space<vmem>>, vector<128x512xbf16>
    %cst_52 = arith.constant dense<0.000000e+00> : vector<8x512xf32>
    %99 = tpu.matmul %97, %98, %cst_52 {dimension_numbers = #tpu.dot_dimension_numbers<[1], [0], [0], [1], [0, 0, 1, 1], [], []>} : vector<8x128xbf16>, vector<128x512xbf16>, vector<8x512xf32> -> vector<8x512xf32>
    %100 = arith.index_cast %c2_i32 : i32 to index
    %c0_53 = arith.constant 0 : index
    %c0_54 = arith.constant 0 : index
    %101 = vector.load %arg1[%100, %c0_53, %c0_54] : memref<8x8x512xbf16, #tpu.memory_space<vmem>>, vector<1x8x512xbf16>
    %102 = vector.shape_cast %101 : vector<1x8x512xbf16> to vector<8x512xbf16>
    %103 = arith.extf %102 : vector<8x512xbf16> to vector<8x512xf32>
    %104 = arith.addf %99, %103 : vector<8x512xf32>
    %105 = vector.extract_strided_slice %104 {offsets = [0, 0], sizes = [8, 128], strides = [1, 1]} : vector<8x512xf32> to vector<8x128xf32>
    %cst_55 = arith.constant 5.000000e-01 : f32
    %106 = vector.broadcast %cst_55 : f32 to vector<8x128xf32>
    %107 = arith.mulf %106, %105 : vector<8x128xf32>
    %108 = math.tanh %107 : vector<8x128xf32>
    %cst_56 = arith.constant 5.000000e-01 : f32
    %109 = vector.broadcast %cst_56 : f32 to vector<8x128xf32>
    %110 = arith.mulf %109, %108 : vector<8x128xf32>
    %cst_57 = arith.constant 5.000000e-01 : f32
    %111 = vector.broadcast %cst_57 : f32 to vector<8x128xf32>
    %112 = arith.addf %110, %111 : vector<8x128xf32>
    %113 = vector.extract_strided_slice %104 {offsets = [0, 128], sizes = [8, 128], strides = [1, 1]} : vector<8x512xf32> to vector<8x128xf32>
    %cst_58 = arith.constant 5.000000e-01 : f32
    %114 = vector.broadcast %cst_58 : f32 to vector<8x128xf32>
    %115 = arith.mulf %114, %113 : vector<8x128xf32>
    %116 = math.tanh %115 : vector<8x128xf32>
    %cst_59 = arith.constant 5.000000e-01 : f32
    %117 = vector.broadcast %cst_59 : f32 to vector<8x128xf32>
    %118 = arith.mulf %117, %116 : vector<8x128xf32>
    %cst_60 = arith.constant 5.000000e-01 : f32
    %119 = vector.broadcast %cst_60 : f32 to vector<8x128xf32>
    %120 = arith.addf %118, %119 : vector<8x128xf32>
    %121 = vector.extract_strided_slice %104 {offsets = [0, 256], sizes = [8, 128], strides = [1, 1]} : vector<8x512xf32> to vector<8x128xf32>
    %122 = math.tanh %121 : vector<8x128xf32>
    %123 = vector.extract_strided_slice %104 {offsets = [0, 384], sizes = [8, 128], strides = [1, 1]} : vector<8x512xf32> to vector<8x128xf32>
    %cst_61 = arith.constant 5.000000e-01 : f32
    %124 = vector.broadcast %cst_61 : f32 to vector<8x128xf32>
    %125 = arith.mulf %124, %123 : vector<8x128xf32>
    %126 = math.tanh %125 : vector<8x128xf32>
    %cst_62 = arith.constant 5.000000e-01 : f32
    %127 = vector.broadcast %cst_62 : f32 to vector<8x128xf32>
    %128 = arith.mulf %127, %126 : vector<8x128xf32>
    %cst_63 = arith.constant 5.000000e-01 : f32
    %129 = vector.broadcast %cst_63 : f32 to vector<8x128xf32>
    %130 = arith.addf %128, %129 : vector<8x128xf32>
    %c0_64 = arith.constant 0 : index
    %c0_65 = arith.constant 0 : index
    %131 = vector.load %arg8[%c0_64, %c0_65] : memref<8x128xf32, #tpu.memory_space<vmem>>, vector<8x128xf32>
    %132 = arith.mulf %131, %112 : vector<8x128xf32>
    %133 = arith.mulf %120, %122 : vector<8x128xf32>
    %134 = arith.addf %132, %133 : vector<8x128xf32>
    %135 = math.tanh %134 : vector<8x128xf32>
    %136 = arith.mulf %130, %135 : vector<8x128xf32>
    %c0_66 = arith.constant 0 : index
    %c0_67 = arith.constant 0 : index
    %137 = vector.load %arg8[%c0_66, %c0_67] : memref<8x128xf32, #tpu.memory_space<vmem>>, vector<8x128xf32>
    tpu.vector_store %arg8[%c0_66, %c0_67], %134 {strides = array<i32>} : memref<8x128xf32, #tpu.memory_space<vmem>>, vector<8x128xf32>,
    %138 = arith.truncf %136 : vector<8x128xf32> to vector<8x128xbf16>
    %c0_68 = arith.constant 0 : index
    %c0_69 = arith.constant 0 : index
    %139 = vector.load %arg7[%c0_68, %c0_69] : memref<8x128xbf16, #tpu.memory_space<vmem>>, vector<8x128xbf16>
    tpu.vector_store %arg7[%c0_68, %c0_69], %138 {strides = array<i32>} : memref<8x128xbf16, #tpu.memory_space<vmem>>, vector<8x128xbf16>,
    %140 = arith.index_cast %c2_i32 : i32 to index
    %c0_70 = arith.constant 0 : index
    %c0_71 = arith.constant 0 : index
    %141 = vector.load %arg5[%140, %c0_70, %c0_71] : memref<8x8x128xf32, #tpu.memory_space<vmem>>, vector<1x8x128xf32>
    %142 = vector.shape_cast %141 : vector<1x8x128xf32> to vector<8x128xf32>
    %143 = vector.shape_cast %136 : vector<8x128xf32> to vector<1x8x128xf32>
    tpu.vector_store %arg5[%140, %c0_70, %c0_71], %143 {strides = array<i32>} : memref<8x8x128xf32, #tpu.memory_space<vmem>>, vector<1x8x128xf32>,
    %c3_i32 = arith.constant 3 : i32
    %c0_72 = arith.constant 0 : index
    %c0_73 = arith.constant 0 : index
    %144 = vector.load %arg7[%c0_72, %c0_73] : memref<8x128xbf16, #tpu.memory_space<vmem>>, vector<8x128xbf16>
    %c0_74 = arith.constant 0 : index
    %c0_75 = arith.constant 0 : index
    %145 = vector.load %arg4[%c0_74, %c0_75] : memref<128x512xbf16, #tpu.memory_space<vmem>>, vector<128x512xbf16>
    %cst_76 = arith.constant dense<0.000000e+00> : vector<8x512xf32>
    %146 = tpu.matmul %144, %145, %cst_76 {dimension_numbers = #tpu.dot_dimension_numbers<[1], [0], [0], [1], [0, 0, 1, 1], [], []>} : vector<8x128xbf16>, vector<128x512xbf16>, vector<8x512xf32> -> vector<8x512xf32>
    %147 = arith.index_cast %c3_i32 : i32 to index
    %c0_77 = arith.constant 0 : index
    %c0_78 = arith.constant 0 : index
    %148 = vector.load %arg1[%147, %c0_77, %c0_78] : memref<8x8x512xbf16, #tpu.memory_space<vmem>>, vector<1x8x512xbf16>
    %149 = vector.shape_cast %148 : vector<1x8x512xbf16> to vector<8x512xbf16>
    %150 = arith.extf %149 : vector<8x512xbf16> to vector<8x512xf32>
    %151 = arith.addf %146, %150 : vector<8x512xf32>
    %152 = vector.extract_strided_slice %151 {offsets = [0, 0], sizes = [8, 128], strides = [1, 1]} : vector<8x512xf32> to vector<8x128xf32>
    %cst_79 = arith.constant 5.000000e-01 : f32
    %153 = vector.broadcast %cst_79 : f32 to vector<8x128xf32>
    %154 = arith.mulf %153, %152 : vector<8x128xf32>
    %155 = math.tanh %154 : vector<8x128xf32>
    %cst_80 = arith.constant 5.000000e-01 : f32
    %156 = vector.broadcast %cst_80 : f32 to vector<8x128xf32>
    %157 = arith.mulf %156, %155 : vector<8x128xf32>
    %cst_81 = arith.constant 5.000000e-01 : f32
    %158 = vector.broadcast %cst_81 : f32 to vector<8x128xf32>
    %159 = arith.addf %157, %158 : vector<8x128xf32>
    %160 = vector.extract_strided_slice %151 {offsets = [0, 128], sizes = [8, 128], strides = [1, 1]} : vector<8x512xf32> to vector<8x128xf32>
    %cst_82 = arith.constant 5.000000e-01 : f32
    %161 = vector.broadcast %cst_82 : f32 to vector<8x128xf32>
    %162 = arith.mulf %161, %160 : vector<8x128xf32>
    %163 = math.tanh %162 : vector<8x128xf32>
    %cst_83 = arith.constant 5.000000e-01 : f32
    %164 = vector.broadcast %cst_83 : f32 to vector<8x128xf32>
    %165 = arith.mulf %164, %163 : vector<8x128xf32>
    %cst_84 = arith.constant 5.000000e-01 : f32
    %166 = vector.broadcast %cst_84 : f32 to vector<8x128xf32>
    %167 = arith.addf %165, %166 : vector<8x128xf32>
    %168 = vector.extract_strided_slice %151 {offsets = [0, 256], sizes = [8, 128], strides = [1, 1]} : vector<8x512xf32> to vector<8x128xf32>
    %169 = math.tanh %168 : vector<8x128xf32>
    %170 = vector.extract_strided_slice %151 {offsets = [0, 384], sizes = [8, 128], strides = [1, 1]} : vector<8x512xf32> to vector<8x128xf32>
    %cst_85 = arith.constant 5.000000e-01 : f32
    %171 = vector.broadcast %cst_85 : f32 to vector<8x128xf32>
    %172 = arith.mulf %171, %170 : vector<8x128xf32>
    %173 = math.tanh %172 : vector<8x128xf32>
    %cst_86 = arith.constant 5.000000e-01 : f32
    %174 = vector.broadcast %cst_86 : f32 to vector<8x128xf32>
    %175 = arith.mulf %174, %173 : vector<8x128xf32>
    %cst_87 = arith.constant 5.000000e-01 : f32
    %176 = vector.broadcast %cst_87 : f32 to vector<8x128xf32>
    %177 = arith.addf %175, %176 : vector<8x128xf32>
    %c0_88 = arith.constant 0 : index
    %c0_89 = arith.constant 0 : index
    %178 = vector.load %arg8[%c0_88, %c0_89] : memref<8x128xf32, #tpu.memory_space<vmem>>, vector<8x128xf32>
    %179 = arith.mulf %178, %159 : vector<8x128xf32>
    %180 = arith.mulf %167, %169 : vector<8x128xf32>
    %181 = arith.addf %179, %180 : vector<8x128xf32>
    %182 = math.tanh %181 : vector<8x128xf32>
    %183 = arith.mulf %177, %182 : vector<8x128xf32>
    %c0_90 = arith.constant 0 : index
    %c0_91 = arith.constant 0 : index
    %184 = vector.load %arg8[%c0_90, %c0_91] : memref<8x128xf32, #tpu.memory_space<vmem>>, vector<8x128xf32>
    tpu.vector_store %arg8[%c0_90, %c0_91], %181 {strides = array<i32>} : memref<8x128xf32, #tpu.memory_space<vmem>>, vector<8x128xf32>,
    %185 = arith.truncf %183 : vector<8x128xf32> to vector<8x128xbf16>
    %c0_92 = arith.constant 0 : index
    %c0_93 = arith.constant 0 : index
    %186 = vector.load %arg7[%c0_92, %c0_93] : memref<8x128xbf16, #tpu.memory_space<vmem>>, vector<8x128xbf16>
    tpu.vector_store %arg7[%c0_92, %c0_93], %185 {strides = array<i32>} : memref<8x128xbf16, #tpu.memory_space<vmem>>, vector<8x128xbf16>,
    %187 = arith.index_cast %c3_i32 : i32 to index
    %c0_94 = arith.constant 0 : index
    %c0_95 = arith.constant 0 : index
    %188 = vector.load %arg5[%187, %c0_94, %c0_95] : memref<8x8x128xf32, #tpu.memory_space<vmem>>, vector<1x8x128xf32>
    %189 = vector.shape_cast %188 : vector<1x8x128xf32> to vector<8x128xf32>
    %190 = vector.shape_cast %183 : vector<8x128xf32> to vector<1x8x128xf32>
    tpu.vector_store %arg5[%187, %c0_94, %c0_95], %190 {strides = array<i32>} : memref<8x8x128xf32, #tpu.memory_space<vmem>>, vector<1x8x128xf32>,
    %c4_i32 = arith.constant 4 : i32
    %c0_96 = arith.constant 0 : index
    %c0_97 = arith.constant 0 : index
    %191 = vector.load %arg7[%c0_96, %c0_97] : memref<8x128xbf16, #tpu.memory_space<vmem>>, vector<8x128xbf16>
    %c0_98 = arith.constant 0 : index
    %c0_99 = arith.constant 0 : index
    %192 = vector.load %arg4[%c0_98, %c0_99] : memref<128x512xbf16, #tpu.memory_space<vmem>>, vector<128x512xbf16>
    %cst_100 = arith.constant dense<0.000000e+00> : vector<8x512xf32>
    %193 = tpu.matmul %191, %192, %cst_100 {dimension_numbers = #tpu.dot_dimension_numbers<[1], [0], [0], [1], [0, 0, 1, 1], [], []>} : vector<8x128xbf16>, vector<128x512xbf16>, vector<8x512xf32> -> vector<8x512xf32>
    %194 = arith.index_cast %c4_i32 : i32 to index
    %c0_101 = arith.constant 0 : index
    %c0_102 = arith.constant 0 : index
    %195 = vector.load %arg1[%194, %c0_101, %c0_102] : memref<8x8x512xbf16, #tpu.memory_space<vmem>>, vector<1x8x512xbf16>
    %196 = vector.shape_cast %195 : vector<1x8x512xbf16> to vector<8x512xbf16>
    %197 = arith.extf %196 : vector<8x512xbf16> to vector<8x512xf32>
    %198 = arith.addf %193, %197 : vector<8x512xf32>
    %199 = vector.extract_strided_slice %198 {offsets = [0, 0], sizes = [8, 128], strides = [1, 1]} : vector<8x512xf32> to vector<8x128xf32>
    %cst_103 = arith.constant 5.000000e-01 : f32
    %200 = vector.broadcast %cst_103 : f32 to vector<8x128xf32>
    %201 = arith.mulf %200, %199 : vector<8x128xf32>
    %202 = math.tanh %201 : vector<8x128xf32>
    %cst_104 = arith.constant 5.000000e-01 : f32
    %203 = vector.broadcast %cst_104 : f32 to vector<8x128xf32>
    %204 = arith.mulf %203, %202 : vector<8x128xf32>
    %cst_105 = arith.constant 5.000000e-01 : f32
    %205 = vector.broadcast %cst_105 : f32 to vector<8x128xf32>
    %206 = arith.addf %204, %205 : vector<8x128xf32>
    %207 = vector.extract_strided_slice %198 {offsets = [0, 128], sizes = [8, 128], strides = [1, 1]} : vector<8x512xf32> to vector<8x128xf32>
    %cst_106 = arith.constant 5.000000e-01 : f32
    %208 = vector.broadcast %cst_106 : f32 to vector<8x128xf32>
    %209 = arith.mulf %208, %207 : vector<8x128xf32>
    %210 = math.tanh %209 : vector<8x128xf32>
    %cst_107 = arith.constant 5.000000e-01 : f32
    %211 = vector.broadcast %cst_107 : f32 to vector<8x128xf32>
    %212 = arith.mulf %211, %210 : vector<8x128xf32>
    %cst_108 = arith.constant 5.000000e-01 : f32
    %213 = vector.broadcast %cst_108 : f32 to vector<8x128xf32>
    %214 = arith.addf %212, %213 : vector<8x128xf32>
    %215 = vector.extract_strided_slice %198 {offsets = [0, 256], sizes = [8, 128], strides = [1, 1]} : vector<8x512xf32> to vector<8x128xf32>
    %216 = math.tanh %215 : vector<8x128xf32>
    %217 = vector.extract_strided_slice %198 {offsets = [0, 384], sizes = [8, 128], strides = [1, 1]} : vector<8x512xf32> to vector<8x128xf32>
    %cst_109 = arith.constant 5.000000e-01 : f32
    %218 = vector.broadcast %cst_109 : f32 to vector<8x128xf32>
    %219 = arith.mulf %218, %217 : vector<8x128xf32>
    %220 = math.tanh %219 : vector<8x128xf32>
    %cst_110 = arith.constant 5.000000e-01 : f32
    %221 = vector.broadcast %cst_110 : f32 to vector<8x128xf32>
    %222 = arith.mulf %221, %220 : vector<8x128xf32>
    %cst_111 = arith.constant 5.000000e-01 : f32
    %223 = vector.broadcast %cst_111 : f32 to vector<8x128xf32>
    %224 = arith.addf %222, %223 : vector<8x128xf32>
    %c0_112 = arith.constant 0 : index
    %c0_113 = arith.constant 0 : index
    %225 = vector.load %arg8[%c0_112, %c0_113] : memref<8x128xf32, #tpu.memory_space<vmem>>, vector<8x128xf32>
    %226 = arith.mulf %225, %206 : vector<8x128xf32>
    %227 = arith.mulf %214, %216 : vector<8x128xf32>
    %228 = arith.addf %226, %227 : vector<8x128xf32>
    %229 = math.tanh %228 : vector<8x128xf32>
    %230 = arith.mulf %224, %229 : vector<8x128xf32>
    %c0_114 = arith.constant 0 : index
    %c0_115 = arith.constant 0 : index
    %231 = vector.load %arg8[%c0_114, %c0_115] : memref<8x128xf32, #tpu.memory_space<vmem>>, vector<8x128xf32>
    tpu.vector_store %arg8[%c0_114, %c0_115], %228 {strides = array<i32>} : memref<8x128xf32, #tpu.memory_space<vmem>>, vector<8x128xf32>,
    %232 = arith.truncf %230 : vector<8x128xf32> to vector<8x128xbf16>
    %c0_116 = arith.constant 0 : index
    %c0_117 = arith.constant 0 : index
    %233 = vector.load %arg7[%c0_116, %c0_117] : memref<8x128xbf16, #tpu.memory_space<vmem>>, vector<8x128xbf16>
    tpu.vector_store %arg7[%c0_116, %c0_117], %232 {strides = array<i32>} : memref<8x128xbf16, #tpu.memory_space<vmem>>, vector<8x128xbf16>,
    %234 = arith.index_cast %c4_i32 : i32 to index
    %c0_118 = arith.constant 0 : index
    %c0_119 = arith.constant 0 : index
    %235 = vector.load %arg5[%234, %c0_118, %c0_119] : memref<8x8x128xf32, #tpu.memory_space<vmem>>, vector<1x8x128xf32>
    %236 = vector.shape_cast %235 : vector<1x8x128xf32> to vector<8x128xf32>
    %237 = vector.shape_cast %230 : vector<8x128xf32> to vector<1x8x128xf32>
    tpu.vector_store %arg5[%234, %c0_118, %c0_119], %237 {strides = array<i32>} : memref<8x8x128xf32, #tpu.memory_space<vmem>>, vector<1x8x128xf32>,
    %c5_i32 = arith.constant 5 : i32
    %c0_120 = arith.constant 0 : index
    %c0_121 = arith.constant 0 : index
    %238 = vector.load %arg7[%c0_120, %c0_121] : memref<8x128xbf16, #tpu.memory_space<vmem>>, vector<8x128xbf16>
    %c0_122 = arith.constant 0 : index
    %c0_123 = arith.constant 0 : index
    %239 = vector.load %arg4[%c0_122, %c0_123] : memref<128x512xbf16, #tpu.memory_space<vmem>>, vector<128x512xbf16>
    %cst_124 = arith.constant dense<0.000000e+00> : vector<8x512xf32>
    %240 = tpu.matmul %238, %239, %cst_124 {dimension_numbers = #tpu.dot_dimension_numbers<[1], [0], [0], [1], [0, 0, 1, 1], [], []>} : vector<8x128xbf16>, vector<128x512xbf16>, vector<8x512xf32> -> vector<8x512xf32>
    %241 = arith.index_cast %c5_i32 : i32 to index
    %c0_125 = arith.constant 0 : index
    %c0_126 = arith.constant 0 : index
    %242 = vector.load %arg1[%241, %c0_125, %c0_126] : memref<8x8x512xbf16, #tpu.memory_space<vmem>>, vector<1x8x512xbf16>
    %243 = vector.shape_cast %242 : vector<1x8x512xbf16> to vector<8x512xbf16>
    %244 = arith.extf %243 : vector<8x512xbf16> to vector<8x512xf32>
    %245 = arith.addf %240, %244 : vector<8x512xf32>
    %246 = vector.extract_strided_slice %245 {offsets = [0, 0], sizes = [8, 128], strides = [1, 1]} : vector<8x512xf32> to vector<8x128xf32>
    %cst_127 = arith.constant 5.000000e-01 : f32
    %247 = vector.broadcast %cst_127 : f32 to vector<8x128xf32>
    %248 = arith.mulf %247, %246 : vector<8x128xf32>
    %249 = math.tanh %248 : vector<8x128xf32>
    %cst_128 = arith.constant 5.000000e-01 : f32
    %250 = vector.broadcast %cst_128 : f32 to vector<8x128xf32>
    %251 = arith.mulf %250, %249 : vector<8x128xf32>
    %cst_129 = arith.constant 5.000000e-01 : f32
    %252 = vector.broadcast %cst_129 : f32 to vector<8x128xf32>
    %253 = arith.addf %251, %252 : vector<8x128xf32>
    %254 = vector.extract_strided_slice %245 {offsets = [0, 128], sizes = [8, 128], strides = [1, 1]} : vector<8x512xf32> to vector<8x128xf32>
    %cst_130 = arith.constant 5.000000e-01 : f32
    %255 = vector.broadcast %cst_130 : f32 to vector<8x128xf32>
    %256 = arith.mulf %255, %254 : vector<8x128xf32>
    %257 = math.tanh %256 : vector<8x128xf32>
    %cst_131 = arith.constant 5.000000e-01 : f32
    %258 = vector.broadcast %cst_131 : f32 to vector<8x128xf32>
    %259 = arith.mulf %258, %257 : vector<8x128xf32>
    %cst_132 = arith.constant 5.000000e-01 : f32
    %260 = vector.broadcast %cst_132 : f32 to vector<8x128xf32>
    %261 = arith.addf %259, %260 : vector<8x128xf32>
    %262 = vector.extract_strided_slice %245 {offsets = [0, 256], sizes = [8, 128], strides = [1, 1]} : vector<8x512xf32> to vector<8x128xf32>
    %263 = math.tanh %262 : vector<8x128xf32>
    %264 = vector.extract_strided_slice %245 {offsets = [0, 384], sizes = [8, 128], strides = [1, 1]} : vector<8x512xf32> to vector<8x128xf32>
    %cst_133 = arith.constant 5.000000e-01 : f32
    %265 = vector.broadcast %cst_133 : f32 to vector<8x128xf32>
    %266 = arith.mulf %265, %264 : vector<8x128xf32>
    %267 = math.tanh %266 : vector<8x128xf32>
    %cst_134 = arith.constant 5.000000e-01 : f32
    %268 = vector.broadcast %cst_134 : f32 to vector<8x128xf32>
    %269 = arith.mulf %268, %267 : vector<8x128xf32>
    %cst_135 = arith.constant 5.000000e-01 : f32
    %270 = vector.broadcast %cst_135 : f32 to vector<8x128xf32>
    %271 = arith.addf %269, %270 : vector<8x128xf32>
    %c0_136 = arith.constant 0 : index
    %c0_137 = arith.constant 0 : index
    %272 = vector.load %arg8[%c0_136, %c0_137] : memref<8x128xf32, #tpu.memory_space<vmem>>, vector<8x128xf32>
    %273 = arith.mulf %272, %253 : vector<8x128xf32>
    %274 = arith.mulf %261, %263 : vector<8x128xf32>
    %275 = arith.addf %273, %274 : vector<8x128xf32>
    %276 = math.tanh %275 : vector<8x128xf32>
    %277 = arith.mulf %271, %276 : vector<8x128xf32>
    %c0_138 = arith.constant 0 : index
    %c0_139 = arith.constant 0 : index
    %278 = vector.load %arg8[%c0_138, %c0_139] : memref<8x128xf32, #tpu.memory_space<vmem>>, vector<8x128xf32>
    tpu.vector_store %arg8[%c0_138, %c0_139], %275 {strides = array<i32>} : memref<8x128xf32, #tpu.memory_space<vmem>>, vector<8x128xf32>,
    %279 = arith.truncf %277 : vector<8x128xf32> to vector<8x128xbf16>
    %c0_140 = arith.constant 0 : index
    %c0_141 = arith.constant 0 : index
    %280 = vector.load %arg7[%c0_140, %c0_141] : memref<8x128xbf16, #tpu.memory_space<vmem>>, vector<8x128xbf16>
    tpu.vector_store %arg7[%c0_140, %c0_141], %279 {strides = array<i32>} : memref<8x128xbf16, #tpu.memory_space<vmem>>, vector<8x128xbf16>,
    %281 = arith.index_cast %c5_i32 : i32 to index
    %c0_142 = arith.constant 0 : index
    %c0_143 = arith.constant 0 : index
    %282 = vector.load %arg5[%281, %c0_142, %c0_143] : memref<8x8x128xf32, #tpu.memory_space<vmem>>, vector<1x8x128xf32>
    %283 = vector.shape_cast %282 : vector<1x8x128xf32> to vector<8x128xf32>
    %284 = vector.shape_cast %277 : vector<8x128xf32> to vector<1x8x128xf32>
    tpu.vector_store %arg5[%281, %c0_142, %c0_143], %284 {strides = array<i32>} : memref<8x8x128xf32, #tpu.memory_space<vmem>>, vector<1x8x128xf32>,
    %c6_i32 = arith.constant 6 : i32
    %c0_144 = arith.constant 0 : index
    %c0_145 = arith.constant 0 : index
    %285 = vector.load %arg7[%c0_144, %c0_145] : memref<8x128xbf16, #tpu.memory_space<vmem>>, vector<8x128xbf16>
    %c0_146 = arith.constant 0 : index
    %c0_147 = arith.constant 0 : index
    %286 = vector.load %arg4[%c0_146, %c0_147] : memref<128x512xbf16, #tpu.memory_space<vmem>>, vector<128x512xbf16>
    %cst_148 = arith.constant dense<0.000000e+00> : vector<8x512xf32>
    %287 = tpu.matmul %285, %286, %cst_148 {dimension_numbers = #tpu.dot_dimension_numbers<[1], [0], [0], [1], [0, 0, 1, 1], [], []>} : vector<8x128xbf16>, vector<128x512xbf16>, vector<8x512xf32> -> vector<8x512xf32>
    %288 = arith.index_cast %c6_i32 : i32 to index
    %c0_149 = arith.constant 0 : index
    %c0_150 = arith.constant 0 : index
    %289 = vector.load %arg1[%288, %c0_149, %c0_150] : memref<8x8x512xbf16, #tpu.memory_space<vmem>>, vector<1x8x512xbf16>
    %290 = vector.shape_cast %289 : vector<1x8x512xbf16> to vector<8x512xbf16>
    %291 = arith.extf %290 : vector<8x512xbf16> to vector<8x512xf32>
    %292 = arith.addf %287, %291 : vector<8x512xf32>
    %293 = vector.extract_strided_slice %292 {offsets = [0, 0], sizes = [8, 128], strides = [1, 1]} : vector<8x512xf32> to vector<8x128xf32>
    %cst_151 = arith.constant 5.000000e-01 : f32
    %294 = vector.broadcast %cst_151 : f32 to vector<8x128xf32>
    %295 = arith.mulf %294, %293 : vector<8x128xf32>
    %296 = math.tanh %295 : vector<8x128xf32>
    %cst_152 = arith.constant 5.000000e-01 : f32
    %297 = vector.broadcast %cst_152 : f32 to vector<8x128xf32>
    %298 = arith.mulf %297, %296 : vector<8x128xf32>
    %cst_153 = arith.constant 5.000000e-01 : f32
    %299 = vector.broadcast %cst_153 : f32 to vector<8x128xf32>
    %300 = arith.addf %298, %299 : vector<8x128xf32>
    %301 = vector.extract_strided_slice %292 {offsets = [0, 128], sizes = [8, 128], strides = [1, 1]} : vector<8x512xf32> to vector<8x128xf32>
    %cst_154 = arith.constant 5.000000e-01 : f32
    %302 = vector.broadcast %cst_154 : f32 to vector<8x128xf32>
    %303 = arith.mulf %302, %301 : vector<8x128xf32>
    %304 = math.tanh %303 : vector<8x128xf32>
    %cst_155 = arith.constant 5.000000e-01 : f32
    %305 = vector.broadcast %cst_155 : f32 to vector<8x128xf32>
    %306 = arith.mulf %305, %304 : vector<8x128xf32>
    %cst_156 = arith.constant 5.000000e-01 : f32
    %307 = vector.broadcast %cst_156 : f32 to vector<8x128xf32>
    %308 = arith.addf %306, %307 : vector<8x128xf32>
    %309 = vector.extract_strided_slice %292 {offsets = [0, 256], sizes = [8, 128], strides = [1, 1]} : vector<8x512xf32> to vector<8x128xf32>
    %310 = math.tanh %309 : vector<8x128xf32>
    %311 = vector.extract_strided_slice %292 {offsets = [0, 384], sizes = [8, 128], strides = [1, 1]} : vector<8x512xf32> to vector<8x128xf32>
    %cst_157 = arith.constant 5.000000e-01 : f32
    %312 = vector.broadcast %cst_157 : f32 to vector<8x128xf32>
    %313 = arith.mulf %312, %311 : vector<8x128xf32>
    %314 = math.tanh %313 : vector<8x128xf32>
    %cst_158 = arith.constant 5.000000e-01 : f32
    %315 = vector.broadcast %cst_158 : f32 to vector<8x128xf32>
    %316 = arith.mulf %315, %314 : vector<8x128xf32>
    %cst_159 = arith.constant 5.000000e-01 : f32
    %317 = vector.broadcast %cst_159 : f32 to vector<8x128xf32>
    %318 = arith.addf %316, %317 : vector<8x128xf32>
    %c0_160 = arith.constant 0 : index
    %c0_161 = arith.constant 0 : index
    %319 = vector.load %arg8[%c0_160, %c0_161] : memref<8x128xf32, #tpu.memory_space<vmem>>, vector<8x128xf32>
    %320 = arith.mulf %319, %300 : vector<8x128xf32>
    %321 = arith.mulf %308, %310 : vector<8x128xf32>
    %322 = arith.addf %320, %321 : vector<8x128xf32>
    %323 = math.tanh %322 : vector<8x128xf32>
    %324 = arith.mulf %318, %323 : vector<8x128xf32>
    %c0_162 = arith.constant 0 : index
    %c0_163 = arith.constant 0 : index
    %325 = vector.load %arg8[%c0_162, %c0_163] : memref<8x128xf32, #tpu.memory_space<vmem>>, vector<8x128xf32>
    tpu.vector_store %arg8[%c0_162, %c0_163], %322 {strides = array<i32>} : memref<8x128xf32, #tpu.memory_space<vmem>>, vector<8x128xf32>,
    %326 = arith.truncf %324 : vector<8x128xf32> to vector<8x128xbf16>
    %c0_164 = arith.constant 0 : index
    %c0_165 = arith.constant 0 : index
    %327 = vector.load %arg7[%c0_164, %c0_165] : memref<8x128xbf16, #tpu.memory_space<vmem>>, vector<8x128xbf16>
    tpu.vector_store %arg7[%c0_164, %c0_165], %326 {strides = array<i32>} : memref<8x128xbf16, #tpu.memory_space<vmem>>, vector<8x128xbf16>,
    %328 = arith.index_cast %c6_i32 : i32 to index
    %c0_166 = arith.constant 0 : index
    %c0_167 = arith.constant 0 : index
    %329 = vector.load %arg5[%328, %c0_166, %c0_167] : memref<8x8x128xf32, #tpu.memory_space<vmem>>, vector<1x8x128xf32>
    %330 = vector.shape_cast %329 : vector<1x8x128xf32> to vector<8x128xf32>
    %331 = vector.shape_cast %324 : vector<8x128xf32> to vector<1x8x128xf32>
    tpu.vector_store %arg5[%328, %c0_166, %c0_167], %331 {strides = array<i32>} : memref<8x8x128xf32, #tpu.memory_space<vmem>>, vector<1x8x128xf32>,
    %c7_i32 = arith.constant 7 : i32
    %c0_168 = arith.constant 0 : index
    %c0_169 = arith.constant 0 : index
    %332 = vector.load %arg7[%c0_168, %c0_169] : memref<8x128xbf16, #tpu.memory_space<vmem>>, vector<8x128xbf16>
    %c0_170 = arith.constant 0 : index
    %c0_171 = arith.constant 0 : index
    %333 = vector.load %arg4[%c0_170, %c0_171] : memref<128x512xbf16, #tpu.memory_space<vmem>>, vector<128x512xbf16>
    %cst_172 = arith.constant dense<0.000000e+00> : vector<8x512xf32>
    %334 = tpu.matmul %332, %333, %cst_172 {dimension_numbers = #tpu.dot_dimension_numbers<[1], [0], [0], [1], [0, 0, 1, 1], [], []>} : vector<8x128xbf16>, vector<128x512xbf16>, vector<8x512xf32> -> vector<8x512xf32>
    %335 = arith.index_cast %c7_i32 : i32 to index
    %c0_173 = arith.constant 0 : index
    %c0_174 = arith.constant 0 : index
    %336 = vector.load %arg1[%335, %c0_173, %c0_174] : memref<8x8x512xbf16, #tpu.memory_space<vmem>>, vector<1x8x512xbf16>
    %337 = vector.shape_cast %336 : vector<1x8x512xbf16> to vector<8x512xbf16>
    %338 = arith.extf %337 : vector<8x512xbf16> to vector<8x512xf32>
    %339 = arith.addf %334, %338 : vector<8x512xf32>
    %340 = vector.extract_strided_slice %339 {offsets = [0, 0], sizes = [8, 128], strides = [1, 1]} : vector<8x512xf32> to vector<8x128xf32>
    %cst_175 = arith.constant 5.000000e-01 : f32
    %341 = vector.broadcast %cst_175 : f32 to vector<8x128xf32>
    %342 = arith.mulf %341, %340 : vector<8x128xf32>
    %343 = math.tanh %342 : vector<8x128xf32>
    %cst_176 = arith.constant 5.000000e-01 : f32
    %344 = vector.broadcast %cst_176 : f32 to vector<8x128xf32>
    %345 = arith.mulf %344, %343 : vector<8x128xf32>
    %cst_177 = arith.constant 5.000000e-01 : f32
    %346 = vector.broadcast %cst_177 : f32 to vector<8x128xf32>
    %347 = arith.addf %345, %346 : vector<8x128xf32>
    %348 = vector.extract_strided_slice %339 {offsets = [0, 128], sizes = [8, 128], strides = [1, 1]} : vector<8x512xf32> to vector<8x128xf32>
    %cst_178 = arith.constant 5.000000e-01 : f32
    %349 = vector.broadcast %cst_178 : f32 to vector<8x128xf32>
    %350 = arith.mulf %349, %348 : vector<8x128xf32>
    %351 = math.tanh %350 : vector<8x128xf32>
    %cst_179 = arith.constant 5.000000e-01 : f32
    %352 = vector.broadcast %cst_179 : f32 to vector<8x128xf32>
    %353 = arith.mulf %352, %351 : vector<8x128xf32>
    %cst_180 = arith.constant 5.000000e-01 : f32
    %354 = vector.broadcast %cst_180 : f32 to vector<8x128xf32>
    %355 = arith.addf %353, %354 : vector<8x128xf32>
    %356 = vector.extract_strided_slice %339 {offsets = [0, 256], sizes = [8, 128], strides = [1, 1]} : vector<8x512xf32> to vector<8x128xf32>
    %357 = math.tanh %356 : vector<8x128xf32>
    %358 = vector.extract_strided_slice %339 {offsets = [0, 384], sizes = [8, 128], strides = [1, 1]} : vector<8x512xf32> to vector<8x128xf32>
    %cst_181 = arith.constant 5.000000e-01 : f32
    %359 = vector.broadcast %cst_181 : f32 to vector<8x128xf32>
    %360 = arith.mulf %359, %358 : vector<8x128xf32>
    %361 = math.tanh %360 : vector<8x128xf32>
    %cst_182 = arith.constant 5.000000e-01 : f32
    %362 = vector.broadcast %cst_182 : f32 to vector<8x128xf32>
    %363 = arith.mulf %362, %361 : vector<8x128xf32>
    %cst_183 = arith.constant 5.000000e-01 : f32
    %364 = vector.broadcast %cst_183 : f32 to vector<8x128xf32>
    %365 = arith.addf %363, %364 : vector<8x128xf32>
    %c0_184 = arith.constant 0 : index
    %c0_185 = arith.constant 0 : index
    %366 = vector.load %arg8[%c0_184, %c0_185] : memref<8x128xf32, #tpu.memory_space<vmem>>, vector<8x128xf32>
    %367 = arith.mulf %366, %347 : vector<8x128xf32>
    %368 = arith.mulf %355, %357 : vector<8x128xf32>
    %369 = arith.addf %367, %368 : vector<8x128xf32>
    %370 = math.tanh %369 : vector<8x128xf32>
    %371 = arith.mulf %365, %370 : vector<8x128xf32>
    %c0_186 = arith.constant 0 : index
    %c0_187 = arith.constant 0 : index
    %372 = vector.load %arg8[%c0_186, %c0_187] : memref<8x128xf32, #tpu.memory_space<vmem>>, vector<8x128xf32>
    tpu.vector_store %arg8[%c0_186, %c0_187], %369 {strides = array<i32>} : memref<8x128xf32, #tpu.memory_space<vmem>>, vector<8x128xf32>,
    %373 = arith.truncf %371 : vector<8x128xf32> to vector<8x128xbf16>
    %c0_188 = arith.constant 0 : index
    %c0_189 = arith.constant 0 : index
    %374 = vector.load %arg7[%c0_188, %c0_189] : memref<8x128xbf16, #tpu.memory_space<vmem>>, vector<8x128xbf16>
    tpu.vector_store %arg7[%c0_188, %c0_189], %373 {strides = array<i32>} : memref<8x128xbf16, #tpu.memory_space<vmem>>, vector<8x128xbf16>,
    %375 = arith.index_cast %c7_i32 : i32 to index
    %c0_190 = arith.constant 0 : index
    %c0_191 = arith.constant 0 : index
    %376 = vector.load %arg5[%375, %c0_190, %c0_191] : memref<8x8x128xf32, #tpu.memory_space<vmem>>, vector<1x8x128xf32>
    %377 = vector.shape_cast %376 : vector<1x8x128xf32> to vector<8x128xf32>
    %378 = vector.shape_cast %371 : vector<8x128xf32> to vector<1x8x128xf32>
    tpu.vector_store %arg5[%375, %c0_190, %c0_191], %378 {strides = array<i32>} : memref<8x8x128xf32, #tpu.memory_space<vmem>>, vector<1x8x128xf32>,
    %c8_i32 = arith.constant 8 : i32
    %c0_i32_192 = arith.constant 0 : i32
    %379 = arith.cmpi eq, %arg0, %c0_i32_192 : i32
    %380 = arith.extui %379 : i1 to i32
    %c0_i32_193 = arith.constant 0 : i32
    %381 = arith.cmpi ne, %380, %c0_i32_193 : i32
    scf.if %381 {
      %c0_194 = arith.constant 0 : index
      %c0_195 = arith.constant 0 : index
      %382 = vector.load %arg8[%c0_194, %c0_195] : memref<8x128xf32, #tpu.memory_space<vmem>>, vector<8x128xf32>
      %c0_196 = arith.constant 0 : index
      %c0_197 = arith.constant 0 : index
      %383 = vector.load %arg6[%c0_196, %c0_197] : memref<8x128xf32, #tpu.memory_space<vmem>>, vector<8x128xf32>
      tpu.vector_store %arg6[%c0_196, %c0_197], %382 {strides = array<i32>} : memref<8x128xf32, #tpu.memory_space<vmem>>, vector<8x128xf32>,
    } else {
    }
    return
  }
  func.func @transform_0(%arg0: i32) -> (i32, i32, i32) {
    %c0_i32 = arith.constant 0 : i32
    %c0_i32_0 = arith.constant 0 : i32
    %c0_i32_1 = arith.constant 0 : i32
    return %arg0, %c0_i32, %c0_i32_0 : i32, i32, i32
  }
  func.func @transform_1(%arg0: i32) -> (i32, i32) {
    %c0_i32 = arith.constant 0 : i32
    %c0_i32_0 = arith.constant 0 : i32
    %c0_i32_1 = arith.constant 0 : i32
    return %c0_i32, %c0_i32_0 : i32, i32
  }
  func.func @transform_2(%arg0: i32) -> (i32, i32) {
    %c0_i32 = arith.constant 0 : i32
    %c0_i32_0 = arith.constant 0 : i32
    %c0_i32_1 = arith.constant 0 : i32
    return %c0_i32, %c0_i32_0 : i32, i32
  }
  func.func @transform_3(%arg0: i32) -> (i32, i32) {
    %c0_i32 = arith.constant 0 : i32
    %c0_i32_0 = arith.constant 0 : i32
    %c0_i32_1 = arith.constant 0 : i32
    return %c0_i32, %c0_i32_0 : i32, i32
  }
  func.func @transform_4(%arg0: i32) -> (i32, i32, i32) {
    %c0_i32 = arith.constant 0 : i32
    %c0_i32_0 = arith.constant 0 : i32
    %c0_i32_1 = arith.constant 0 : i32
    return %arg0, %c0_i32, %c0_i32_0 : i32, i32, i32
  }
  func.func @transform_5(%arg0: i32) -> (i32, i32) {
    %c0_i32 = arith.constant 0 : i32
    %c0_i32_0 = arith.constant 0 : i32
    %c0_i32_1 = arith.constant 0 : i32
    return %c0_i32, %c0_i32_0 : i32, i32
  }
}

</mosaic_0001>

<llo_original>
// kernel: tpu_custom_call.1
$region0: #{tpu_custom_call.1}
  #allocation0 [shape = 'u32[]', space=smem, size = 0x4, offset = 0x4, fixed_abs, tag = 'smem constant byte address 0x4 - core index']
  #allocation1 [shape = 'u32[144,128]{1,0:T(1,128)}', space=vmem, size = 0x12000, scoped, tag = 'internal scratch']
  #allocation2 [shape = 'bf16[8,128]{1,0:T(8,128)(2,1)}', space=vmem, size = 0x800, scoped, tag = 'scratch operand']
  #allocation3 [shape = 'f32[8,128]{1,0:T(8,128)}', space=vmem, size = 0x1000, scoped, tag = 'scratch operand']
  %s0 = inlined_call_operand.hbm [shape: bf16[8,8,512], index: 0, kind: input, shape index: {}]
  %s1 = inlined_call_operand.hbm [shape: bf16[8,128], index: 1, kind: input, shape index: {}]
  %s2 = inlined_call_operand.hbm [shape: f32[8,128], index: 2, kind: input, shape index: {}]
  %s3 = inlined_call_operand.hbm [shape: bf16[128,512], index: 3, kind: input, shape index: {}]
  %s4 = inlined_call_operand.hbm [shape: f32[8,8,128], index: 4, kind: output, shape index: {0}]
  %s5 = inlined_call_operand.hbm [shape: f32[8,128], index: 5, kind: output, shape index: {1}]
  %6 = xla_tuple %s4, %s5
  %s7 = sld [smem:[#allocation0]]
  $region58: #{tpu_custom_call.1} parent=0
    _
  %s9 = ssub.s32 1, %s7
  %s10 = scalar_select 0, %s9, %s7
  $region1: #{tpu_custom_call.1} parent=0
    #allocation4 [shape = 'u8[65536]{0}', space=vmem, size = 0x10000, scoped, tag = 'input window, operand 0, single buffered']
    #allocation5 [shape = 's32[1]{0}', space=sflag, size = 0x4, scoped, tag = 'scoped memory for tpu_custom_call.1']
    #allocation6 [shape = 's32[1]{0}', space=sflag, size = 0x4, scoped, tag = 'scoped memory for tpu_custom_call.1']
    #allocation7 [shape = 'u8[2048]{0}', space=vmem, size = 0x800, scoped, tag = 'input window, operand 1, single buffered']
    #allocation8 [shape = 's32[1]{0}', space=sflag, size = 0x4, scoped, tag = 'scoped memory for tpu_custom_call.1']
    #allocation9 [shape = 'u8[4096]{0}', space=vmem, size = 0x1000, scoped, tag = 'input window, operand 2, single buffered']
    #allocation10 [shape = 'u8[131072]{0}', space=vmem, size = 0x20000, scoped, tag = 'input window, operand 3, single buffered']
    #allocation11 [shape = 's32[1]{0}', space=sflag, size = 0x4, scoped, tag = 'scoped memory for tpu_custom_call.1']
    #allocation12 [shape = 'u8[32768]{0}', space=vmem, size = 0x8000, scoped, tag = 'output window, operand 0, single buffered']
    #allocation13 [shape = 'u8[4096]{0}', space=vmem, size = 0x1000, scoped, tag = 'output window, operand 1, single buffered']
    #allocation14 [shape = 's32[1]{0}', space=sflag, size = 0x4, scoped, tag = 'scoped memory for tpu_custom_call.1']
    %11 = vsyncpa [#allocation5], 0
    %12 = vsyncpa [#allocation8], 0
    %13 = vsyncpa [#allocation11], 0
    %14 = vsyncpa [#allocation6], 0
    %15 = vsyncpa [#allocation14], 0
    // Predicated region
    $region2: #{tpu_custom_call.1} parent=1 // pred_check
      _
    $region3: #{tpu_custom_call.1} parent=1 // pred_check_branch
      %17 = sbr.rel (0) target = $region5
    $region4: #{tpu_custom_call.1} parent=1 // pred_region
      %s19 = ssub.s32 2048, 2048
      %20 = vsyncadd [#allocation5], %s19
      %s21 = sshll.u32 [#allocation4], 4
      %s22 = int_to_ptr.vmem [resolvable:$true] %s21
      %27 = dma.hbm_to_vmem [thread:$0]  %s0, 2048, %s22, [#allocation5], 256, 256, 16
    $region5: #{tpu_custom_call.1} parent=1 // pred_fallthru
      _
    // Predicated region
    $region6: #{tpu_custom_call.1} parent=1 // pred_check
      _
    $region7: #{tpu_custom_call.1} parent=1 // pred_check_branch
      %29 = sbr.rel (0) target = $region9
    $region8: #{tpu_custom_call.1} parent=1 // pred_region
      %s31 = ssub.s32 64, 64
      %32 = vsyncadd [#allocation8], %s31
      %s34 = sshll.u32 [#allocation7], 4
      %s35 = int_to_ptr.vmem [resolvable:$true] %s34
      %37 = dma.hbm_to_vmem [thread:$0]  %s1, 64, %s35, [#allocation8]
    $region9: #{tpu_custom_call.1} parent=1 // pred_fallthru
      _
    // Predicated region
    $region10: #{tpu_custom_call.1} parent=1 // pred_check
      _
    $region11: #{tpu_custom_call.1} parent=1 // pred_check_branch
      %39 = sbr.rel (0) target = $region13
    $region12: #{tpu_custom_call.1} parent=1 // pred_region
      %s41 = ssub.s32 128, 128
      %42 = vsyncadd [#allocation8], %s41
      %s44 = sshll.u32 [#allocation9], 4
      %s45 = int_to_ptr.vmem [resolvable:$true] %s44
      %47 = dma.hbm_to_vmem [thread:$0]  %s2, 128, %s45, [#allocation8]
    $region13: #{tpu_custom_call.1} parent=1 // pred_fallthru
      _
    // Predicated region
    $region14: #{tpu_custom_call.1} parent=1 // pred_check
      _
    $region15: #{tpu_custom_call.1} parent=1 // pred_check_branch
      %49 = sbr.rel (0) target = $region17
    $region16: #{tpu_custom_call.1} parent=1 // pred_region
      %s51 = ssub.s32 4096, 4096
      %52 = vsyncadd [#allocation11], %s51
      %s53 = sshll.u32 [#allocation10], 4
      %s54 = int_to_ptr.vmem [resolvable:$true] %s53
      %59 = dma.hbm_to_vmem [thread:$0]  %s3, 4096, %s54, [#allocation11], 256, 256, 16
    $region17: #{tpu_custom_call.1} parent=1 // pred_fallthru
      _
    // Predicated region
    $region18: #{tpu_custom_call.1} parent=1 // pred_check
      _
    $region19: #{tpu_custom_call.1} parent=1 // pred_check_branch
      %61 = sbr.rel (0) target = $region21
    $region20: #{tpu_custom_call.1} parent=1 // pred_region
      %62 = dma.done [#allocation5], 2048
    $region21: #{tpu_custom_call.1} parent=1 // pred_fallthru
      _
    // Predicated region
    $region22: #{tpu_custom_call.1} parent=1 // pred_check
      _
    $region23: #{tpu_custom_call.1} parent=1 // pred_check_branch
      %64 = sbr.rel (0) target = $region25
    $region24: #{tpu_custom_call.1} parent=1 // pred_region
      %65 = dma.done [#allocation8], 64
    $region25: #{tpu_custom_call.1} parent=1 // pred_fallthru
      _
    // Predicated region
    $region26: #{tpu_custom_call.1} parent=1 // pred_check
      _
    $region27: #{tpu_custom_call.1} parent=1 // pred_check_branch
      %67 = sbr.rel (0) target = $region29
    $region28: #{tpu_custom_call.1} parent=1 // pred_region
      %68 = dma.done [#allocation8], 128
    $region29: #{tpu_custom_call.1} parent=1 // pred_fallthru
      _
    // Predicated region
    $region30: #{tpu_custom_call.1} parent=1 // pred_check
      _
    $region31: #{tpu_custom_call.1} parent=1 // pred_check_branch
      %70 = sbr.rel (0) target = $region33
    $region32: #{tpu_custom_call.1} parent=1 // pred_region
      %71 = dma.done [#allocation11], 4096
    $region33: #{tpu_custom_call.1} parent=1 // pred_fallthru
      _
    %p73 = scmp.eq.s32.totalorder 0, 0
    // Predicated region
    $region34: #{tpu_custom_call.1} parent=1 // pred_check
      %p74 = pneg %p73
    $region35: #{tpu_custom_call.1} parent=1 // pred_check_branch
      %76 = sbr.rel (%p74) target = $region37
    $region36: #{tpu_custom_call.1} parent=1 // pred_region
      %v77 = vld [vmem:[#allocation7] sm:$0xf]
      %78 = vst [vmem:[#allocation2] sm:$0xf] %v77
      %v79 = vld [vmem:[#allocation9] sm:$0xff]
      %80 = vst [vmem:[#allocation3] sm:$0xff] %v79
    $region37: #{tpu_custom_call.1} parent=1 // pred_fallthru
      _
    %v81 = vld [vmem:[#allocation2] sm:$0xf]
    %v82 = vld [vmem:[#allocation10] sm:$0xff]
    %v83 = vld [vmem:[#allocation10 + $0x8] sm:$0xff]
    %v84 = vld [vmem:[#allocation10 + $0x10] sm:$0xff]
    %v85 = vld [vmem:[#allocation10 + $0x18] sm:$0xff]
    %v86 = vld [vmem:[#allocation10 + $0x20] sm:$0xff]
    %v87 = vld [vmem:[#allocation10 + $0x28] sm:$0xff]
    %v88 = vld [vmem:[#allocation10 + $0x30] sm:$0xff]
    %v89 = vld [vmem:[#allocation10 + $0x38] sm:$0xff]
    %v90 = vld [vmem:[#allocation10 + $0x40] sm:$0xff]
    %v91 = vld [vmem:[#allocation10 + $0x48] sm:$0xff]
    %v92 = vld [vmem:[#allocation10 + $0x50] sm:$0xff]
    %v93 = vld [vmem:[#allocation10 + $0x58] sm:$0xff]
    %v94 = vld [vmem:[#allocation10 + $0x60] sm:$0xff]
    %v95 = vld [vmem:[#allocation10 + $0x68] sm:$0xff]
    %v96 = vld [vmem:[#allocation10 + $0x70] sm:$0xff]
    %v97 = vld [vmem:[#allocation10 + $0x78] sm:$0xff]
    %v98 = vld [vmem:[#allocation10 + $0x80] sm:$0xff]
    %v99 = vld [vmem:[#allocation10 + $0x88] sm:$0xff]
    %v100 = vld [vmem:[#allocation10 + $0x90] sm:$0xff]
    %v101 = vld [vmem:[#allocation10 + $0x98] sm:$0xff]
    %v102 = vld [vmem:[#allocation10 + $0xa0] sm:$0xff]
    %v103 = vld [vmem:[#allocation10 + $0xa8] sm:$0xff]
    %v104 = vld [vmem:[#allocation10 + $0xb0] sm:$0xff]
    %v105 = vld [vmem:[#allocation10 + $0xb8] sm:$0xff]
    %v106 = vld [vmem:[#allocation10 + $0xc0] sm:$0xff]
    %v107 = vld [vmem:[#allocation10 + $0xc8] sm:$0xff]
    %v108 = vld [vmem:[#allocation10 + $0xd0] sm:$0xff]
    %v109 = vld [vmem:[#allocation10 + $0xd8] sm:$0xff]
    %v110 = vld [vmem:[#allocation10 + $0xe0] sm:$0xff]
    %v111 = vld [vmem:[#allocation10 + $0xe8] sm:$0xff]
    %v112 = vld [vmem:[#allocation10 + $0xf0] sm:$0xff]
    %v113 = vld [vmem:[#allocation10 + $0xf8] sm:$0xff]
    %v114 = vld [vmem:[#allocation4] sm:$0xff]
    %v115 = vld [vmem:[#allocation4 + $0x8] sm:$0xff]
    %v116 = vunpack.c.l.bf16 %v114
    %v117 = vunpack.c.h.bf16 %v114
    %v118 = vunpack.c.l.bf16 %v115
    %v119 = vunpack.c.h.bf16 %v115
    %v152 = vunpack.c.l.b16 %v82
    %v153 = vunpack.c.h.b16 %v82
    %v154 = vunpack.c.l.b16 %v83
    %v155 = vunpack.c.h.b16 %v83
    %v156 = vunpack.c.l.b16 %v84
    %v157 = vunpack.c.h.b16 %v84
    %v158 = vunpack.c.l.b16 %v85
    %v159 = vunpack.c.h.b16 %v85
    %v160 = vunpack.c.l.b16 %v86
    %v161 = vunpack.c.h.b16 %v86
    %v162 = vunpack.c.l.b16 %v87
    %v163 = vunpack.c.h.b16 %v87
    %v164 = vunpack.c.l.b16 %v88
    %v165 = vunpack.c.h.b16 %v88
    %v166 = vunpack.c.l.b16 %v89
    %v167 = vunpack.c.h.b16 %v89
    %v168 = vunpack.c.l.b16 %v90
    %v169 = vunpack.c.h.b16 %v90
    %v170 = vunpack.c.l.b16 %v91
    %v171 = vunpack.c.h.b16 %v91
    %v172 = vunpack.c.l.b16 %v92
    %v173 = vunpack.c.h.b16 %v92
    %v174 = vunpack.c.l.b16 %v93
    %v175 = vunpack.c.h.b16 %v93
    %v176 = vunpack.c.l.b16 %v94
    %v177 = vunpack.c.h.b16 %v94
    %v178 = vunpack.c.l.b16 %v95
    %v179 = vunpack.c.h.b16 %v95
    %v180 = vunpack.c.l.b16 %v96
    %v181 = vunpack.c.h.b16 %v96
    %v182 = vunpack.c.l.b16 %v97
    %v183 = vunpack.c.h.b16 %v97
    %v184 = vunpack.c.l.b16 %v98
    %v185 = vunpack.c.h.b16 %v98
    %v186 = vunpack.c.l.b16 %v99
    %v187 = vunpack.c.h.b16 %v99
    %v188 = vunpack.c.l.b16 %v100
    %v189 = vunpack.c.h.b16 %v100
    %v190 = vunpack.c.l.b16 %v101
    %v191 = vunpack.c.h.b16 %v101
    %v192 = vunpack.c.l.b16 %v102
    %v193 = vunpack.c.h.b16 %v102
    %v194 = vunpack.c.l.b16 %v103
    %v195 = vunpack.c.h.b16 %v103
    %v196 = vunpack.c.l.b16 %v104
    %v197 = vunpack.c.h.b16 %v104
    %v198 = vunpack.c.l.b16 %v105
    %v199 = vunpack.c.h.b16 %v105
    %v200 = vunpack.c.l.b16 %v106
    %v201 = vunpack.c.h.b16 %v106
    %v202 = vunpack.c.l.b16 %v107
    %v203 = vunpack.c.h.b16 %v107
    %v204 = vunpack.c.l.b16 %v108
    %v205 = vunpack.c.h.b16 %v108
    %v206 = vunpack.c.l.b16 %v109
    %v207 = vunpack.c.h.b16 %v109
    %v208 = vunpack.c.l.b16 %v110
    %v209 = vunpack.c.h.b16 %v110
    %v210 = vunpack.c.l.b16 %v111
    %v211 = vunpack.c.h.b16 %v111
    %v212 = vunpack.c.l.b16 %v112
    %v213 = vunpack.c.h.b16 %v112
    %v214 = vunpack.c.l.b16 %v113
    %v215 = vunpack.c.h.b16 %v113
    %v216 = vpack.c.b16 %v156, %v152
    %v217 = vpack.c.b16 %v157, %v153
    %v218 = vpack.c.b16 %v158, %v154
    %v219 = vpack.c.b16 %v159, %v155
    %v220 = vpack.c.b16 %v164, %v160
    %v221 = vpack.c.b16 %v165, %v161
    %v222 = vpack.c.b16 %v166, %v162
    %v223 = vpack.c.b16 %v167, %v163
    %v224 = vpack.c.b16 %v172, %v168
    %v225 = vpack.c.b16 %v173, %v169
    %v226 = vpack.c.b16 %v174, %v170
    %v227 = vpack.c.b16 %v175, %v171
    %v228 = vpack.c.b16 %v180, %v176
    %v229 = vpack.c.b16 %v181, %v177
    %v230 = vpack.c.b16 %v182, %v178
    %v231 = vpack.c.b16 %v183, %v179
    %v232 = vpack.c.b16 %v188, %v184
    %v233 = vpack.c.b16 %v189, %v185
    %v234 = vpack.c.b16 %v190, %v186
    %v235 = vpack.c.b16 %v191, %v187
    %v236 = vpack.c.b16 %v196, %v192
    %v237 = vpack.c.b16 %v197, %v193
    %v238 = vpack.c.b16 %v198, %v194
    %v239 = vpack.c.b16 %v199, %v195
    %v240 = vpack.c.b16 %v204, %v200
    %v241 = vpack.c.b16 %v205, %v201
    %v242 = vpack.c.b16 %v206, %v202
    %v243 = vpack.c.b16 %v207, %v203
    %v244 = vpack.c.b16 %v212, %v208
    %v245 = vpack.c.b16 %v213, %v209
    %v246 = vpack.c.b16 %v214, %v210
    %v247 = vpack.c.b16 %v215, %v211
    %280 = vmatprep.subr.bf16.mxu0 %v245
    %281 = vmatpush1.bf16.msra.mxu0 %v244
    %282 = vmatprep.subr.bf16.mxu0 %v241
    %283 = vmatpush1.bf16.msra.mxu0 %v240
    %284 = vmatprep.subr.bf16.mxu0 %v237
    %285 = vmatpush1.bf16.msra.mxu0 %v236
    %286 = vmatprep.subr.bf16.mxu0 %v233
    %287 = vmatpush1.bf16.msra.mxu0 %v232
    %288 = vmatprep.subr.bf16.mxu0 %v229
    %289 = vmatpush1.bf16.msra.mxu0 %v228
    %290 = vmatprep.subr.bf16.mxu0 %v225
    %291 = vmatpush1.bf16.msra.mxu0 %v224
    %292 = vmatprep.subr.bf16.mxu0 %v221
    %293 = vmatpush1.bf16.msra.mxu0 %v220
    %294 = vmatprep.subr.bf16.mxu0 %v217
    %295 = vmatpush1.bf16.msra.mxu0 %v216
    %296 = vmatprep.subr.bf16.mxu0 0
    %297 = vmatpush2.bf16.msra.mxu0 0
    %298 = vmatprep.subr.bf16.mxu0 0
    %299 = vmatpush2.bf16.msra.mxu0 0
    %300 = vmatprep.subr.bf16.mxu0 0
    %301 = vmatpush2.bf16.msra.mxu0 0
    %302 = vmatprep.subr.bf16.mxu0 0
    %303 = vmatpush2.bf16.msra.mxu0 0
    %304 = vmatprep.subr.bf16.mxu0 0
    %305 = vmatpush2.bf16.msra.mxu0 0
    %306 = vmatprep.subr.bf16.mxu0 0
    %307 = vmatpush2.bf16.msra.mxu0 0
    %308 = vmatprep.subr.bf16.mxu0 0
    %309 = vmatpush2.bf16.msra.mxu0 0
    %310 = vmatprep.subr.bf16.mxu0 0
    %311 = vmatpush2.bf16.msra.mxu0 0
    %312 = vmatprep.mubr.bf16.mxu0 0
    %313 = vmatmul.mubr.bf16.gmra.mxu0 %v81
    %v314 = vpop.f32.mrf.mxu0
    %v315 = vadd.f32 %v116, %v314
    %v316 = vpop.f32.mrf.mxu0
    %v317 = vadd.f32 %v117, %v316
    %v318 = vpop.f32.mrf.mxu0
    %v319 = vpop.f32.mrf.mxu0
    %320 = vdwg.mxu0
    %321 = vmatprep.subr.bf16.mxu0 %v247
    %322 = vmatpush1.bf16.msra.mxu0 %v246
    %323 = vmatprep.subr.bf16.mxu0 %v243
    %324 = vmatpush1.bf16.msra.mxu0 %v242
    %325 = vmatprep.subr.bf16.mxu0 %v239
    %326 = vmatpush1.bf16.msra.mxu0 %v238
    %327 = vmatprep.subr.bf16.mxu0 %v235
    %328 = vmatpush1.bf16.msra.mxu0 %v234
    %329 = vmatprep.subr.bf16.mxu0 %v231
    %330 = vmatpush1.bf16.msra.mxu0 %v230
    %331 = vmatprep.subr.bf16.mxu0 %v227
    %332 = vmatpush1.bf16.msra.mxu0 %v226
    %333 = vmatprep.subr.bf16.mxu0 %v223
    %334 = vmatpush1.bf16.msra.mxu0 %v222
    %335 = vmatprep.subr.bf16.mxu0 %v219
    %336 = vmatpush1.bf16.msra.mxu0 %v218
    %337 = vmatprep.subr.bf16.mxu0 0
    %338 = vmatpush2.bf16.msra.mxu0 0
    %339 = vmatprep.subr.bf16.mxu0 0
    %340 = vmatpush2.bf16.msra.mxu0 0
    %341 = vmatprep.subr.bf16.mxu0 0
    %342 = vmatpush2.bf16.msra.mxu0 0
    %343 = vmatprep.subr.bf16.mxu0 0
    %344 = vmatpush2.bf16.msra.mxu0 0
    %345 = vmatprep.subr.bf16.mxu0 0
    %346 = vmatpush2.bf16.msra.mxu0 0
    %347 = vmatprep.subr.bf16.mxu0 0
    %348 = vmatpush2.bf16.msra.mxu0 0
    %349 = vmatprep.subr.bf16.mxu0 0
    %350 = vmatpush2.bf16.msra.mxu0 0
    %351 = vmatprep.subr.bf16.mxu0 0
    %352 = vmatpush2.bf16.msra.mxu0 0
    %353 = vmatprep.mubr.bf16.mxu0 0
    %354 = vmatmul.mubr.bf16.gmra.mxu0 %v81
    %v355 = vpop.f32.mrf.mxu0
    %v356 = vadd.f32 %v118, %v355
    %v357 = vpop.f32.mrf.mxu0
    %v358 = vadd.f32 %v119, %v357
    %v359 = vpop.f32.mrf.mxu0
    %v360 = vpop.f32.mrf.mxu0
    %361 = vdwg.mxu0
    %v362 = vmul.f32 %v315, 0.5
    %v363 = vtanh.pop %v362
    %v364 = vmul.f32 %v363, 0.5
    %v365 = vadd.f32 %v364, 0.5
    %v366 = vmul.f32 %v317, 0.5
    %v367 = vtanh.pop %v366
    %v368 = vmul.f32 %v367, 0.5
    %v369 = vadd.f32 %v368, 0.5
    %v370 = vtanh.pop %v356
    %v371 = vmul.f32 %v358, 0.5
    %v372 = vtanh.pop %v371
    %v373 = vmul.f32 %v372, 0.5
    %v374 = vadd.f32 %v373, 0.5
    %v375 = vld [vmem:[#allocation3] sm:$0xff]
    %v376 = vmul.f32 %v375, %v365
    %v377 = vmul.f32 %v369, %v370
    %v378 = vadd.f32 %v376, %v377
    %v379 = vtanh.pop %v378
    %v380 = vmul.f32 %v374, %v379
    %381 = vst [vmem:[#allocation3] sm:$0xff] %v378
    %v382 = vpack.c.bf16 %v380, %v380
    %383 = vst [vmem:[#allocation2] sm:$0xf] %v382
    %384 = vst [vmem:[#allocation12] sm:$0xff] %v380
    %v385 = vld [vmem:[#allocation2] sm:$0xf]
    %v386 = vld [vmem:[#allocation10] sm:$0xff]
    %v387 = vld [vmem:[#allocation10 + $0x8] sm:$0xff]
    %v388 = vld [vmem:[#allocation10 + $0x10] sm:$0xff]
    %v389 = vld [vmem:[#allocation10 + $0x18] sm:$0xff]
    %v390 = vld [vmem:[#allocation10 + $0x20] sm:$0xff]
    %v391 = vld [vmem:[#allocation10 + $0x28] sm:$0xff]
    %v392 = vld [vmem:[#allocation10 + $0x30] sm:$0xff]
    %v393 = vld [vmem:[#allocation10 + $0x38] sm:$0xff]
    %v394 = vld [vmem:[#allocation10 + $0x40] sm:$0xff]
    %v395 = vld [vmem:[#allocation10 + $0x48] sm:$0xff]
    %v396 = vld [vmem:[#allocation10 + $0x50] sm:$0xff]
    %v397 = vld [vmem:[#allocation10 + $0x58] sm:$0xff]
    %v398 = vld [vmem:[#allocation10 + $0x60] sm:$0xff]
    %v399 = vld [vmem:[#allocation10 + $0x68] sm:$0xff]
    %v400 = vld [vmem:[#allocation10 + $0x70] sm:$0xff]
    %v401 = vld [vmem:[#allocation10 + $0x78] sm:$0xff]
    %v402 = vld [vmem:[#allocation10 + $0x80] sm:$0xff]
    %v403 = vld [vmem:[#allocation10 + $0x88] sm:$0xff]
    %v404 = vld [vmem:[#allocation10 + $0x90] sm:$0xff]
    %v405 = vld [vmem:[#allocation10 + $0x98] sm:$0xff]
    %v406 = vld [vmem:[#allocation10 + $0xa0] sm:$0xff]
    %v407 = vld [vmem:[#allocation10 + $0xa8] sm:$0xff]
    %v408 = vld [vmem:[#allocation10 + $0xb0] sm:$0xff]
    %v409 = vld [vmem:[#allocation10 + $0xb8] sm:$0xff]
    %v410 = vld [vmem:[#allocation10 + $0xc0] sm:$0xff]
    %v411 = vld [vmem:[#allocation10 + $0xc8] sm:$0xff]
    %v412 = vld [vmem:[#allocation10 + $0xd0] sm:$0xff]
    %v413 = vld [vmem:[#allocation10 + $0xd8] sm:$0xff]
    %v414 = vld [vmem:[#allocation10 + $0xe0] sm:$0xff]
    %v415 = vld [vmem:[#allocation10 + $0xe8] sm:$0xff]
    %v416 = vld [vmem:[#allocation10 + $0xf0] sm:$0xff]
    %v417 = vld [vmem:[#allocation10 + $0xf8] sm:$0xff]
    %s418 = scalar_lea.vmem [#allocation4], 16
    %v419 = vld [vmem:[%s418] sm:$0xff]
    %v420 = vld [vmem:[%s418 + $0x8] sm:$0xff]
    %v421 = vunpack.c.l.bf16 %v419
    %v422 = vunpack.c.h.bf16 %v419
    %v423 = vunpack.c.l.bf16 %v420
    %v424 = vunpack.c.h.bf16 %v420
    %v457 = vunpack.c.l.b16 %v386
    %v458 = vunpack.c.h.b16 %v386
    %v459 = vunpack.c.l.b16 %v387
    %v460 = vunpack.c.h.b16 %v387
    %v461 = vunpack.c.l.b16 %v388
    %v462 = vunpack.c.h.b16 %v388
    %v463 = vunpack.c.l.b16 %v389
    %v464 = vunpack.c.h.b16 %v389
    %v465 = vunpack.c.l.b16 %v390
    %v466 = vunpack.c.h.b16 %v390
    %v467 = vunpack.c.l.b16 %v391
    %v468 = vunpack.c.h.b16 %v391
    %v469 = vunpack.c.l.b16 %v392
    %v470 = vunpack.c.h.b16 %v392
    %v471 = vunpack.c.l.b16 %v393
    %v472 = vunpack.c.h.b16 %v393
    %v473 = vunpack.c.l.b16 %v394
    %v474 = vunpack.c.h.b16 %v394
    %v475 = vunpack.c.l.b16 %v395
    %v476 = vunpack.c.h.b16 %v395
    %v477 = vunpack.c.l.b16 %v396
    %v478 = vunpack.c.h.b16 %v396
    %v479 = vunpack.c.l.b16 %v397
    %v480 = vunpack.c.h.b16 %v397
    %v481 = vunpack.c.l.b16 %v398
    %v482 = vunpack.c.h.b16 %v398
    %v483 = vunpack.c.l.b16 %v399
    %v484 = vunpack.c.h.b16 %v399
    %v485 = vunpack.c.l.b16 %v400
    %v486 = vunpack.c.h.b16 %v400
    %v487 = vunpack.c.l.b16 %v401
    %v488 = vunpack.c.h.b16 %v401
    %v489 = vunpack.c.l.b16 %v402
    %v490 = vunpack.c.h.b16 %v402
    %v491 = vunpack.c.l.b16 %v403
    %v492 = vunpack.c.h.b16 %v403
    %v493 = vunpack.c.l.b16 %v404
    %v494 = vunpack.c.h.b16 %v404
    %v495 = vunpack.c.l.b16 %v405
    %v496 = vunpack.c.h.b16 %v405
    %v497 = vunpack.c.l.b16 %v406
    %v498 = vunpack.c.h.b16 %v406
    %v499 = vunpack.c.l.b16 %v407
    %v500 = vunpack.c.h.b16 %v407
    %v501 = vunpack.c.l.b16 %v408
    %v502 = vunpack.c.h.b16 %v408
    %v503 = vunpack.c.l.b16 %v409
    %v504 = vunpack.c.h.b16 %v409
    %v505 = vunpack.c.l.b16 %v410
    %v506 = vunpack.c.h.b16 %v410
    %v507 = vunpack.c.l.b16 %v411
    %v508 = vunpack.c.h.b16 %v411
    %v509 = vunpack.c.l.b16 %v412
    %v510 = vunpack.c.h.b16 %v412
    %v511 = vunpack.c.l.b16 %v413
    %v512 = vunpack.c.h.b16 %v413
    %v513 = vunpack.c.l.b16 %v414
    %v514 = vunpack.c.h.b16 %v414
    %v515 = vunpack.c.l.b16 %v415
    %v516 = vunpack.c.h.b16 %v415
    %v517 = vunpack.c.l.b16 %v416
    %v518 = vunpack.c.h.b16 %v416
    %v519 = vunpack.c.l.b16 %v417
    %v520 = vunpack.c.h.b16 %v417
    %v521 = vpack.c.b16 %v461, %v457
    %v522 = vpack.c.b16 %v462, %v458
    %v523 = vpack.c.b16 %v463, %v459
    %v524 = vpack.c.b16 %v464, %v460
    %v525 = vpack.c.b16 %v469, %v465
    %v526 = vpack.c.b16 %v470, %v466
    %v527 = vpack.c.b16 %v471, %v467
    %v528 = vpack.c.b16 %v472, %v468
    %v529 = vpack.c.b16 %v477, %v473
    %v530 = vpack.c.b16 %v478, %v474
    %v531 = vpack.c.b16 %v479, %v475
    %v532 = vpack.c.b16 %v480, %v476
    %v533 = vpack.c.b16 %v485, %v481
    %v534 = vpack.c.b16 %v486, %v482
    %v535 = vpack.c.b16 %v487, %v483
    %v536 = vpack.c.b16 %v488, %v484
    %v537 = vpack.c.b16 %v493, %v489
    %v538 = vpack.c.b16 %v494, %v490
    %v539 = vpack.c.b16 %v495, %v491
    %v540 = vpack.c.b16 %v496, %v492
    %v541 = vpack.c.b16 %v501, %v497
    %v542 = vpack.c.b16 %v502, %v498
    %v543 = vpack.c.b16 %v503, %v499
    %v544 = vpack.c.b16 %v504, %v500
    %v545 = vpack.c.b16 %v509, %v505
    %v546 = vpack.c.b16 %v510, %v506
    %v547 = vpack.c.b16 %v511, %v507
    %v548 = vpack.c.b16 %v512, %v508
    %v549 = vpack.c.b16 %v517, %v513
    %v550 = vpack.c.b16 %v518, %v514
    %v551 = vpack.c.b16 %v519, %v515
    %v552 = vpack.c.b16 %v520, %v516
    %585 = vmatprep.subr.bf16.mxu0 %v550
    %586 = vmatpush1.bf16.msra.mxu0 %v549
    %587 = vmatprep.subr.bf16.mxu0 %v546
    %588 = vmatpush1.bf16.msra.mxu0 %v545
    %589 = vmatprep.subr.bf16.mxu0 %v542
    %590 = vmatpush1.bf16.msra.mxu0 %v541
    %591 = vmatprep.subr.bf16.mxu0 %v538
    %592 = vmatpush1.bf16.msra.mxu0 %v537
    %593 = vmatprep.subr.bf16.mxu0 %v534
    %594 = vmatpush1.bf16.msra.mxu0 %v533
    %595 = vmatprep.subr.bf16.mxu0 %v530
    %596 = vmatpush1.bf16.msra.mxu0 %v529
    %597 = vmatprep.subr.bf16.mxu0 %v526
    %598 = vmatpush1.bf16.msra.mxu0 %v525
    %599 = vmatprep.subr.bf16.mxu0 %v522
    %600 = vmatpush1.bf16.msra.mxu0 %v521
    %601 = vmatprep.subr.bf16.mxu0 0
    %602 = vmatpush2.bf16.msra.mxu0 0
    %603 = vmatprep.subr.bf16.mxu0 0
    %604 = vmatpush2.bf16.msra.mxu0 0
    %605 = vmatprep.subr.bf16.mxu0 0
    %606 = vmatpush2.bf16.msra.mxu0 0
    %607 = vmatprep.subr.bf16.mxu0 0
    %608 = vmatpush2.bf16.msra.mxu0 0
    %609 = vmatprep.subr.bf16.mxu0 0
    %610 = vmatpush2.bf16.msra.mxu0 0
    %611 = vmatprep.subr.bf16.mxu0 0
    %612 = vmatpush2.bf16.msra.mxu0 0
    %613 = vmatprep.subr.bf16.mxu0 0
    %614 = vmatpush2.bf16.msra.mxu0 0
    %615 = vmatprep.subr.bf16.mxu0 0
    %616 = vmatpush2.bf16.msra.mxu0 0
    %617 = vmatprep.mubr.bf16.mxu0 0
    %618 = vmatmul.mubr.bf16.gmra.mxu0 %v385
    %v619 = vpop.f32.mrf.mxu0
    %v620 = vadd.f32 %v421, %v619
    %v621 = vpop.f32.mrf.mxu0
    %v622 = vadd.f32 %v422, %v621
    %v623 = vpop.f32.mrf.mxu0
    %v624 = vpop.f32.mrf.mxu0
    %625 = vdwg.mxu0
    %626 = vmatprep.subr.bf16.mxu0 %v552
    %627 = vmatpush1.bf16.msra.mxu0 %v551
    %628 = vmatprep.subr.bf16.mxu0 %v548
    %629 = vmatpush1.bf16.msra.mxu0 %v547
    %630 = vmatprep.subr.bf16.mxu0 %v544
    %631 = vmatpush1.bf16.msra.mxu0 %v543
    %632 = vmatprep.subr.bf16.mxu0 %v540
    %633 = vmatpush1.bf16.msra.mxu0 %v539
    %634 = vmatprep.subr.bf16.mxu0 %v536
    %635 = vmatpush1.bf16.msra.mxu0 %v535
    %636 = vmatprep.subr.bf16.mxu0 %v532
    %637 = vmatpush1.bf16.msra.mxu0 %v531
    %638 = vmatprep.subr.bf16.mxu0 %v528
    %639 = vmatpush1.bf16.msra.mxu0 %v527
    %640 = vmatprep.subr.bf16.mxu0 %v524
    %641 = vmatpush1.bf16.msra.mxu0 %v523
    %642 = vmatprep.subr.bf16.mxu0 0
    %643 = vmatpush2.bf16.msra.mxu0 0
    %644 = vmatprep.subr.bf16.mxu0 0
    %645 = vmatpush2.bf16.msra.mxu0 0
    %646 = vmatprep.subr.bf16.mxu0 0
    %647 = vmatpush2.bf16.msra.mxu0 0
    %648 = vmatprep.subr.bf16.mxu0 0
    %649 = vmatpush2.bf16.msra.mxu0 0
    %650 = vmatprep.subr.bf16.mxu0 0
    %651 = vmatpush2.bf16.msra.mxu0 0
    %652 = vmatprep.subr.bf16.mxu0 0
    %653 = vmatpush2.bf16.msra.mxu0 0
    %654 = vmatprep.subr.bf16.mxu0 0
    %655 = vmatpush2.bf16.msra.mxu0 0
    %656 = vmatprep.subr.bf16.mxu0 0
    %657 = vmatpush2.bf16.msra.mxu0 0
    %658 = vmatprep.mubr.bf16.mxu0 0
    %659 = vmatmul.mubr.bf16.gmra.mxu0 %v385
    %v660 = vpop.f32.mrf.mxu0
    %v661 = vadd.f32 %v423, %v660
    %v662 = vpop.f32.mrf.mxu0
    %v663 = vadd.f32 %v424, %v662
    %v664 = vpop.f32.mrf.mxu0
    %v665 = vpop.f32.mrf.mxu0
    %666 = vdwg.mxu0
    %v667 = vmul.f32 %v620, 0.5
    %v668 = vtanh.pop %v667
    %v669 = vmul.f32 %v668, 0.5
    %v670 = vadd.f32 %v669, 0.5
    %v671 = vmul.f32 %v622, 0.5
    %v672 = vtanh.pop %v671
    %v673 = vmul.f32 %v672, 0.5
    %v674 = vadd.f32 %v673, 0.5
    %v675 = vtanh.pop %v661
    %v676 = vmul.f32 %v663, 0.5
    %v677 = vtanh.pop %v676
    %v678 = vmul.f32 %v677, 0.5
    %v679 = vadd.f32 %v678, 0.5
    %v680 = vld [vmem:[#allocation3] sm:$0xff]
    %v681 = vmul.f32 %v680, %v670
    %v682 = vmul.f32 %v674, %v675
    %v683 = vadd.f32 %v681, %v682
    %v684 = vtanh.pop %v683
    %v685 = vmul.f32 %v679, %v684
    %686 = vst [vmem:[#allocation3] sm:$0xff] %v683
    %v687 = vpack.c.bf16 %v685, %v685
    %688 = vst [vmem:[#allocation2] sm:$0xf] %v687
    %s689 = scalar_lea.vmem [#allocation12], 8
    %690 = vst [vmem:[%s689] sm:$0xff] %v685
    %v691 = vld [vmem:[#allocation2] sm:$0xf]
    %v692 = vld [vmem:[#allocation10] sm:$0xff]
    %v693 = vld [vmem:[#allocation10 + $0x8] sm:$0xff]
    %v694 = vld [vmem:[#allocation10 + $0x10] sm:$0xff]
    %v695 = vld [vmem:[#allocation10 + $0x18] sm:$0xff]
    %v696 = vld [vmem:[#allocation10 + $0x20] sm:$0xff]
    %v697 = vld [vmem:[#allocation10 + $0x28] sm:$0xff]
    %v698 = vld [vmem:[#allocation10 + $0x30] sm:$0xff]
    %v699 = vld [vmem:[#allocation10 + $0x38] sm:$0xff]
    %v700 = vld [vmem:[#allocation10 + $0x40] sm:$0xff]
    %v701 = vld [vmem:[#allocation10 + $0x48] sm:$0xff]
    %v702 = vld [vmem:[#allocation10 + $0x50] sm:$0xff]
    %v703 = vld [vmem:[#allocation10 + $0x58] sm:$0xff]
    %v704 = vld [vmem:[#allocation10 + $0x60] sm:$0xff]
    %v705 = vld [vmem:[#allocation10 + $0x68] sm:$0xff]
    %v706 = vld [vmem:[#allocation10 + $0x70] sm:$0xff]
    %v707 = vld [vmem:[#allocation10 + $0x78] sm:$0xff]
    %v708 = vld [vmem:[#allocation10 + $0x80] sm:$0xff]
    %v709 = vld [vmem:[#allocation10 + $0x88] sm:$0xff]
    %v710 = vld [vmem:[#allocation10 + $0x90] sm:$0xff]
    %v711 = vld [vmem:[#allocation10 + $0x98] sm:$0xff]
    %v712 = vld [vmem:[#allocation10 + $0xa0] sm:$0xff]
    %v713 = vld [vmem:[#allocation10 + $0xa8] sm:$0xff]
    %v714 = vld [vmem:[#allocation10 + $0xb0] sm:$0xff]
    %v715 = vld [vmem:[#allocation10 + $0xb8] sm:$0xff]
    %v716 = vld [vmem:[#allocation10 + $0xc0] sm:$0xff]
    %v717 = vld [vmem:[#allocation10 + $0xc8] sm:$0xff]
    %v718 = vld [vmem:[#allocation10 + $0xd0] sm:$0xff]
    %v719 = vld [vmem:[#allocation10 + $0xd8] sm:$0xff]
    %v720 = vld [vmem:[#allocation10 + $0xe0] sm:$0xff]
    %v721 = vld [vmem:[#allocation10 + $0xe8] sm:$0xff]
    %v722 = vld [vmem:[#allocation10 + $0xf0] sm:$0xff]
    %v723 = vld [vmem:[#allocation10 + $0xf8] sm:$0xff]
    %s724 = scalar_lea.vmem [#allocation4], 32
    %v725 = vld [vmem:[%s724] sm:$0xff]
    %v726 = vld [vmem:[%s724 + $0x8] sm:$0xff]
    %v727 = vunpack.c.l.bf16 %v725
    %v728 = vunpack.c.h.bf16 %v725
    %v729 = vunpack.c.l.bf16 %v726
    %v730 = vunpack.c.h.bf16 %v726
    %v763 = vunpack.c.l.b16 %v692
    %v764 = vunpack.c.h.b16 %v692
    %v765 = vunpack.c.l.b16 %v693
    %v766 = vunpack.c.h.b16 %v693
    %v767 = vunpack.c.l.b16 %v694
    %v768 = vunpack.c.h.b16 %v694
    %v769 = vunpack.c.l.b16 %v695
    %v770 = vunpack.c.h.b16 %v695
    %v771 = vunpack.c.l.b16 %v696
    %v772 = vunpack.c.h.b16 %v696
    %v773 = vunpack.c.l.b16 %v697
    %v774 = vunpack.c.h.b16 %v697
    %v775 = vunpack.c.l.b16 %v698
    %v776 = vunpack.c.h.b16 %v698
    %v777 = vunpack.c.l.b16 %v699
    %v778 = vunpack.c.h.b16 %v699
    %v779 = vunpack.c.l.b16 %v700
    %v780 = vunpack.c.h.b16 %v700
    %v781 = vunpack.c.l.b16 %v701
    %v782 = vunpack.c.h.b16 %v701
    %v783 = vunpack.c.l.b16 %v702
    %v784 = vunpack.c.h.b16 %v702
    %v785 = vunpack.c.l.b16 %v703
    %v786 = vunpack.c.h.b16 %v703
    %v787 = vunpack.c.l.b16 %v704
    %v788 = vunpack.c.h.b16 %v704
    %v789 = vunpack.c.l.b16 %v705
    %v790 = vunpack.c.h.b16 %v705
    %v791 = vunpack.c.l.b16 %v706
    %v792 = vunpack.c.h.b16 %v706
    %v793 = vunpack.c.l.b16 %v707
    %v794 = vunpack.c.h.b16 %v707
    %v795 = vunpack.c.l.b16 %v708
    %v796 = vunpack.c.h.b16 %v708
    %v797 = vunpack.c.l.b16 %v709
    %v798 = vunpack.c.h.b16 %v709
    %v799 = vunpack.c.l.b16 %v710
    %v800 = vunpack.c.h.b16 %v710
    %v801 = vunpack.c.l.b16 %v711
    %v802 = vunpack.c.h.b16 %v711
    %v803 = vunpack.c.l.b16 %v712
    %v804 = vunpack.c.h.b16 %v712
    %v805 = vunpack.c.l.b16 %v713
    %v806 = vunpack.c.h.b16 %v713
    %v807 = vunpack.c.l.b16 %v714
    %v808 = vunpack.c.h.b16 %v714
    %v809 = vunpack.c.l.b16 %v715
    %v810 = vunpack.c.h.b16 %v715
    %v811 = vunpack.c.l.b16 %v716
    %v812 = vunpack.c.h.b16 %v716
    %v813 = vunpack.c.l.b16 %v717
    %v814 = vunpack.c.h.b16 %v717
    %v815 = vunpack.c.l.b16 %v718
    %v816 = vunpack.c.h.b16 %v718
    %v817 = vunpack.c.l.b16 %v719
    %v818 = vunpack.c.h.b16 %v719
    %v819 = vunpack.c.l.b16 %v720
    %v820 = vunpack.c.h.b16 %v720
    %v821 = vunpack.c.l.b16 %v721
    %v822 = vunpack.c.h.b16 %v721
    %v823 = vunpack.c.l.b16 %v722
    %v824 = vunpack.c.h.b16 %v722
    %v825 = vunpack.c.l.b16 %v723
    %v826 = vunpack.c.h.b16 %v723
    %v827 = vpack.c.b16 %v767, %v763
    %v828 = vpack.c.b16 %v768, %v764
    %v829 = vpack.c.b16 %v769, %v765
    %v830 = vpack.c.b16 %v770, %v766
    %v831 = vpack.c.b16 %v775, %v771
    %v832 = vpack.c.b16 %v776, %v772
    %v833 = vpack.c.b16 %v777, %v773
    %v834 = vpack.c.b16 %v778, %v774
    %v835 = vpack.c.b16 %v783, %v779
    %v836 = vpack.c.b16 %v784, %v780
    %v837 = vpack.c.b16 %v785, %v781
    %v838 = vpack.c.b16 %v786, %v782
    %v839 = vpack.c.b16 %v791, %v787
    %v840 = vpack.c.b16 %v792, %v788
    %v841 = vpack.c.b16 %v793, %v789
    %v842 = vpack.c.b16 %v794, %v790
    %v843 = vpack.c.b16 %v799, %v795
    %v844 = vpack.c.b16 %v800, %v796
    %v845 = vpack.c.b16 %v801, %v797
    %v846 = vpack.c.b16 %v802, %v798
    %v847 = vpack.c.b16 %v807, %v803
    %v848 = vpack.c.b16 %v808, %v804
    %v849 = vpack.c.b16 %v809, %v805
    %v850 = vpack.c.b16 %v810, %v806
    %v851 = vpack.c.b16 %v815, %v811
    %v852 = vpack.c.b16 %v816, %v812
    %v853 = vpack.c.b16 %v817, %v813
    %v854 = vpack.c.b16 %v818, %v814
    %v855 = vpack.c.b16 %v823, %v819
    %v856 = vpack.c.b16 %v824, %v820
    %v857 = vpack.c.b16 %v825, %v821
    %v858 = vpack.c.b16 %v826, %v822
    %891 = vmatprep.subr.bf16.mxu0 %v856
    %892 = vmatpush1.bf16.msra.mxu0 %v855
    %893 = vmatprep.subr.bf16.mxu0 %v852
    %894 = vmatpush1.bf16.msra.mxu0 %v851
    %895 = vmatprep.subr.bf16.mxu0 %v848
    %896 = vmatpush1.bf16.msra.mxu0 %v847
    %897 = vmatprep.subr.bf16.mxu0 %v844
    %898 = vmatpush1.bf16.msra.mxu0 %v843
    %899 = vmatprep.subr.bf16.mxu0 %v840
    %900 = vmatpush1.bf16.msra.mxu0 %v839
    %901 = vmatprep.subr.bf16.mxu0 %v836
    %902 = vmatpush1.bf16.msra.mxu0 %v835
    %903 = vmatprep.subr.bf16.mxu0 %v832
    %904 = vmatpush1.bf16.msra.mxu0 %v831
    %905 = vmatprep.subr.bf16.mxu0 %v828
    %906 = vmatpush1.bf16.msra.mxu0 %v827
    %907 = vmatprep.subr.bf16.mxu0 0
    %908 = vmatpush2.bf16.msra.mxu0 0
    %909 = vmatprep.subr.bf16.mxu0 0
    %910 = vmatpush2.bf16.msra.mxu0 0
    %911 = vmatprep.subr.bf16.mxu0 0
    %912 = vmatpush2.bf16.msra.mxu0 0
    %913 = vmatprep.subr.bf16.mxu0 0
    %914 = vmatpush2.bf16.msra.mxu0 0
    %915 = vmatprep.subr.bf16.mxu0 0
    %916 = vmatpush2.bf16.msra.mxu0 0
    %917 = vmatprep.subr.bf16.mxu0 0
    %918 = vmatpush2.bf16.msra.mxu0 0
    %919 = vmatprep.subr.bf16.mxu0 0
    %920 = vmatpush2.bf16.msra.mxu0 0
    %921 = vmatprep.subr.bf16.mxu0 0
    %922 = vmatpush2.bf16.msra.mxu0 0
    %923 = vmatprep.mubr.bf16.mxu0 0
    %924 = vmatmul.mubr.bf16.gmra.mxu0 %v691
    %v925 = vpop.f32.mrf.mxu0
    %v926 = vadd.f32 %v727, %v925
    %v927 = vpop.f32.mrf.mxu0
    %v928 = vadd.f32 %v728, %v927
    %v929 = vpop.f32.mrf.mxu0
    %v930 = vpop.f32.mrf.mxu0
    %931 = vdwg.mxu0
    %932 = vmatprep.subr.bf16.mxu0 %v858
    %933 = vmatpush1.bf16.msra.mxu0 %v857
    %934 = vmatprep.subr.bf16.mxu0 %v854
    %935 = vmatpush1.bf16.msra.mxu0 %v853
    %936 = vmatprep.subr.bf16.mxu0 %v850
    %937 = vmatpush1.bf16.msra.mxu0 %v849
    %938 = vmatprep.subr.bf16.mxu0 %v846
    %939 = vmatpush1.bf16.msra.mxu0 %v845
    %940 = vmatprep.subr.bf16.mxu0 %v842
    %941 = vmatpush1.bf16.msra.mxu0 %v841
    %942 = vmatprep.subr.bf16.mxu0 %v838
    %943 = vmatpush1.bf16.msra.mxu0 %v837
    %944 = vmatprep.subr.bf16.mxu0 %v834
    %945 = vmatpush1.bf16.msra.mxu0 %v833
    %946 = vmatprep.subr.bf16.mxu0 %v830
    %947 = vmatpush1.bf16.msra.mxu0 %v829
    %948 = vmatprep.subr.bf16.mxu0 0
    %949 = vmatpush2.bf16.msra.mxu0 0
    %950 = vmatprep.subr.bf16.mxu0 0
    %951 = vmatpush2.bf16.msra.mxu0 0
    %952 = vmatprep.subr.bf16.mxu0 0
    %953 = vmatpush2.bf16.msra.mxu0 0
    %954 = vmatprep.subr.bf16.mxu0 0
    %955 = vmatpush2.bf16.msra.mxu0 0
    %956 = vmatprep.subr.bf16.mxu0 0
    %957 = vmatpush2.bf16.msra.mxu0 0
    %958 = vmatprep.subr.bf16.mxu0 0
    %959 = vmatpush2.bf16.msra.mxu0 0
    %960 = vmatprep.subr.bf16.mxu0 0
    %961 = vmatpush2.bf16.msra.mxu0 0
    %962 = vmatprep.subr.bf16.mxu0 0
    %963 = vmatpush2.bf16.msra.mxu0 0
    %964 = vmatprep.mubr.bf16.mxu0 0
    %965 = vmatmul.mubr.bf16.gmra.mxu0 %v691
    %v966 = vpop.f32.mrf.mxu0
    %v967 = vadd.f32 %v729, %v966
    %v968 = vpop.f32.mrf.mxu0
    %v969 = vadd.f32 %v730, %v968
    %v970 = vpop.f32.mrf.mxu0
    %v971 = vpop.f32.mrf.mxu0
    %972 = vdwg.mxu0
    %v973 = vmul.f32 %v926, 0.5
    %v974 = vtanh.pop %v973
    %v975 = vmul.f32 %v974, 0.5
    %v976 = vadd.f32 %v975, 0.5
    %v977 = vmul.f32 %v928, 0.5
    %v978 = vtanh.pop %v977
    %v979 = vmul.f32 %v978, 0.5
    %v980 = vadd.f32 %v979, 0.5
    %v981 = vtanh.pop %v967
    %v982 = vmul.f32 %v969, 0.5
    %v983 = vtanh.pop %v982
    %v984 = vmul.f32 %v983, 0.5
    %v985 = vadd.f32 %v984, 0.5
    %v986 = vld [vmem:[#allocation3] sm:$0xff]
    %v987 = vmul.f32 %v986, %v976
    %v988 = vmul.f32 %v980, %v981
    %v989 = vadd.f32 %v987, %v988
    %v990 = vtanh.pop %v989
    %v991 = vmul.f32 %v985, %v990
    %992 = vst [vmem:[#allocation3] sm:$0xff] %v989
    %v993 = vpack.c.bf16 %v991, %v991
    %994 = vst [vmem:[#allocation2] sm:$0xf] %v993
    %s995 = scalar_lea.vmem [#allocation12], 16
    %996 = vst [vmem:[%s995] sm:$0xff] %v991
    %v997 = vld [vmem:[#allocation2] sm:$0xf]
    %v998 = vld [vmem:[#allocation10] sm:$0xff]
    %v999 = vld [vmem:[#allocation10 + $0x8] sm:$0xff]
    %v1000 = vld [vmem:[#allocation10 + $0x10] sm:$0xff]
    %v1001 = vld [vmem:[#allocation10 + $0x18] sm:$0xff]
    %v1002 = vld [vmem:[#allocation10 + $0x20] sm:$0xff]
    %v1003 = vld [vmem:[#allocation10 + $0x28] sm:$0xff]
    %v1004 = vld [vmem:[#allocation10 + $0x30] sm:$0xff]
    %v1005 = vld [vmem:[#allocation10 + $0x38] sm:$0xff]
    %v1006 = vld [vmem:[#allocation10 + $0x40] sm:$0xff]
    %v1007 = vld [vmem:[#allocation10 + $0x48] sm:$0xff]
    %v1008 = vld [vmem:[#allocation10 + $0x50] sm:$0xff]
    %v1009 = vld [vmem:[#allocation10 + $0x58] sm:$0xff]
    %v1010 = vld [vmem:[#allocation10 + $0x60] sm:$0xff]
    %v1011 = vld [vmem:[#allocation10 + $0x68] sm:$0xff]
    %v1012 = vld [vmem:[#allocation10 + $0x70] sm:$0xff]
    %v1013 = vld [vmem:[#allocation10 + $0x78] sm:$0xff]
    %v1014 = vld [vmem:[#allocation10 + $0x80] sm:$0xff]
    %v1015 = vld [vmem:[#allocation10 + $0x88] sm:$0xff]
    %v1016 = vld [vmem:[#allocation10 + $0x90] sm:$0xff]
    %v1017 = vld [vmem:[#allocation10 + $0x98] sm:$0xff]
    %v1018 = vld [vmem:[#allocation10 + $0xa0] sm:$0xff]
    %v1019 = vld [vmem:[#allocation10 + $0xa8] sm:$0xff]
    %v1020 = vld [vmem:[#allocation10 + $0xb0] sm:$0xff]
    %v1021 = vld [vmem:[#allocation10 + $0xb8] sm:$0xff]
    %v1022 = vld [vmem:[#allocation10 + $0xc0] sm:$0xff]
    %v1023 = vld [vmem:[#allocation10 + $0xc8] sm:$0xff]
    %v1024 = vld [vmem:[#allocation10 + $0xd0] sm:$0xff]
    %v1025 = vld [vmem:[#allocation10 + $0xd8] sm:$0xff]
    %v1026 = vld [vmem:[#allocation10 + $0xe0] sm:$0xff]
    %v1027 = vld [vmem:[#allocation10 + $0xe8] sm:$0xff]
    %v1028 = vld [vmem:[#allocation10 + $0xf0] sm:$0xff]
    %v1029 = vld [vmem:[#allocation10 + $0xf8] sm:$0xff]
    %s1030 = scalar_lea.vmem [#allocation4], 48
    %v1031 = vld [vmem:[%s1030] sm:$0xff]
    %v1032 = vld [vmem:[%s1030 + $0x8] sm:$0xff]
    %v1033 = vunpack.c.l.bf16 %v1031
    %v1034 = vunpack.c.h.bf16 %v1031
    %v1035 = vunpack.c.l.bf16 %v1032
    %v1036 = vunpack.c.h.bf16 %v1032
    %v1069 = vunpack.c.l.b16 %v998
    %v1070 = vunpack.c.h.b16 %v998
    %v1071 = vunpack.c.l.b16 %v999
    %v1072 = vunpack.c.h.b16 %v999
    %v1073 = vunpack.c.l.b16 %v1000
    %v1074 = vunpack.c.h.b16 %v1000
    %v1075 = vunpack.c.l.b16 %v1001
    %v1076 = vunpack.c.h.b16 %v1001
    %v1077 = vunpack.c.l.b16 %v1002
    %v1078 = vunpack.c.h.b16 %v1002
    %v1079 = vunpack.c.l.b16 %v1003
    %v1080 = vunpack.c.h.b16 %v1003
    %v1081 = vunpack.c.l.b16 %v1004
    %v1082 = vunpack.c.h.b16 %v1004
    %v1083 = vunpack.c.l.b16 %v1005
    %v1084 = vunpack.c.h.b16 %v1005
    %v1085 = vunpack.c.l.b16 %v1006
    %v1086 = vunpack.c.h.b16 %v1006
    %v1087 = vunpack.c.l.b16 %v1007
    %v1088 = vunpack.c.h.b16 %v1007
    %v1089 = vunpack.c.l.b16 %v1008
    %v1090 = vunpack.c.h.b16 %v1008
    %v1091 = vunpack.c.l.b16 %v1009
    %v1092 = vunpack.c.h.b16 %v1009
    %v1093 = vunpack.c.l.b16 %v1010
    %v1094 = vunpack.c.h.b16 %v1010
    %v1095 = vunpack.c.l.b16 %v1011
    %v1096 = vunpack.c.h.b16 %v1011
    %v1097 = vunpack.c.l.b16 %v1012
    %v1098 = vunpack.c.h.b16 %v1012
    %v1099 = vunpack.c.l.b16 %v1013
    %v1100 = vunpack.c.h.b16 %v1013
    %v1101 = vunpack.c.l.b16 %v1014
    %v1102 = vunpack.c.h.b16 %v1014
    %v1103 = vunpack.c.l.b16 %v1015
    %v1104 = vunpack.c.h.b16 %v1015
    %v1105 = vunpack.c.l.b16 %v1016
    %v1106 = vunpack.c.h.b16 %v1016
    %v1107 = vunpack.c.l.b16 %v1017
    %v1108 = vunpack.c.h.b16 %v1017
    %v1109 = vunpack.c.l.b16 %v1018
    %v1110 = vunpack.c.h.b16 %v1018
    %v1111 = vunpack.c.l.b16 %v1019
    %v1112 = vunpack.c.h.b16 %v1019
    %v1113 = vunpack.c.l.b16 %v1020
    %v1114 = vunpack.c.h.b16 %v1020
    %v1115 = vunpack.c.l.b16 %v1021
    %v1116 = vunpack.c.h.b16 %v1021
    %v1117 = vunpack.c.l.b16 %v1022
    %v1118 = vunpack.c.h.b16 %v1022
    %v1119 = vunpack.c.l.b16 %v1023
    %v1120 = vunpack.c.h.b16 %v1023
    %v1121 = vunpack.c.l.b16 %v1024
    %v1122 = vunpack.c.h.b16 %v1024
    %v1123 = vunpack.c.l.b16 %v1025
    %v1124 = vunpack.c.h.b16 %v1025
    %v1125 = vunpack.c.l.b16 %v1026
    %v1126 = vunpack.c.h.b16 %v1026
    %v1127 = vunpack.c.l.b16 %v1027
    %v1128 = vunpack.c.h.b16 %v1027
    %v1129 = vunpack.c.l.b16 %v1028
    %v1130 = vunpack.c.h.b16 %v1028
    %v1131 = vunpack.c.l.b16 %v1029
    %v1132 = vunpack.c.h.b16 %v1029
    %v1133 = vpack.c.b16 %v1073, %v1069
    %v1134 = vpack.c.b16 %v1074, %v1070
    %v1135 = vpack.c.b16 %v1075, %v1071
    %v1136 = vpack.c.b16 %v1076, %v1072
    %v1137 = vpack.c.b16 %v1081, %v1077
    %v1138 = vpack.c.b16 %v1082, %v1078
    %v1139 = vpack.c.b16 %v1083, %v1079
    %v1140 = vpack.c.b16 %v1084, %v1080
    %v1141 = vpack.c.b16 %v1089, %v1085
    %v1142 = vpack.c.b16 %v1090, %v1086
    %v1143 = vpack.c.b16 %v1091, %v1087
    %v1144 = vpack.c.b16 %v1092, %v1088
    %v1145 = vpack.c.b16 %v1097, %v1093
    %v1146 = vpack.c.b16 %v1098, %v1094
    %v1147 = vpack.c.b16 %v1099, %v1095
    %v1148 = vpack.c.b16 %v1100, %v1096
    %v1149 = vpack.c.b16 %v1105, %v1101
    %v1150 = vpack.c.b16 %v1106, %v1102
    %v1151 = vpack.c.b16 %v1107, %v1103
    %v1152 = vpack.c.b16 %v1108, %v1104
    %v1153 = vpack.c.b16 %v1113, %v1109
    %v1154 = vpack.c.b16 %v1114, %v1110
    %v1155 = vpack.c.b16 %v1115, %v1111
    %v1156 = vpack.c.b16 %v1116, %v1112
    %v1157 = vpack.c.b16 %v1121, %v1117
    %v1158 = vpack.c.b16 %v1122, %v1118
    %v1159 = vpack.c.b16 %v1123, %v1119
    %v1160 = vpack.c.b16 %v1124, %v1120
    %v1161 = vpack.c.b16 %v1129, %v1125
    %v1162 = vpack.c.b16 %v1130, %v1126
    %v1163 = vpack.c.b16 %v1131, %v1127
    %v1164 = vpack.c.b16 %v1132, %v1128
    %1197 = vmatprep.subr.bf16.mxu0 %v1162
    %1198 = vmatpush1.bf16.msra.mxu0 %v1161
    %1199 = vmatprep.subr.bf16.mxu0 %v1158
    %1200 = vmatpush1.bf16.msra.mxu0 %v1157
    %1201 = vmatprep.subr.bf16.mxu0 %v1154
    %1202 = vmatpush1.bf16.msra.mxu0 %v1153
    %1203 = vmatprep.subr.bf16.mxu0 %v1150
    %1204 = vmatpush1.bf16.msra.mxu0 %v1149
    %1205 = vmatprep.subr.bf16.mxu0 %v1146
    %1206 = vmatpush1.bf16.msra.mxu0 %v1145
    %1207 = vmatprep.subr.bf16.mxu0 %v1142
    %1208 = vmatpush1.bf16.msra.mxu0 %v1141
    %1209 = vmatprep.subr.bf16.mxu0 %v1138
    %1210 = vmatpush1.bf16.msra.mxu0 %v1137
    %1211 = vmatprep.subr.bf16.mxu0 %v1134
    %1212 = vmatpush1.bf16.msra.mxu0 %v1133
    %1213 = vmatprep.subr.bf16.mxu0 0
    %1214 = vmatpush2.bf16.msra.mxu0 0
    %1215 = vmatprep.subr.bf16.mxu0 0
    %1216 = vmatpush2.bf16.msra.mxu0 0
    %1217 = vmatprep.subr.bf16.mxu0 0
    %1218 = vmatpush2.bf16.msra.mxu0 0
    %1219 = vmatprep.subr.bf16.mxu0 0
    %1220 = vmatpush2.bf16.msra.mxu0 0
    %1221 = vmatprep.subr.bf16.mxu0 0
    %1222 = vmatpush2.bf16.msra.mxu0 0
    %1223 = vmatprep.subr.bf16.mxu0 0
    %1224 = vmatpush2.bf16.msra.mxu0 0
    %1225 = vmatprep.subr.bf16.mxu0 0
    %1226 = vmatpush2.bf16.msra.mxu0 0
    %1227 = vmatprep.subr.bf16.mxu0 0
    %1228 = vmatpush2.bf16.msra.mxu0 0
    %1229 = vmatprep.mubr.bf16.mxu0 0
    %1230 = vmatmul.mubr.bf16.gmra.mxu0 %v997
    %v1231 = vpop.f32.mrf.mxu0
    %v1232 = vadd.f32 %v1033, %v1231
    %v1233 = vpop.f32.mrf.mxu0
    %v1234 = vadd.f32 %v1034, %v1233
    %v1235 = vpop.f32.mrf.mxu0
    %v1236 = vpop.f32.mrf.mxu0
    %1237 = vdwg.mxu0
    %1238 = vmatprep.subr.bf16.mxu0 %v1164
    %1239 = vmatpush1.bf16.msra.mxu0 %v1163
    %1240 = vmatprep.subr.bf16.mxu0 %v1160
    %1241 = vmatpush1.bf16.msra.mxu0 %v1159
    %1242 = vmatprep.subr.bf16.mxu0 %v1156
    %1243 = vmatpush1.bf16.msra.mxu0 %v1155
    %1244 = vmatprep.subr.bf16.mxu0 %v1152
    %1245 = vmatpush1.bf16.msra.mxu0 %v1151
    %1246 = vmatprep.subr.bf16.mxu0 %v1148
    %1247 = vmatpush1.bf16.msra.mxu0 %v1147
    %1248 = vmatprep.subr.bf16.mxu0 %v1144
    %1249 = vmatpush1.bf16.msra.mxu0 %v1143
    %1250 = vmatprep.subr.bf16.mxu0 %v1140
    %1251 = vmatpush1.bf16.msra.mxu0 %v1139
    %1252 = vmatprep.subr.bf16.mxu0 %v1136
    %1253 = vmatpush1.bf16.msra.mxu0 %v1135
    %1254 = vmatprep.subr.bf16.mxu0 0
    %1255 = vmatpush2.bf16.msra.mxu0 0
    %1256 = vmatprep.subr.bf16.mxu0 0
    %1257 = vmatpush2.bf16.msra.mxu0 0
    %1258 = vmatprep.subr.bf16.mxu0 0
    %1259 = vmatpush2.bf16.msra.mxu0 0
    %1260 = vmatprep.subr.bf16.mxu0 0
    %1261 = vmatpush2.bf16.msra.mxu0 0
    %1262 = vmatprep.subr.bf16.mxu0 0
    %1263 = vmatpush2.bf16.msra.mxu0 0
    %1264 = vmatprep.subr.bf16.mxu0 0
    %1265 = vmatpush2.bf16.msra.mxu0 0
    %1266 = vmatprep.subr.bf16.mxu0 0
    %1267 = vmatpush2.bf16.msra.mxu0 0
    %1268 = vmatprep.subr.bf16.mxu0 0
    %1269 = vmatpush2.bf16.msra.mxu0 0
    %1270 = vmatprep.mubr.bf16.mxu0 0
    %1271 = vmatmul.mubr.bf16.gmra.mxu0 %v997
    %v1272 = vpop.f32.mrf.mxu0
    %v1273 = vadd.f32 %v1035, %v1272
    %v1274 = vpop.f32.mrf.mxu0
    %v1275 = vadd.f32 %v1036, %v1274
    %v1276 = vpop.f32.mrf.mxu0
    %v1277 = vpop.f32.mrf.mxu0
    %1278 = vdwg.mxu0
    %v1279 = vmul.f32 %v1232, 0.5
    %v1280 = vtanh.pop %v1279
    %v1281 = vmul.f32 %v1280, 0.5
    %v1282 = vadd.f32 %v1281, 0.5
    %v1283 = vmul.f32 %v1234, 0.5
    %v1284 = vtanh.pop %v1283
    %v1285 = vmul.f32 %v1284, 0.5
    %v1286 = vadd.f32 %v1285, 0.5
    %v1287 = vtanh.pop %v1273
    %v1288 = vmul.f32 %v1275, 0.5
    %v1289 = vtanh.pop %v1288
    %v1290 = vmul.f32 %v1289, 0.5
    %v1291 = vadd.f32 %v1290, 0.5
    %v1292 = vld [vmem:[#allocation3] sm:$0xff]
    %v1293 = vmul.f32 %v1292, %v1282
    %v1294 = vmul.f32 %v1286, %v1287
    %v1295 = vadd.f32 %v1293, %v1294
    %v1296 = vtanh.pop %v1295
    %v1297 = vmul.f32 %v1291, %v1296
    %1298 = vst [vmem:[#allocation3] sm:$0xff] %v1295
    %v1299 = vpack.c.bf16 %v1297, %v1297
    %1300 = vst [vmem:[#allocation2] sm:$0xf] %v1299
    %s1301 = scalar_lea.vmem [#allocation12], 24
    %1302 = vst [vmem:[%s1301] sm:$0xff] %v1297
    %v1303 = vld [vmem:[#allocation2] sm:$0xf]
    %v1304 = vld [vmem:[#allocation10] sm:$0xff]
    %v1305 = vld [vmem:[#allocation10 + $0x8] sm:$0xff]
    %v1306 = vld [vmem:[#allocation10 + $0x10] sm:$0xff]
    %v1307 = vld [vmem:[#allocation10 + $0x18] sm:$0xff]
    %v1308 = vld [vmem:[#allocation10 + $0x20] sm:$0xff]
    %v1309 = vld [vmem:[#allocation10 + $0x28] sm:$0xff]
    %v1310 = vld [vmem:[#allocation10 + $0x30] sm:$0xff]
    %v1311 = vld [vmem:[#allocation10 + $0x38] sm:$0xff]
    %v1312 = vld [vmem:[#allocation10 + $0x40] sm:$0xff]
    %v1313 = vld [vmem:[#allocation10 + $0x48] sm:$0xff]
    %v1314 = vld [vmem:[#allocation10 + $0x50] sm:$0xff]
    %v1315 = vld [vmem:[#allocation10 + $0x58] sm:$0xff]
    %v1316 = vld [vmem:[#allocation10 + $0x60] sm:$0xff]
    %v1317 = vld [vmem:[#allocation10 + $0x68] sm:$0xff]
    %v1318 = vld [vmem:[#allocation10 + $0x70] sm:$0xff]
    %v1319 = vld [vmem:[#allocation10 + $0x78] sm:$0xff]
    %v1320 = vld [vmem:[#allocation10 + $0x80] sm:$0xff]
    %v1321 = vld [vmem:[#allocation10 + $0x88] sm:$0xff]
    %v1322 = vld [vmem:[#allocation10 + $0x90] sm:$0xff]
    %v1323 = vld [vmem:[#allocation10 + $0x98] sm:$0xff]
    %v1324 = vld [vmem:[#allocation10 + $0xa0] sm:$0xff]
    %v1325 = vld [vmem:[#allocation10 + $0xa8] sm:$0xff]
    %v1326 = vld [vmem:[#allocation10 + $0xb0] sm:$0xff]
    %v1327 = vld [vmem:[#allocation10 + $0xb8] sm:$0xff]
    %v1328 = vld [vmem:[#allocation10 + $0xc0] sm:$0xff]
    %v1329 = vld [vmem:[#allocation10 + $0xc8] sm:$0xff]
    %v1330 = vld [vmem:[#allocation10 + $0xd0] sm:$0xff]
    %v1331 = vld [vmem:[#allocation10 + $0xd8] sm:$0xff]
    %v1332 = vld [vmem:[#allocation10 + $0xe0] sm:$0xff]
    %v1333 = vld [vmem:[#allocation10 + $0xe8] sm:$0xff]
    %v1334 = vld [vmem:[#allocation10 + $0xf0] sm:$0xff]
    %v1335 = vld [vmem:[#allocation10 + $0xf8] sm:$0xff]
    %s1336 = scalar_lea.vmem [#allocation4], 64
    %v1337 = vld [vmem:[%s1336] sm:$0xff]
    %v1338 = vld [vmem:[%s1336 + $0x8] sm:$0xff]
    %v1339 = vunpack.c.l.bf16 %v1337
    %v1340 = vunpack.c.h.bf16 %v1337
    %v1341 = vunpack.c.l.bf16 %v1338
    %v1342 = vunpack.c.h.bf16 %v1338
    %v1375 = vunpack.c.l.b16 %v1304
    %v1376 = vunpack.c.h.b16 %v1304
    %v1377 = vunpack.c.l.b16 %v1305
    %v1378 = vunpack.c.h.b16 %v1305
    %v1379 = vunpack.c.l.b16 %v1306
    %v1380 = vunpack.c.h.b16 %v1306
    %v1381 = vunpack.c.l.b16 %v1307
    %v1382 = vunpack.c.h.b16 %v1307
    %v1383 = vunpack.c.l.b16 %v1308
    %v1384 = vunpack.c.h.b16 %v1308
    %v1385 = vunpack.c.l.b16 %v1309
    %v1386 = vunpack.c.h.b16 %v1309
    %v1387 = vunpack.c.l.b16 %v1310
    %v1388 = vunpack.c.h.b16 %v1310
    %v1389 = vunpack.c.l.b16 %v1311
    %v1390 = vunpack.c.h.b16 %v1311
    %v1391 = vunpack.c.l.b16 %v1312
    %v1392 = vunpack.c.h.b16 %v1312
    %v1393 = vunpack.c.l.b16 %v1313
    %v1394 = vunpack.c.h.b16 %v1313
    %v1395 = vunpack.c.l.b16 %v1314
    %v1396 = vunpack.c.h.b16 %v1314
    %v1397 = vunpack.c.l.b16 %v1315
    %v1398 = vunpack.c.h.b16 %v1315
    %v1399 = vunpack.c.l.b16 %v1316
    %v1400 = vunpack.c.h.b16 %v1316
    %v1401 = vunpack.c.l.b16 %v1317
    %v1402 = vunpack.c.h.b16 %v1317
    %v1403 = vunpack.c.l.b16 %v1318
    %v1404 = vunpack.c.h.b16 %v1318
    %v1405 = vunpack.c.l.b16 %v1319
    %v1406 = vunpack.c.h.b16 %v1319
    %v1407 = vunpack.c.l.b16 %v1320
    %v1408 = vunpack.c.h.b16 %v1320
    %v1409 = vunpack.c.l.b16 %v1321
    %v1410 = vunpack.c.h.b16 %v1321
    %v1411 = vunpack.c.l.b16 %v1322
    %v1412 = vunpack.c.h.b16 %v1322
    %v1413 = vunpack.c.l.b16 %v1323
    %v1414 = vunpack.c.h.b16 %v1323
    %v1415 = vunpack.c.l.b16 %v1324
    %v1416 = vunpack.c.h.b16 %v1324
    %v1417 = vunpack.c.l.b16 %v1325
    %v1418 = vunpack.c.h.b16 %v1325
    %v1419 = vunpack.c.l.b16 %v1326
    %v1420 = vunpack.c.h.b16 %v1326
    %v1421 = vunpack.c.l.b16 %v1327
    %v1422 = vunpack.c.h.b16 %v1327
    %v1423 = vunpack.c.l.b16 %v1328
    %v1424 = vunpack.c.h.b16 %v1328
    %v1425 = vunpack.c.l.b16 %v1329
    %v1426 = vunpack.c.h.b16 %v1329
    %v1427 = vunpack.c.l.b16 %v1330
    %v1428 = vunpack.c.h.b16 %v1330
    %v1429 = vunpack.c.l.b16 %v1331
    %v1430 = vunpack.c.h.b16 %v1331
    %v1431 = vunpack.c.l.b16 %v1332
    %v1432 = vunpack.c.h.b16 %v1332
    %v1433 = vunpack.c.l.b16 %v1333
    %v1434 = vunpack.c.h.b16 %v1333
    %v1435 = vunpack.c.l.b16 %v1334
    %v1436 = vunpack.c.h.b16 %v1334
    %v1437 = vunpack.c.l.b16 %v1335
    %v1438 = vunpack.c.h.b16 %v1335
    %v1439 = vpack.c.b16 %v1379, %v1375
    %v1440 = vpack.c.b16 %v1380, %v1376
    %v1441 = vpack.c.b16 %v1381, %v1377
    %v1442 = vpack.c.b16 %v1382, %v1378
    %v1443 = vpack.c.b16 %v1387, %v1383
    %v1444 = vpack.c.b16 %v1388, %v1384
    %v1445 = vpack.c.b16 %v1389, %v1385
    %v1446 = vpack.c.b16 %v1390, %v1386
    %v1447 = vpack.c.b16 %v1395, %v1391
    %v1448 = vpack.c.b16 %v1396, %v1392
    %v1449 = vpack.c.b16 %v1397, %v1393
    %v1450 = vpack.c.b16 %v1398, %v1394
    %v1451 = vpack.c.b16 %v1403, %v1399
    %v1452 = vpack.c.b16 %v1404, %v1400
    %v1453 = vpack.c.b16 %v1405, %v1401
    %v1454 = vpack.c.b16 %v1406, %v1402
    %v1455 = vpack.c.b16 %v1411, %v1407
    %v1456 = vpack.c.b16 %v1412, %v1408
    %v1457 = vpack.c.b16 %v1413, %v1409
    %v1458 = vpack.c.b16 %v1414, %v1410
    %v1459 = vpack.c.b16 %v1419, %v1415
    %v1460 = vpack.c.b16 %v1420, %v1416
    %v1461 = vpack.c.b16 %v1421, %v1417
    %v1462 = vpack.c.b16 %v1422, %v1418
    %v1463 = vpack.c.b16 %v1427, %v1423
    %v1464 = vpack.c.b16 %v1428, %v1424
    %v1465 = vpack.c.b16 %v1429, %v1425
    %v1466 = vpack.c.b16 %v1430, %v1426
    %v1467 = vpack.c.b16 %v1435, %v1431
    %v1468 = vpack.c.b16 %v1436, %v1432
    %v1469 = vpack.c.b16 %v1437, %v1433
    %v1470 = vpack.c.b16 %v1438, %v1434
    %1503 = vmatprep.subr.bf16.mxu0 %v1468
    %1504 = vmatpush1.bf16.msra.mxu0 %v1467
    %1505 = vmatprep.subr.bf16.mxu0 %v1464
    %1506 = vmatpush1.bf16.msra.mxu0 %v1463
    %1507 = vmatprep.subr.bf16.mxu0 %v1460
    %1508 = vmatpush1.bf16.msra.mxu0 %v1459
    %1509 = vmatprep.subr.bf16.mxu0 %v1456
    %1510 = vmatpush1.bf16.msra.mxu0 %v1455
    %1511 = vmatprep.subr.bf16.mxu0 %v1452
    %1512 = vmatpush1.bf16.msra.mxu0 %v1451
    %1513 = vmatprep.subr.bf16.mxu0 %v1448
    %1514 = vmatpush1.bf16.msra.mxu0 %v1447
    %1515 = vmatprep.subr.bf16.mxu0 %v1444
    %1516 = vmatpush1.bf16.msra.mxu0 %v1443
    %1517 = vmatprep.subr.bf16.mxu0 %v1440
    %1518 = vmatpush1.bf16.msra.mxu0 %v1439
    %1519 = vmatprep.subr.bf16.mxu0 0
    %1520 = vmatpush2.bf16.msra.mxu0 0
    %1521 = vmatprep.subr.bf16.mxu0 0
    %1522 = vmatpush2.bf16.msra.mxu0 0
    %1523 = vmatprep.subr.bf16.mxu0 0
    %1524 = vmatpush2.bf16.msra.mxu0 0
    %1525 = vmatprep.subr.bf16.mxu0 0
    %1526 = vmatpush2.bf16.msra.mxu0 0
    %1527 = vmatprep.subr.bf16.mxu0 0
    %1528 = vmatpush2.bf16.msra.mxu0 0
    %1529 = vmatprep.subr.bf16.mxu0 0
    %1530 = vmatpush2.bf16.msra.mxu0 0
    %1531 = vmatprep.subr.bf16.mxu0 0
    %1532 = vmatpush2.bf16.msra.mxu0 0
    %1533 = vmatprep.subr.bf16.mxu0 0
    %1534 = vmatpush2.bf16.msra.mxu0 0
    %1535 = vmatprep.mubr.bf16.mxu0 0
    %1536 = vmatmul.mubr.bf16.gmra.mxu0 %v1303
    %v1537 = vpop.f32.mrf.mxu0
    %v1538 = vadd.f32 %v1339, %v1537
    %v1539 = vpop.f32.mrf.mxu0
    %v1540 = vadd.f32 %v1340, %v1539
    %v1541 = vpop.f32.mrf.mxu0
    %v1542 = vpop.f32.mrf.mxu0
    %1543 = vdwg.mxu0
    %1544 = vmatprep.subr.bf16.mxu0 %v1470
    %1545 = vmatpush1.bf16.msra.mxu0 %v1469
    %1546 = vmatprep.subr.bf16.mxu0 %v1466
    %1547 = vmatpush1.bf16.msra.mxu0 %v1465
    %1548 = vmatprep.subr.bf16.mxu0 %v1462
    %1549 = vmatpush1.bf16.msra.mxu0 %v1461
    %1550 = vmatprep.subr.bf16.mxu0 %v1458
    %1551 = vmatpush1.bf16.msra.mxu0 %v1457
    %1552 = vmatprep.subr.bf16.mxu0 %v1454
    %1553 = vmatpush1.bf16.msra.mxu0 %v1453
    %1554 = vmatprep.subr.bf16.mxu0 %v1450
    %1555 = vmatpush1.bf16.msra.mxu0 %v1449
    %1556 = vmatprep.subr.bf16.mxu0 %v1446
    %1557 = vmatpush1.bf16.msra.mxu0 %v1445
    %1558 = vmatprep.subr.bf16.mxu0 %v1442
    %1559 = vmatpush1.bf16.msra.mxu0 %v1441
    %1560 = vmatprep.subr.bf16.mxu0 0
    %1561 = vmatpush2.bf16.msra.mxu0 0
    %1562 = vmatprep.subr.bf16.mxu0 0
    %1563 = vmatpush2.bf16.msra.mxu0 0
    %1564 = vmatprep.subr.bf16.mxu0 0
    %1565 = vmatpush2.bf16.msra.mxu0 0
    %1566 = vmatprep.subr.bf16.mxu0 0
    %1567 = vmatpush2.bf16.msra.mxu0 0
    %1568 = vmatprep.subr.bf16.mxu0 0
    %1569 = vmatpush2.bf16.msra.mxu0 0
    %1570 = vmatprep.subr.bf16.mxu0 0
    %1571 = vmatpush2.bf16.msra.mxu0 0
    %1572 = vmatprep.subr.bf16.mxu0 0
    %1573 = vmatpush2.bf16.msra.mxu0 0
    %1574 = vmatprep.subr.bf16.mxu0 0
    %1575 = vmatpush2.bf16.msra.mxu0 0
    %1576 = vmatprep.mubr.bf16.mxu0 0
    %1577 = vmatmul.mubr.bf16.gmra.mxu0 %v1303
    %v1578 = vpop.f32.mrf.mxu0
    %v1579 = vadd.f32 %v1341, %v1578
    %v1580 = vpop.f32.mrf.mxu0
    %v1581 = vadd.f32 %v1342, %v1580
    %v1582 = vpop.f32.mrf.mxu0
    %v1583 = vpop.f32.mrf.mxu0
    %1584 = vdwg.mxu0
    %v1585 = vmul.f32 %v1538, 0.5
    %v1586 = vtanh.pop %v1585
    %v1587 = vmul.f32 %v1586, 0.5
    %v1588 = vadd.f32 %v1587, 0.5
    %v1589 = vmul.f32 %v1540, 0.5
    %v1590 = vtanh.pop %v1589
    %v1591 = vmul.f32 %v1590, 0.5
    %v1592 = vadd.f32 %v1591, 0.5
    %v1593 = vtanh.pop %v1579
    %v1594 = vmul.f32 %v1581, 0.5
    %v1595 = vtanh.pop %v1594
    %v1596 = vmul.f32 %v1595, 0.5
    %v1597 = vadd.f32 %v1596, 0.5
    %v1598 = vld [vmem:[#allocation3] sm:$0xff]
    %v1599 = vmul.f32 %v1598, %v1588
    %v1600 = vmul.f32 %v1592, %v1593
    %v1601 = vadd.f32 %v1599, %v1600
    %v1602 = vtanh.pop %v1601
    %v1603 = vmul.f32 %v1597, %v1602
    %1604 = vst [vmem:[#allocation3] sm:$0xff] %v1601
    %v1605 = vpack.c.bf16 %v1603, %v1603
    %1606 = vst [vmem:[#allocation2] sm:$0xf] %v1605
    %s1607 = scalar_lea.vmem [#allocation12], 32
    %1608 = vst [vmem:[%s1607] sm:$0xff] %v1603
    %v1609 = vld [vmem:[#allocation2] sm:$0xf]
    %v1610 = vld [vmem:[#allocation10] sm:$0xff]
    %v1611 = vld [vmem:[#allocation10 + $0x8] sm:$0xff]
    %v1612 = vld [vmem:[#allocation10 + $0x10] sm:$0xff]
    %v1613 = vld [vmem:[#allocation10 + $0x18] sm:$0xff]
    %v1614 = vld [vmem:[#allocation10 + $0x20] sm:$0xff]
    %v1615 = vld [vmem:[#allocation10 + $0x28] sm:$0xff]
    %v1616 = vld [vmem:[#allocation10 + $0x30] sm:$0xff]
    %v1617 = vld [vmem:[#allocation10 + $0x38] sm:$0xff]
    %v1618 = vld [vmem:[#allocation10 + $0x40] sm:$0xff]
    %v1619 = vld [vmem:[#allocation10 + $0x48] sm:$0xff]
    %v1620 = vld [vmem:[#allocation10 + $0x50] sm:$0xff]
    %v1621 = vld [vmem:[#allocation10 + $0x58] sm:$0xff]
    %v1622 = vld [vmem:[#allocation10 + $0x60] sm:$0xff]
    %v1623 = vld [vmem:[#allocation10 + $0x68] sm:$0xff]
    %v1624 = vld [vmem:[#allocation10 + $0x70] sm:$0xff]
    %v1625 = vld [vmem:[#allocation10 + $0x78] sm:$0xff]
    %v1626 = vld [vmem:[#allocation10 + $0x80] sm:$0xff]
    %v1627 = vld [vmem:[#allocation10 + $0x88] sm:$0xff]
    %v1628 = vld [vmem:[#allocation10 + $0x90] sm:$0xff]
    %v1629 = vld [vmem:[#allocation10 + $0x98] sm:$0xff]
    %v1630 = vld [vmem:[#allocation10 + $0xa0] sm:$0xff]
    %v1631 = vld [vmem:[#allocation10 + $0xa8] sm:$0xff]
    %v1632 = vld [vmem:[#allocation10 + $0xb0] sm:$0xff]
    %v1633 = vld [vmem:[#allocation10 + $0xb8] sm:$0xff]
    %v1634 = vld [vmem:[#allocation10 + $0xc0] sm:$0xff]
    %v1635 = vld [vmem:[#allocation10 + $0xc8] sm:$0xff]
    %v1636 = vld [vmem:[#allocation10 + $0xd0] sm:$0xff]
    %v1637 = vld [vmem:[#allocation10 + $0xd8] sm:$0xff]
    %v1638 = vld [vmem:[#allocation10 + $0xe0] sm:$0xff]
    %v1639 = vld [vmem:[#allocation10 + $0xe8] sm:$0xff]
    %v1640 = vld [vmem:[#allocation10 + $0xf0] sm:$0xff]
    %v1641 = vld [vmem:[#allocation10 + $0xf8] sm:$0xff]
    %s1642 = scalar_lea.vmem [#allocation4], 80
    %v1643 = vld [vmem:[%s1642] sm:$0xff]
    %v1644 = vld [vmem:[%s1642 + $0x8] sm:$0xff]
    %v1645 = vunpack.c.l.bf16 %v1643
    %v1646 = vunpack.c.h.bf16 %v1643
    %v1647 = vunpack.c.l.bf16 %v1644
    %v1648 = vunpack.c.h.bf16 %v1644
    %v1681 = vunpack.c.l.b16 %v1610
    %v1682 = vunpack.c.h.b16 %v1610
    %v1683 = vunpack.c.l.b16 %v1611
    %v1684 = vunpack.c.h.b16 %v1611
    %v1685 = vunpack.c.l.b16 %v1612
    %v1686 = vunpack.c.h.b16 %v1612
    %v1687 = vunpack.c.l.b16 %v1613
    %v1688 = vunpack.c.h.b16 %v1613
    %v1689 = vunpack.c.l.b16 %v1614
    %v1690 = vunpack.c.h.b16 %v1614
    %v1691 = vunpack.c.l.b16 %v1615
    %v1692 = vunpack.c.h.b16 %v1615
    %v1693 = vunpack.c.l.b16 %v1616
    %v1694 = vunpack.c.h.b16 %v1616
    %v1695 = vunpack.c.l.b16 %v1617
    %v1696 = vunpack.c.h.b16 %v1617
    %v1697 = vunpack.c.l.b16 %v1618
    %v1698 = vunpack.c.h.b16 %v1618
    %v1699 = vunpack.c.l.b16 %v1619
    %v1700 = vunpack.c.h.b16 %v1619
    %v1701 = vunpack.c.l.b16 %v1620
    %v1702 = vunpack.c.h.b16 %v1620
    %v1703 = vunpack.c.l.b16 %v1621
    %v1704 = vunpack.c.h.b16 %v1621
    %v1705 = vunpack.c.l.b16 %v1622
    %v1706 = vunpack.c.h.b16 %v1622
    %v1707 = vunpack.c.l.b16 %v1623
    %v1708 = vunpack.c.h.b16 %v1623
    %v1709 = vunpack.c.l.b16 %v1624
    %v1710 = vunpack.c.h.b16 %v1624
    %v1711 = vunpack.c.l.b16 %v1625
    %v1712 = vunpack.c.h.b16 %v1625
    %v1713 = vunpack.c.l.b16 %v1626
    %v1714 = vunpack.c.h.b16 %v1626
    %v1715 = vunpack.c.l.b16 %v1627
    %v1716 = vunpack.c.h.b16 %v1627
    %v1717 = vunpack.c.l.b16 %v1628
    %v1718 = vunpack.c.h.b16 %v1628
    %v1719 = vunpack.c.l.b16 %v1629
    %v1720 = vunpack.c.h.b16 %v1629
    %v1721 = vunpack.c.l.b16 %v1630
    %v1722 = vunpack.c.h.b16 %v1630
    %v1723 = vunpack.c.l.b16 %v1631
    %v1724 = vunpack.c.h.b16 %v1631
    %v1725 = vunpack.c.l.b16 %v1632
    %v1726 = vunpack.c.h.b16 %v1632
    %v1727 = vunpack.c.l.b16 %v1633
    %v1728 = vunpack.c.h.b16 %v1633
    %v1729 = vunpack.c.l.b16 %v1634
    %v1730 = vunpack.c.h.b16 %v1634
    %v1731 = vunpack.c.l.b16 %v1635
    %v1732 = vunpack.c.h.b16 %v1635
    %v1733 = vunpack.c.l.b16 %v1636
    %v1734 = vunpack.c.h.b16 %v1636
    %v1735 = vunpack.c.l.b16 %v1637
    %v1736 = vunpack.c.h.b16 %v1637
    %v1737 = vunpack.c.l.b16 %v1638
    %v1738 = vunpack.c.h.b16 %v1638
    %v1739 = vunpack.c.l.b16 %v1639
    %v1740 = vunpack.c.h.b16 %v1639
    %v1741 = vunpack.c.l.b16 %v1640
    %v1742 = vunpack.c.h.b16 %v1640
    %v1743 = vunpack.c.l.b16 %v1641
    %v1744 = vunpack.c.h.b16 %v1641
    %v1745 = vpack.c.b16 %v1685, %v1681
    %v1746 = vpack.c.b16 %v1686, %v1682
    %v1747 = vpack.c.b16 %v1687, %v1683
    %v1748 = vpack.c.b16 %v1688, %v1684
    %v1749 = vpack.c.b16 %v1693, %v1689
    %v1750 = vpack.c.b16 %v1694, %v1690
    %v1751 = vpack.c.b16 %v1695, %v1691
    %v1752 = vpack.c.b16 %v1696, %v1692
    %v1753 = vpack.c.b16 %v1701, %v1697
    %v1754 = vpack.c.b16 %v1702, %v1698
    %v1755 = vpack.c.b16 %v1703, %v1699
    %v1756 = vpack.c.b16 %v1704, %v1700
    %v1757 = vpack.c.b16 %v1709, %v1705
    %v1758 = vpack.c.b16 %v1710, %v1706
    %v1759 = vpack.c.b16 %v1711, %v1707
    %v1760 = vpack.c.b16 %v1712, %v1708
    %v1761 = vpack.c.b16 %v1717, %v1713
    %v1762 = vpack.c.b16 %v1718, %v1714
    %v1763 = vpack.c.b16 %v1719, %v1715
    %v1764 = vpack.c.b16 %v1720, %v1716
    %v1765 = vpack.c.b16 %v1725, %v1721
    %v1766 = vpack.c.b16 %v1726, %v1722
    %v1767 = vpack.c.b16 %v1727, %v1723
    %v1768 = vpack.c.b16 %v1728, %v1724
    %v1769 = vpack.c.b16 %v1733, %v1729
    %v1770 = vpack.c.b16 %v1734, %v1730
    %v1771 = vpack.c.b16 %v1735, %v1731
    %v1772 = vpack.c.b16 %v1736, %v1732
    %v1773 = vpack.c.b16 %v1741, %v1737
    %v1774 = vpack.c.b16 %v1742, %v1738
    %v1775 = vpack.c.b16 %v1743, %v1739
    %v1776 = vpack.c.b16 %v1744, %v1740
    %1809 = vmatprep.subr.bf16.mxu0 %v1774
    %1810 = vmatpush1.bf16.msra.mxu0 %v1773
    %1811 = vmatprep.subr.bf16.mxu0 %v1770
    %1812 = vmatpush1.bf16.msra.mxu0 %v1769
    %1813 = vmatprep.subr.bf16.mxu0 %v1766
    %1814 = vmatpush1.bf16.msra.mxu0 %v1765
    %1815 = vmatprep.subr.bf16.mxu0 %v1762
    %1816 = vmatpush1.bf16.msra.mxu0 %v1761
    %1817 = vmatprep.subr.bf16.mxu0 %v1758
    %1818 = vmatpush1.bf16.msra.mxu0 %v1757
    %1819 = vmatprep.subr.bf16.mxu0 %v1754
    %1820 = vmatpush1.bf16.msra.mxu0 %v1753
    %1821 = vmatprep.subr.bf16.mxu0 %v1750
    %1822 = vmatpush1.bf16.msra.mxu0 %v1749
    %1823 = vmatprep.subr.bf16.mxu0 %v1746
    %1824 = vmatpush1.bf16.msra.mxu0 %v1745
    %1825 = vmatprep.subr.bf16.mxu0 0
    %1826 = vmatpush2.bf16.msra.mxu0 0
    %1827 = vmatprep.subr.bf16.mxu0 0
    %1828 = vmatpush2.bf16.msra.mxu0 0
    %1829 = vmatprep.subr.bf16.mxu0 0
    %1830 = vmatpush2.bf16.msra.mxu0 0
    %1831 = vmatprep.subr.bf16.mxu0 0
    %1832 = vmatpush2.bf16.msra.mxu0 0
    %1833 = vmatprep.subr.bf16.mxu0 0
    %1834 = vmatpush2.bf16.msra.mxu0 0
    %1835 = vmatprep.subr.bf16.mxu0 0
    %1836 = vmatpush2.bf16.msra.mxu0 0
    %1837 = vmatprep.subr.bf16.mxu0 0
    %1838 = vmatpush2.bf16.msra.mxu0 0
    %1839 = vmatprep.subr.bf16.mxu0 0
    %1840 = vmatpush2.bf16.msra.mxu0 0
    %1841 = vmatprep.mubr.bf16.mxu0 0
    %1842 = vmatmul.mubr.bf16.gmra.mxu0 %v1609
    %v1843 = vpop.f32.mrf.mxu0
    %v1844 = vadd.f32 %v1645, %v1843
    %v1845 = vpop.f32.mrf.mxu0
    %v1846 = vadd.f32 %v1646, %v1845
    %v1847 = vpop.f32.mrf.mxu0
    %v1848 = vpop.f32.mrf.mxu0
    %1849 = vdwg.mxu0
    %1850 = vmatprep.subr.bf16.mxu0 %v1776
    %1851 = vmatpush1.bf16.msra.mxu0 %v1775
    %1852 = vmatprep.subr.bf16.mxu0 %v1772
    %1853 = vmatpush1.bf16.msra.mxu0 %v1771
    %1854 = vmatprep.subr.bf16.mxu0 %v1768
    %1855 = vmatpush1.bf16.msra.mxu0 %v1767
    %1856 = vmatprep.subr.bf16.mxu0 %v1764
    %1857 = vmatpush1.bf16.msra.mxu0 %v1763
    %1858 = vmatprep.subr.bf16.mxu0 %v1760
    %1859 = vmatpush1.bf16.msra.mxu0 %v1759
    %1860 = vmatprep.subr.bf16.mxu0 %v1756
    %1861 = vmatpush1.bf16.msra.mxu0 %v1755
    %1862 = vmatprep.subr.bf16.mxu0 %v1752
    %1863 = vmatpush1.bf16.msra.mxu0 %v1751
    %1864 = vmatprep.subr.bf16.mxu0 %v1748
    %1865 = vmatpush1.bf16.msra.mxu0 %v1747
    %1866 = vmatprep.subr.bf16.mxu0 0
    %1867 = vmatpush2.bf16.msra.mxu0 0
    %1868 = vmatprep.subr.bf16.mxu0 0
    %1869 = vmatpush2.bf16.msra.mxu0 0
    %1870 = vmatprep.subr.bf16.mxu0 0
    %1871 = vmatpush2.bf16.msra.mxu0 0
    %1872 = vmatprep.subr.bf16.mxu0 0
    %1873 = vmatpush2.bf16.msra.mxu0 0
    %1874 = vmatprep.subr.bf16.mxu0 0
    %1875 = vmatpush2.bf16.msra.mxu0 0
    %1876 = vmatprep.subr.bf16.mxu0 0
    %1877 = vmatpush2.bf16.msra.mxu0 0
    %1878 = vmatprep.subr.bf16.mxu0 0
    %1879 = vmatpush2.bf16.msra.mxu0 0
    %1880 = vmatprep.subr.bf16.mxu0 0
    %1881 = vmatpush2.bf16.msra.mxu0 0
    %1882 = vmatprep.mubr.bf16.mxu0 0
    %1883 = vmatmul.mubr.bf16.gmra.mxu0 %v1609
    %v1884 = vpop.f32.mrf.mxu0
    %v1885 = vadd.f32 %v1647, %v1884
    %v1886 = vpop.f32.mrf.mxu0
    %v1887 = vadd.f32 %v1648, %v1886
    %v1888 = vpop.f32.mrf.mxu0
    %v1889 = vpop.f32.mrf.mxu0
    %1890 = vdwg.mxu0
    %v1891 = vmul.f32 %v1844, 0.5
    %v1892 = vtanh.pop %v1891
    %v1893 = vmul.f32 %v1892, 0.5
    %v1894 = vadd.f32 %v1893, 0.5
    %v1895 = vmul.f32 %v1846, 0.5
    %v1896 = vtanh.pop %v1895
    %v1897 = vmul.f32 %v1896, 0.5
    %v1898 = vadd.f32 %v1897, 0.5
    %v1899 = vtanh.pop %v1885
    %v1900 = vmul.f32 %v1887, 0.5
    %v1901 = vtanh.pop %v1900
    %v1902 = vmul.f32 %v1901, 0.5
    %v1903 = vadd.f32 %v1902, 0.5
    %v1904 = vld [vmem:[#allocation3] sm:$0xff]
    %v1905 = vmul.f32 %v1904, %v1894
    %v1906 = vmul.f32 %v1898, %v1899
    %v1907 = vadd.f32 %v1905, %v1906
    %v1908 = vtanh.pop %v1907
    %v1909 = vmul.f32 %v1903, %v1908
    %1910 = vst [vmem:[#allocation3] sm:$0xff] %v1907
    %v1911 = vpack.c.bf16 %v1909, %v1909
    %1912 = vst [vmem:[#allocation2] sm:$0xf] %v1911
    %s1913 = scalar_lea.vmem [#allocation12], 40
    %1914 = vst [vmem:[%s1913] sm:$0xff] %v1909
    %v1915 = vld [vmem:[#allocation2] sm:$0xf]
    %v1916 = vld [vmem:[#allocation10] sm:$0xff]
    %v1917 = vld [vmem:[#allocation10 + $0x8] sm:$0xff]
    %v1918 = vld [vmem:[#allocation10 + $0x10] sm:$0xff]
    %v1919 = vld [vmem:[#allocation10 + $0x18] sm:$0xff]
    %v1920 = vld [vmem:[#allocation10 + $0x20] sm:$0xff]
    %v1921 = vld [vmem:[#allocation10 + $0x28] sm:$0xff]
    %v1922 = vld [vmem:[#allocation10 + $0x30] sm:$0xff]
    %v1923 = vld [vmem:[#allocation10 + $0x38] sm:$0xff]
    %v1924 = vld [vmem:[#allocation10 + $0x40] sm:$0xff]
    %v1925 = vld [vmem:[#allocation10 + $0x48] sm:$0xff]
    %v1926 = vld [vmem:[#allocation10 + $0x50] sm:$0xff]
    %v1927 = vld [vmem:[#allocation10 + $0x58] sm:$0xff]
    %v1928 = vld [vmem:[#allocation10 + $0x60] sm:$0xff]
    %v1929 = vld [vmem:[#allocation10 + $0x68] sm:$0xff]
    %v1930 = vld [vmem:[#allocation10 + $0x70] sm:$0xff]
    %v1931 = vld [vmem:[#allocation10 + $0x78] sm:$0xff]
    %v1932 = vld [vmem:[#allocation10 + $0x80] sm:$0xff]
    %v1933 = vld [vmem:[#allocation10 + $0x88] sm:$0xff]
    %v1934 = vld [vmem:[#allocation10 + $0x90] sm:$0xff]
    %v1935 = vld [vmem:[#allocation10 + $0x98] sm:$0xff]
    %v1936 = vld [vmem:[#allocation10 + $0xa0] sm:$0xff]
    %v1937 = vld [vmem:[#allocation10 + $0xa8] sm:$0xff]
    %v1938 = vld [vmem:[#allocation10 + $0xb0] sm:$0xff]
    %v1939 = vld [vmem:[#allocation10 + $0xb8] sm:$0xff]
    %v1940 = vld [vmem:[#allocation10 + $0xc0] sm:$0xff]
    %v1941 = vld [vmem:[#allocation10 + $0xc8] sm:$0xff]
    %v1942 = vld [vmem:[#allocation10 + $0xd0] sm:$0xff]
    %v1943 = vld [vmem:[#allocation10 + $0xd8] sm:$0xff]
    %v1944 = vld [vmem:[#allocation10 + $0xe0] sm:$0xff]
    %v1945 = vld [vmem:[#allocation10 + $0xe8] sm:$0xff]
    %v1946 = vld [vmem:[#allocation10 + $0xf0] sm:$0xff]
    %v1947 = vld [vmem:[#allocation10 + $0xf8] sm:$0xff]
    %s1948 = scalar_lea.vmem [#allocation4], 96
    %v1949 = vld [vmem:[%s1948] sm:$0xff]
    %v1950 = vld [vmem:[%s1948 + $0x8] sm:$0xff]
    %v1951 = vunpack.c.l.bf16 %v1949
    %v1952 = vunpack.c.h.bf16 %v1949
    %v1953 = vunpack.c.l.bf16 %v1950
    %v1954 = vunpack.c.h.bf16 %v1950
    %v1987 = vunpack.c.l.b16 %v1916
    %v1988 = vunpack.c.h.b16 %v1916
    %v1989 = vunpack.c.l.b16 %v1917
    %v1990 = vunpack.c.h.b16 %v1917
    %v1991 = vunpack.c.l.b16 %v1918
    %v1992 = vunpack.c.h.b16 %v1918
    %v1993 = vunpack.c.l.b16 %v1919
    %v1994 = vunpack.c.h.b16 %v1919
    %v1995 = vunpack.c.l.b16 %v1920
    %v1996 = vunpack.c.h.b16 %v1920
    %v1997 = vunpack.c.l.b16 %v1921
    %v1998 = vunpack.c.h.b16 %v1921
    %v1999 = vunpack.c.l.b16 %v1922
    %v2000 = vunpack.c.h.b16 %v1922
    %v2001 = vunpack.c.l.b16 %v1923
    %v2002 = vunpack.c.h.b16 %v1923
    %v2003 = vunpack.c.l.b16 %v1924
    %v2004 = vunpack.c.h.b16 %v1924
    %v2005 = vunpack.c.l.b16 %v1925
    %v2006 = vunpack.c.h.b16 %v1925
    %v2007 = vunpack.c.l.b16 %v1926
    %v2008 = vunpack.c.h.b16 %v1926
    %v2009 = vunpack.c.l.b16 %v1927
    %v2010 = vunpack.c.h.b16 %v1927
    %v2011 = vunpack.c.l.b16 %v1928
    %v2012 = vunpack.c.h.b16 %v1928
    %v2013 = vunpack.c.l.b16 %v1929
    %v2014 = vunpack.c.h.b16 %v1929
    %v2015 = vunpack.c.l.b16 %v1930
    %v2016 = vunpack.c.h.b16 %v1930
    %v2017 = vunpack.c.l.b16 %v1931
    %v2018 = vunpack.c.h.b16 %v1931
    %v2019 = vunpack.c.l.b16 %v1932
    %v2020 = vunpack.c.h.b16 %v1932
    %v2021 = vunpack.c.l.b16 %v1933
    %v2022 = vunpack.c.h.b16 %v1933
    %v2023 = vunpack.c.l.b16 %v1934
    %v2024 = vunpack.c.h.b16 %v1934
    %v2025 = vunpack.c.l.b16 %v1935
    %v2026 = vunpack.c.h.b16 %v1935
    %v2027 = vunpack.c.l.b16 %v1936
    %v2028 = vunpack.c.h.b16 %v1936
    %v2029 = vunpack.c.l.b16 %v1937
    %v2030 = vunpack.c.h.b16 %v1937
    %v2031 = vunpack.c.l.b16 %v1938
    %v2032 = vunpack.c.h.b16 %v1938
    %v2033 = vunpack.c.l.b16 %v1939
    %v2034 = vunpack.c.h.b16 %v1939
    %v2035 = vunpack.c.l.b16 %v1940
    %v2036 = vunpack.c.h.b16 %v1940
    %v2037 = vunpack.c.l.b16 %v1941
    %v2038 = vunpack.c.h.b16 %v1941
    %v2039 = vunpack.c.l.b16 %v1942
    %v2040 = vunpack.c.h.b16 %v1942
    %v2041 = vunpack.c.l.b16 %v1943
    %v2042 = vunpack.c.h.b16 %v1943
    %v2043 = vunpack.c.l.b16 %v1944
    %v2044 = vunpack.c.h.b16 %v1944
    %v2045 = vunpack.c.l.b16 %v1945
    %v2046 = vunpack.c.h.b16 %v1945
    %v2047 = vunpack.c.l.b16 %v1946
    %v2048 = vunpack.c.h.b16 %v1946
    %v2049 = vunpack.c.l.b16 %v1947
    %v2050 = vunpack.c.h.b16 %v1947
    %v2051 = vpack.c.b16 %v1991, %v1987
    %v2052 = vpack.c.b16 %v1992, %v1988
    %v2053 = vpack.c.b16 %v1993, %v1989
    %v2054 = vpack.c.b16 %v1994, %v1990
    %v2055 = vpack.c.b16 %v1999, %v1995
    %v2056 = vpack.c.b16 %v2000, %v1996
    %v2057 = vpack.c.b16 %v2001, %v1997
    %v2058 = vpack.c.b16 %v2002, %v1998
    %v2059 = vpack.c.b16 %v2007, %v2003
    %v2060 = vpack.c.b16 %v2008, %v2004
    %v2061 = vpack.c.b16 %v2009, %v2005
    %v2062 = vpack.c.b16 %v2010, %v2006
    %v2063 = vpack.c.b16 %v2015, %v2011
    %v2064 = vpack.c.b16 %v2016, %v2012
    %v2065 = vpack.c.b16 %v2017, %v2013
    %v2066 = vpack.c.b16 %v2018, %v2014
    %v2067 = vpack.c.b16 %v2023, %v2019
    %v2068 = vpack.c.b16 %v2024, %v2020
    %v2069 = vpack.c.b16 %v2025, %v2021
    %v2070 = vpack.c.b16 %v2026, %v2022
    %v2071 = vpack.c.b16 %v2031, %v2027
    %v2072 = vpack.c.b16 %v2032, %v2028
    %v2073 = vpack.c.b16 %v2033, %v2029
    %v2074 = vpack.c.b16 %v2034, %v2030
    %v2075 = vpack.c.b16 %v2039, %v2035
    %v2076 = vpack.c.b16 %v2040, %v2036
    %v2077 = vpack.c.b16 %v2041, %v2037
    %v2078 = vpack.c.b16 %v2042, %v2038
    %v2079 = vpack.c.b16 %v2047, %v2043
    %v2080 = vpack.c.b16 %v2048, %v2044
    %v2081 = vpack.c.b16 %v2049, %v2045
    %v2082 = vpack.c.b16 %v2050, %v2046
    %2115 = vmatprep.subr.bf16.mxu0 %v2080
    %2116 = vmatpush1.bf16.msra.mxu0 %v2079
    %2117 = vmatprep.subr.bf16.mxu0 %v2076
    %2118 = vmatpush1.bf16.msra.mxu0 %v2075
    %2119 = vmatprep.subr.bf16.mxu0 %v2072
    %2120 = vmatpush1.bf16.msra.mxu0 %v2071
    %2121 = vmatprep.subr.bf16.mxu0 %v2068
    %2122 = vmatpush1.bf16.msra.mxu0 %v2067
    %2123 = vmatprep.subr.bf16.mxu0 %v2064
    %2124 = vmatpush1.bf16.msra.mxu0 %v2063
    %2125 = vmatprep.subr.bf16.mxu0 %v2060
    %2126 = vmatpush1.bf16.msra.mxu0 %v2059
    %2127 = vmatprep.subr.bf16.mxu0 %v2056
    %2128 = vmatpush1.bf16.msra.mxu0 %v2055
    %2129 = vmatprep.subr.bf16.mxu0 %v2052
    %2130 = vmatpush1.bf16.msra.mxu0 %v2051
    %2131 = vmatprep.subr.bf16.mxu0 0
    %2132 = vmatpush2.bf16.msra.mxu0 0
    %2133 = vmatprep.subr.bf16.mxu0 0
    %2134 = vmatpush2.bf16.msra.mxu0 0
    %2135 = vmatprep.subr.bf16.mxu0 0
    %2136 = vmatpush2.bf16.msra.mxu0 0
    %2137 = vmatprep.subr.bf16.mxu0 0
    %2138 = vmatpush2.bf16.msra.mxu0 0
    %2139 = vmatprep.subr.bf16.mxu0 0
    %2140 = vmatpush2.bf16.msra.mxu0 0
    %2141 = vmatprep.subr.bf16.mxu0 0
    %2142 = vmatpush2.bf16.msra.mxu0 0
    %2143 = vmatprep.subr.bf16.mxu0 0
    %2144 = vmatpush2.bf16.msra.mxu0 0
    %2145 = vmatprep.subr.bf16.mxu0 0
    %2146 = vmatpush2.bf16.msra.mxu0 0
    %2147 = vmatprep.mubr.bf16.mxu0 0
    %2148 = vmatmul.mubr.bf16.gmra.mxu0 %v1915
    %v2149 = vpop.f32.mrf.mxu0
    %v2150 = vadd.f32 %v1951, %v2149
    %v2151 = vpop.f32.mrf.mxu0
    %v2152 = vadd.f32 %v1952, %v2151
    %v2153 = vpop.f32.mrf.mxu0
    %v2154 = vpop.f32.mrf.mxu0
    %2155 = vdwg.mxu0
    %2156 = vmatprep.subr.bf16.mxu0 %v2082
    %2157 = vmatpush1.bf16.msra.mxu0 %v2081
    %2158 = vmatprep.subr.bf16.mxu0 %v2078
    %2159 = vmatpush1.bf16.msra.mxu0 %v2077
    %2160 = vmatprep.subr.bf16.mxu0 %v2074
    %2161 = vmatpush1.bf16.msra.mxu0 %v2073
    %2162 = vmatprep.subr.bf16.mxu0 %v2070
    %2163 = vmatpush1.bf16.msra.mxu0 %v2069
    %2164 = vmatprep.subr.bf16.mxu0 %v2066
    %2165 = vmatpush1.bf16.msra.mxu0 %v2065
    %2166 = vmatprep.subr.bf16.mxu0 %v2062
    %2167 = vmatpush1.bf16.msra.mxu0 %v2061
    %2168 = vmatprep.subr.bf16.mxu0 %v2058
    %2169 = vmatpush1.bf16.msra.mxu0 %v2057
    %2170 = vmatprep.subr.bf16.mxu0 %v2054
    %2171 = vmatpush1.bf16.msra.mxu0 %v2053
    %2172 = vmatprep.subr.bf16.mxu0 0
    %2173 = vmatpush2.bf16.msra.mxu0 0
    %2174 = vmatprep.subr.bf16.mxu0 0
    %2175 = vmatpush2.bf16.msra.mxu0 0
    %2176 = vmatprep.subr.bf16.mxu0 0
    %2177 = vmatpush2.bf16.msra.mxu0 0
    %2178 = vmatprep.subr.bf16.mxu0 0
    %2179 = vmatpush2.bf16.msra.mxu0 0
    %2180 = vmatprep.subr.bf16.mxu0 0
    %2181 = vmatpush2.bf16.msra.mxu0 0
    %2182 = vmatprep.subr.bf16.mxu0 0
    %2183 = vmatpush2.bf16.msra.mxu0 0
    %2184 = vmatprep.subr.bf16.mxu0 0
    %2185 = vmatpush2.bf16.msra.mxu0 0
    %2186 = vmatprep.subr.bf16.mxu0 0
    %2187 = vmatpush2.bf16.msra.mxu0 0
    %2188 = vmatprep.mubr.bf16.mxu0 0
    %2189 = vmatmul.mubr.bf16.gmra.mxu0 %v1915
    %v2190 = vpop.f32.mrf.mxu0
    %v2191 = vadd.f32 %v1953, %v2190
    %v2192 = vpop.f32.mrf.mxu0
    %v2193 = vadd.f32 %v1954, %v2192
    %v2194 = vpop.f32.mrf.mxu0
    %v2195 = vpop.f32.mrf.mxu0
    %2196 = vdwg.mxu0
    %v2197 = vmul.f32 %v2150, 0.5
    %v2198 = vtanh.pop %v2197
    %v2199 = vmul.f32 %v2198, 0.5
    %v2200 = vadd.f32 %v2199, 0.5
    %v2201 = vmul.f32 %v2152, 0.5
    %v2202 = vtanh.pop %v2201
    %v2203 = vmul.f32 %v2202, 0.5
    %v2204 = vadd.f32 %v2203, 0.5
    %v2205 = vtanh.pop %v2191
    %v2206 = vmul.f32 %v2193, 0.5
    %v2207 = vtanh.pop %v2206
    %v2208 = vmul.f32 %v2207, 0.5
    %v2209 = vadd.f32 %v2208, 0.5
    %v2210 = vld [vmem:[#allocation3] sm:$0xff]
    %v2211 = vmul.f32 %v2210, %v2200
    %v2212 = vmul.f32 %v2204, %v2205
    %v2213 = vadd.f32 %v2211, %v2212
    %v2214 = vtanh.pop %v2213
    %v2215 = vmul.f32 %v2209, %v2214
    %2216 = vst [vmem:[#allocation3] sm:$0xff] %v2213
    %v2217 = vpack.c.bf16 %v2215, %v2215
    %2218 = vst [vmem:[#allocation2] sm:$0xf] %v2217
    %s2219 = scalar_lea.vmem [#allocation12], 48
    %2220 = vst [vmem:[%s2219] sm:$0xff] %v2215
    %v2221 = vld [vmem:[#allocation2] sm:$0xf]
    %v2222 = vld [vmem:[#allocation10] sm:$0xff]
    %v2223 = vld [vmem:[#allocation10 + $0x8] sm:$0xff]
    %v2224 = vld [vmem:[#allocation10 + $0x10] sm:$0xff]
    %v2225 = vld [vmem:[#allocation10 + $0x18] sm:$0xff]
    %v2226 = vld [vmem:[#allocation10 + $0x20] sm:$0xff]
    %v2227 = vld [vmem:[#allocation10 + $0x28] sm:$0xff]
    %v2228 = vld [vmem:[#allocation10 + $0x30] sm:$0xff]
    %v2229 = vld [vmem:[#allocation10 + $0x38] sm:$0xff]
    %v2230 = vld [vmem:[#allocation10 + $0x40] sm:$0xff]
    %v2231 = vld [vmem:[#allocation10 + $0x48] sm:$0xff]
    %v2232 = vld [vmem:[#allocation10 + $0x50] sm:$0xff]
    %v2233 = vld [vmem:[#allocation10 + $0x58] sm:$0xff]
    %v2234 = vld [vmem:[#allocation10 + $0x60] sm:$0xff]
    %v2235 = vld [vmem:[#allocation10 + $0x68] sm:$0xff]
    %v2236 = vld [vmem:[#allocation10 + $0x70] sm:$0xff]
    %v2237 = vld [vmem:[#allocation10 + $0x78] sm:$0xff]
    %v2238 = vld [vmem:[#allocation10 + $0x80] sm:$0xff]
    %v2239 = vld [vmem:[#allocation10 + $0x88] sm:$0xff]
    %v2240 = vld [vmem:[#allocation10 + $0x90] sm:$0xff]
    %v2241 = vld [vmem:[#allocation10 + $0x98] sm:$0xff]
    %v2242 = vld [vmem:[#allocation10 + $0xa0] sm:$0xff]
    %v2243 = vld [vmem:[#allocation10 + $0xa8] sm:$0xff]
    %v2244 = vld [vmem:[#allocation10 + $0xb0] sm:$0xff]
    %v2245 = vld [vmem:[#allocation10 + $0xb8] sm:$0xff]
    %v2246 = vld [vmem:[#allocation10 + $0xc0] sm:$0xff]
    %v2247 = vld [vmem:[#allocation10 + $0xc8] sm:$0xff]
    %v2248 = vld [vmem:[#allocation10 + $0xd0] sm:$0xff]
    %v2249 = vld [vmem:[#allocation10 + $0xd8] sm:$0xff]
    %v2250 = vld [vmem:[#allocation10 + $0xe0] sm:$0xff]
    %v2251 = vld [vmem:[#allocation10 + $0xe8] sm:$0xff]
    %v2252 = vld [vmem:[#allocation10 + $0xf0] sm:$0xff]
    %v2253 = vld [vmem:[#allocation10 + $0xf8] sm:$0xff]
    %s2254 = scalar_lea.vmem [#allocation4], 112
    %v2255 = vld [vmem:[%s2254] sm:$0xff]
    %v2256 = vld [vmem:[%s2254 + $0x8] sm:$0xff]
    %v2257 = vunpack.c.l.bf16 %v2255
    %v2258 = vunpack.c.h.bf16 %v2255
    %v2259 = vunpack.c.l.bf16 %v2256
    %v2260 = vunpack.c.h.bf16 %v2256
    %v2293 = vunpack.c.l.b16 %v2222
    %v2294 = vunpack.c.h.b16 %v2222
    %v2295 = vunpack.c.l.b16 %v2223
    %v2296 = vunpack.c.h.b16 %v2223
    %v2297 = vunpack.c.l.b16 %v2224
    %v2298 = vunpack.c.h.b16 %v2224
    %v2299 = vunpack.c.l.b16 %v2225
    %v2300 = vunpack.c.h.b16 %v2225
    %v2301 = vunpack.c.l.b16 %v2226
    %v2302 = vunpack.c.h.b16 %v2226
    %v2303 = vunpack.c.l.b16 %v2227
    %v2304 = vunpack.c.h.b16 %v2227
    %v2305 = vunpack.c.l.b16 %v2228
    %v2306 = vunpack.c.h.b16 %v2228
    %v2307 = vunpack.c.l.b16 %v2229
    %v2308 = vunpack.c.h.b16 %v2229
    %v2309 = vunpack.c.l.b16 %v2230
    %v2310 = vunpack.c.h.b16 %v2230
    %v2311 = vunpack.c.l.b16 %v2231
    %v2312 = vunpack.c.h.b16 %v2231
    %v2313 = vunpack.c.l.b16 %v2232
    %v2314 = vunpack.c.h.b16 %v2232
    %v2315 = vunpack.c.l.b16 %v2233
    %v2316 = vunpack.c.h.b16 %v2233
    %v2317 = vunpack.c.l.b16 %v2234
    %v2318 = vunpack.c.h.b16 %v2234
    %v2319 = vunpack.c.l.b16 %v2235
    %v2320 = vunpack.c.h.b16 %v2235
    %v2321 = vunpack.c.l.b16 %v2236
    %v2322 = vunpack.c.h.b16 %v2236
    %v2323 = vunpack.c.l.b16 %v2237
    %v2324 = vunpack.c.h.b16 %v2237
    %v2325 = vunpack.c.l.b16 %v2238
    %v2326 = vunpack.c.h.b16 %v2238
    %v2327 = vunpack.c.l.b16 %v2239
    %v2328 = vunpack.c.h.b16 %v2239
    %v2329 = vunpack.c.l.b16 %v2240
    %v2330 = vunpack.c.h.b16 %v2240
    %v2331 = vunpack.c.l.b16 %v2241
    %v2332 = vunpack.c.h.b16 %v2241
    %v2333 = vunpack.c.l.b16 %v2242
    %v2334 = vunpack.c.h.b16 %v2242
    %v2335 = vunpack.c.l.b16 %v2243
    %v2336 = vunpack.c.h.b16 %v2243
    %v2337 = vunpack.c.l.b16 %v2244
    %v2338 = vunpack.c.h.b16 %v2244
    %v2339 = vunpack.c.l.b16 %v2245
    %v2340 = vunpack.c.h.b16 %v2245
    %v2341 = vunpack.c.l.b16 %v2246
    %v2342 = vunpack.c.h.b16 %v2246
    %v2343 = vunpack.c.l.b16 %v2247
    %v2344 = vunpack.c.h.b16 %v2247
    %v2345 = vunpack.c.l.b16 %v2248
    %v2346 = vunpack.c.h.b16 %v2248
    %v2347 = vunpack.c.l.b16 %v2249
    %v2348 = vunpack.c.h.b16 %v2249
    %v2349 = vunpack.c.l.b16 %v2250
    %v2350 = vunpack.c.h.b16 %v2250
    %v2351 = vunpack.c.l.b16 %v2251
    %v2352 = vunpack.c.h.b16 %v2251
    %v2353 = vunpack.c.l.b16 %v2252
    %v2354 = vunpack.c.h.b16 %v2252
    %v2355 = vunpack.c.l.b16 %v2253
    %v2356 = vunpack.c.h.b16 %v2253
    %v2357 = vpack.c.b16 %v2297, %v2293
    %v2358 = vpack.c.b16 %v2298, %v2294
    %v2359 = vpack.c.b16 %v2299, %v2295
    %v2360 = vpack.c.b16 %v2300, %v2296
    %v2361 = vpack.c.b16 %v2305, %v2301
    %v2362 = vpack.c.b16 %v2306, %v2302
    %v2363 = vpack.c.b16 %v2307, %v2303
    %v2364 = vpack.c.b16 %v2308, %v2304
    %v2365 = vpack.c.b16 %v2313, %v2309
    %v2366 = vpack.c.b16 %v2314, %v2310
    %v2367 = vpack.c.b16 %v2315, %v2311
    %v2368 = vpack.c.b16 %v2316, %v2312
    %v2369 = vpack.c.b16 %v2321, %v2317
    %v2370 = vpack.c.b16 %v2322, %v2318
    %v2371 = vpack.c.b16 %v2323, %v2319
    %v2372 = vpack.c.b16 %v2324, %v2320
    %v2373 = vpack.c.b16 %v2329, %v2325
    %v2374 = vpack.c.b16 %v2330, %v2326
    %v2375 = vpack.c.b16 %v2331, %v2327
    %v2376 = vpack.c.b16 %v2332, %v2328
    %v2377 = vpack.c.b16 %v2337, %v2333
    %v2378 = vpack.c.b16 %v2338, %v2334
    %v2379 = vpack.c.b16 %v2339, %v2335
    %v2380 = vpack.c.b16 %v2340, %v2336
    %v2381 = vpack.c.b16 %v2345, %v2341
    %v2382 = vpack.c.b16 %v2346, %v2342
    %v2383 = vpack.c.b16 %v2347, %v2343
    %v2384 = vpack.c.b16 %v2348, %v2344
    %v2385 = vpack.c.b16 %v2353, %v2349
    %v2386 = vpack.c.b16 %v2354, %v2350
    %v2387 = vpack.c.b16 %v2355, %v2351
    %v2388 = vpack.c.b16 %v2356, %v2352
    %2421 = vmatprep.subr.bf16.mxu0 %v2386
    %2422 = vmatpush1.bf16.msra.mxu0 %v2385
    %2423 = vmatprep.subr.bf16.mxu0 %v2382
    %2424 = vmatpush1.bf16.msra.mxu0 %v2381
    %2425 = vmatprep.subr.bf16.mxu0 %v2378
    %2426 = vmatpush1.bf16.msra.mxu0 %v2377
    %2427 = vmatprep.subr.bf16.mxu0 %v2374
    %2428 = vmatpush1.bf16.msra.mxu0 %v2373
    %2429 = vmatprep.subr.bf16.mxu0 %v2370
    %2430 = vmatpush1.bf16.msra.mxu0 %v2369
    %2431 = vmatprep.subr.bf16.mxu0 %v2366
    %2432 = vmatpush1.bf16.msra.mxu0 %v2365
    %2433 = vmatprep.subr.bf16.mxu0 %v2362
    %2434 = vmatpush1.bf16.msra.mxu0 %v2361
    %2435 = vmatprep.subr.bf16.mxu0 %v2358
    %2436 = vmatpush1.bf16.msra.mxu0 %v2357
    %2437 = vmatprep.subr.bf16.mxu0 0
    %2438 = vmatpush2.bf16.msra.mxu0 0
    %2439 = vmatprep.subr.bf16.mxu0 0
    %2440 = vmatpush2.bf16.msra.mxu0 0
    %2441 = vmatprep.subr.bf16.mxu0 0
    %2442 = vmatpush2.bf16.msra.mxu0 0
    %2443 = vmatprep.subr.bf16.mxu0 0
    %2444 = vmatpush2.bf16.msra.mxu0 0
    %2445 = vmatprep.subr.bf16.mxu0 0
    %2446 = vmatpush2.bf16.msra.mxu0 0
    %2447 = vmatprep.subr.bf16.mxu0 0
    %2448 = vmatpush2.bf16.msra.mxu0 0
    %2449 = vmatprep.subr.bf16.mxu0 0
    %2450 = vmatpush2.bf16.msra.mxu0 0
    %2451 = vmatprep.subr.bf16.mxu0 0
    %2452 = vmatpush2.bf16.msra.mxu0 0
    %2453 = vmatprep.mubr.bf16.mxu0 0
    %2454 = vmatmul.mubr.bf16.gmra.mxu0 %v2221
    %v2455 = vpop.f32.mrf.mxu0
    %v2456 = vadd.f32 %v2257, %v2455
    %v2457 = vpop.f32.mrf.mxu0
    %v2458 = vadd.f32 %v2258, %v2457
    %v2459 = vpop.f32.mrf.mxu0
    %v2460 = vpop.f32.mrf.mxu0
    %2461 = vdwg.mxu0
    %2462 = vmatprep.subr.bf16.mxu0 %v2388
    %2463 = vmatpush1.bf16.msra.mxu0 %v2387
    %2464 = vmatprep.subr.bf16.mxu0 %v2384
    %2465 = vmatpush1.bf16.msra.mxu0 %v2383
    %2466 = vmatprep.subr.bf16.mxu0 %v2380
    %2467 = vmatpush1.bf16.msra.mxu0 %v2379
    %2468 = vmatprep.subr.bf16.mxu0 %v2376
    %2469 = vmatpush1.bf16.msra.mxu0 %v2375
    %2470 = vmatprep.subr.bf16.mxu0 %v2372
    %2471 = vmatpush1.bf16.msra.mxu0 %v2371
    %2472 = vmatprep.subr.bf16.mxu0 %v2368
    %2473 = vmatpush1.bf16.msra.mxu0 %v2367
    %2474 = vmatprep.subr.bf16.mxu0 %v2364
    %2475 = vmatpush1.bf16.msra.mxu0 %v2363
    %2476 = vmatprep.subr.bf16.mxu0 %v2360
    %2477 = vmatpush1.bf16.msra.mxu0 %v2359
    %2478 = vmatprep.subr.bf16.mxu0 0
    %2479 = vmatpush2.bf16.msra.mxu0 0
    %2480 = vmatprep.subr.bf16.mxu0 0
    %2481 = vmatpush2.bf16.msra.mxu0 0
    %2482 = vmatprep.subr.bf16.mxu0 0
    %2483 = vmatpush2.bf16.msra.mxu0 0
    %2484 = vmatprep.subr.bf16.mxu0 0
    %2485 = vmatpush2.bf16.msra.mxu0 0
    %2486 = vmatprep.subr.bf16.mxu0 0
    %2487 = vmatpush2.bf16.msra.mxu0 0
    %2488 = vmatprep.subr.bf16.mxu0 0
    %2489 = vmatpush2.bf16.msra.mxu0 0
    %2490 = vmatprep.subr.bf16.mxu0 0
    %2491 = vmatpush2.bf16.msra.mxu0 0
    %2492 = vmatprep.subr.bf16.mxu0 0
    %2493 = vmatpush2.bf16.msra.mxu0 0
    %2494 = vmatprep.mubr.bf16.mxu0 0
    %2495 = vmatmul.mubr.bf16.gmra.mxu0 %v2221
    %v2496 = vpop.f32.mrf.mxu0
    %v2497 = vadd.f32 %v2259, %v2496
    %v2498 = vpop.f32.mrf.mxu0
    %v2499 = vadd.f32 %v2260, %v2498
    %v2500 = vpop.f32.mrf.mxu0
    %v2501 = vpop.f32.mrf.mxu0
    %2502 = vdwg.mxu0
    %v2503 = vmul.f32 %v2456, 0.5
    %v2504 = vtanh.pop %v2503
    %v2505 = vmul.f32 %v2504, 0.5
    %v2506 = vadd.f32 %v2505, 0.5
    %v2507 = vmul.f32 %v2458, 0.5
    %v2508 = vtanh.pop %v2507
    %v2509 = vmul.f32 %v2508, 0.5
    %v2510 = vadd.f32 %v2509, 0.5
    %v2511 = vtanh.pop %v2497
    %v2512 = vmul.f32 %v2499, 0.5
    %v2513 = vtanh.pop %v2512
    %v2514 = vmul.f32 %v2513, 0.5
    %v2515 = vadd.f32 %v2514, 0.5
    %v2516 = vld [vmem:[#allocation3] sm:$0xff]
    %v2517 = vmul.f32 %v2516, %v2506
    %v2518 = vmul.f32 %v2510, %v2511
    %v2519 = vadd.f32 %v2517, %v2518
    %v2520 = vtanh.pop %v2519
    %v2521 = vmul.f32 %v2515, %v2520
    %2522 = vst [vmem:[#allocation3] sm:$0xff] %v2519
    %v2523 = vpack.c.bf16 %v2521, %v2521
    %2524 = vst [vmem:[#allocation2] sm:$0xf] %v2523
    %s2525 = scalar_lea.vmem [#allocation12], 56
    %2526 = vst [vmem:[%s2525] sm:$0xff] %v2521
    // Predicated region
    $region38: #{tpu_custom_call.1} parent=1 // pred_check
      %p2527 = pneg %p73
    $region39: #{tpu_custom_call.1} parent=1 // pred_check_branch
      %2529 = sbr.rel (%p2527) target = $region41
    $region40: #{tpu_custom_call.1} parent=1 // pred_region
      %v2530 = vld [vmem:[#allocation3] sm:$0xff]
      %2531 = vst [vmem:[#allocation13] sm:$0xff] %v2530
    $region41: #{tpu_custom_call.1} parent=1 // pred_fallthru
      _
    // Predicated region
    $region42: #{tpu_custom_call.1} parent=1 // pred_check
      _
    $region43: #{tpu_custom_call.1} parent=1 // pred_check_branch
      %2533 = sbr.rel (0) target = $region45
    $region44: #{tpu_custom_call.1} parent=1 // pred_region
      %s2535 = ssub.s32 1024, 1024
      %2536 = vsyncadd [#allocation6], %s2535
      %s2537 = sshll.u32 [#allocation12], 4
      %s2538 = int_to_ptr.vmem [resolvable:$true] %s2537
      %2543 = dma.vmem_to_hbm [thread:$0]  %s2538, 1024, %s4, [#allocation6], 128, 128, 8
    $region45: #{tpu_custom_call.1} parent=1 // pred_fallthru
      _
    // Predicated region
    $region46: #{tpu_custom_call.1} parent=1 // pred_check
      _
    $region47: #{tpu_custom_call.1} parent=1 // pred_check_branch
      %2545 = sbr.rel (0) target = $region49
    $region48: #{tpu_custom_call.1} parent=1 // pred_region
      %s2547 = ssub.s32 128, 128
      %2548 = vsyncadd [#allocation14], %s2547
      %s2550 = sshll.u32 [#allocation13], 4
      %s2551 = int_to_ptr.vmem [resolvable:$true] %s2550
      %2553 = dma.vmem_to_hbm [thread:$0]  %s2551, 128, %s5, [#allocation14]
    $region49: #{tpu_custom_call.1} parent=1 // pred_fallthru
      _
    // Predicated region
    $region50: #{tpu_custom_call.1} parent=1 // pred_check
      _
    $region51: #{tpu_custom_call.1} parent=1 // pred_check_branch
      %2555 = sbr.rel (0) target = $region53
    $region52: #{tpu_custom_call.1} parent=1 // pred_region
      %2556 = dma.done [#allocation6], 1024
    $region53: #{tpu_custom_call.1} parent=1 // pred_fallthru
      _
    // Predicated region
    $region54: #{tpu_custom_call.1} parent=1 // pred_check
      _
    $region55: #{tpu_custom_call.1} parent=1 // pred_check_branch
      %2558 = sbr.rel (0) target = $region57
    $region56: #{tpu_custom_call.1} parent=1 // pred_region
      %2559 = dma.done [#allocation14], 128
    $region57: #{tpu_custom_call.1} parent=1 // pred_fallthru
      _
    %2560 = vsyncpa [#allocation5], 1
    %2561 = vsyncpa [#allocation8], 1
    %2562 = vsyncpa [#allocation11], 1
    %2563 = vsyncpa [#allocation6], 1
    %2564 = vsyncpa [#allocation14], 1

</llo_original>
